<compile_context>
chip_gen: v7x
topology: tpu7x:2x2x1
jax: 0.10.0
libtpu: 0.0.40
codegen_flags: <defaults>
</compile_context>

<pallas_src>
import jax
import jax.numpy as jnp
import numpy as np
from jax import lax
from jax.experimental import pallas as pl
from jax.experimental.pallas import tpu as pltpu

# Model hyper-parameters (fixed by GCNNet2's defaults) and demo graph sizes.
N_NODES = 64
IN_DIM = 128
HIDDEN_DIMS = [128, 128, 128, 128]
SKIP_WHICH = [1, 2, 3]            # indices into [h_emb, h_gcn1, h_gcn2, h_gcn3, h_gcn4]
SKIP_DIM = 128
N_OUT = 1
N_EDGES = 256
BATCH = 8                         # number of independent graphs in the demo batch

# Only layers whose outputs feed the skips/readout are computed (layer 4 is dead compute).
N_LAYERS_USED = max(SKIP_WHICH)   # = 3

# Batching/tiling: 4 graphs per grid step -> 256 node rows (multiple of 128 for v5e, 256 for
# v6e/v7x) and 1024 edges per step.
GRAPHS_PER_BLOCK = 4
NB = GRAPHS_PER_BLOCK * N_NODES   # 256 node rows per block
GBE = GRAPHS_PER_BLOCK * N_EDGES  # 1024 edges per block


def gcnnet2_kernel(x_ref, src_ref, dst_ref, wg_ref, small_ref, logits_ref, sig_ref):
    """One grid step = GRAPHS_PER_BLOCK graphs (256 node rows).

    x_ref     : (NB, IN_DIM)  f32   stacked node features of this block's graphs
    src_ref   : (1, GBE, 1)   i32   block-local global src node id per edge (edges on sublanes)
    dst_ref   : (1, 1, GBE)   i32   block-local global dst node id per edge (edges on lanes)
    wg_ref    : (L, H, H)     bf16  folded GCN weights, x @ W orientation
    small_ref : (8, H)        f32   rows [c0, bg0..bg2, wsr0..wsr2, pad]
    outputs   : (NB, 1) f32 logits and sigmoid(logits)
    """
    f32, bf16 = jnp.float32, jnp.bfloat16
    n_layers = wg_ref.shape[0]

    # ---- fused adjacency build: block-diagonal A from edge lists (iota one-hots + MXU) ----
    # A[d, s] = #edges s->d; edges never cross graphs, so A is block-diagonal over the 4 graphs.
    # Counts are exact: 0/1 one-hots in bf16, f32 accumulation, result <= 256 fits bf16 exactly.
    src_ids = src_ref[0]                                                      # (GBE, 1)
    dst_ids = dst_ref[0]                                                      # (1, GBE)
    src_oh = (src_ids == lax.broadcasted_iota(jnp.int32, (GBE, NB), 1)).astype(bf16)   # (GBE, NB)
    dst_ohT = (dst_ids == lax.broadcasted_iota(jnp.int32, (NB, GBE), 0)).astype(bf16)  # (NB, GBE)
    # (NB, GBE) @ (GBE, NB): M=N=256, K=1024 -> fully fills the MXU.  Building the block-diagonal
    # directly costs ~4x the MACs of per-graph builds but stays a single large MXU op (<0.2 us on
    # v6e/v7x); TODO(synk): switch to the rectangular (NB, 64) build + iota block mask if the
    # adjacency build ever dominates on v5e at large batch.
    adj = jnp.dot(dst_ohT, src_oh, preferred_element_type=f32).astype(bf16)   # (NB, NB)

    # ---- GCN stack with folded embedding / skip / readout ----
    h = x_ref[...].astype(bf16)                    # f32 -> bf16 cast fused in-kernel
    c0 = small_ref[0:1, :]                         # pre-aggregation embedding-bias row
    acc = None
    for l in range(n_layers):
        # feature transform (embedding folded into l == 0)
        xw = jnp.dot(h, wg_ref[l], preferred_element_type=f32)                # (NB, H) f32
        if l == 0:
            xw = xw + c0
        # 'add' aggregation over incoming edges + bias + relu
        agg = jnp.dot(adj, xw.astype(bf16), preferred_element_type=f32) \
            + small_ref[1 + l:2 + l, :]
        hf = jnp.maximum(agg, 0.0)                                            # f32
        # folded skip_connect -> readout contribution of this layer's output (VPU)
        contrib = hf * small_ref[1 + n_layers + l:2 + n_layers + l, :]
        acc = contrib if acc is None else acc + contrib
        if l + 1 < n_layers:
            h = hf.astype(bf16)

    # TODO(synk): a lane-dense (1, NB) logits slab would avoid masked vst.msk stores but needs a
    # sublane->lane relayout of 256 values; at ~1 KiB per block the (NB, 1) store is cheaper.
    logits = jnp.sum(acc, axis=1, keepdims=True)   # (NB, 1) f32
    logits_ref[...] = logits
    sig_ref[...] = jax.nn.sigmoid(logits)          # sigmoid fused in-kernel (EUP)


def prepare_params(params):
    """One-time conversion of PyTorch-layout params into kernel-ready (folded, packed) arrays."""
    assert N_OUT == 1, "readout fold assumes a single output unit"
    assert 0 not in SKIP_WHICH, "embedding fold assumes the raw embedding feeds no skip"
    assert len(set(HIDDEN_DIMS[:N_LAYERS_USED])) == 1, "VPU skip-fold assumes equal hidden dims"

    we, be = params["we"], params["be"]            # (IN, IN), (IN,)   PyTorch (out, in) layout
    wg, bg = params["wg"], params["bg"]            # lists of (H, H), (H,)
    ws, wr = params["ws"], params["wr"]            # list of (SKIP_DIM, H), (1, 3*SKIP_DIM)

    # Layer weights in x @ W orientation; embedding folded into layer 0.
    wg_k = [(wg[0] @ we).T] + [wg[l].T for l in range(1, N_LAYERS_USED)]
    wg_k = jnp.stack(wg_k).astype(jnp.bfloat16)                    # (L, H, H)

    c0 = (be @ wg[0].T).reshape(1, -1)                             # (1, H) pre-aggregation row
    bg_rows = [bg[l].reshape(1, -1) for l in range(N_LAYERS_USED)]

    # Fold skip linears into the readout: logits += h_l @ (wr_seg @ Ws)^T  == h_l * wsr_row[l].
    wsr_rows = [jnp.zeros((1, HIDDEN_DIMS[l]), jnp.float32) for l in range(N_LAYERS_USED)]
    for s, which in enumerate(SKIP_WHICH):
        seg = wr[:, s * SKIP_DIM:(s + 1) * SKIP_DIM] @ ws[s]       # (1, H)
        wsr_rows[which - 1] = wsr_rows[which - 1] + seg

    # Pack all tiny per-layer rows into one (8, H) f32 operand: [c0, bg0..bg2, wsr0..wsr2, pad].
    small = jnp.concatenate([c0] + bg_rows + wsr_rows, axis=0).astype(jnp.float32)
    pad = 8 - small.shape[0]
    if pad > 0:
        small = jnp.concatenate([small, jnp.zeros((pad, small.shape[1]), jnp.float32)], axis=0)

    return {"wg": wg_k, "small": small}


@jax.jit
def gcnnet2_forward(x_b, edge_index_b, kparams):
    """x_b: (B, N, IN) f32, edge_index_b: (B, 2, E) int32 rows (src, dst), kparams: prepare_params().

    Returns flattened (B*N,) logits and sigmoid(logits), matching the PyG-batched .view(-1)."""
    B = x_b.shape[0]
    assert B % GRAPHS_PER_BLOCK == 0, "pad the batch to a multiple of GRAPHS_PER_BLOCK"
    num_blocks = B // GRAPHS_PER_BLOCK

    xs = x_b.reshape(B * N_NODES, IN_DIM)                          # free, contiguous reshape

    # Block-local global node ids (graph g of its block occupies rows g*64 .. g*64+63).  These are
    # tiny int32 fusions (8 KiB each); the heavy one-hot/adjacency work happens inside the kernel.
    # TODO(synk): for a static graph, hoist src3/dst3 construction out of the jitted forward.
    offs = (jnp.arange(B, dtype=jnp.int32) % GRAPHS_PER_BLOCK) * N_NODES
    src3 = (edge_index_b[:, 0, :] + offs[:, None]).reshape(num_blocks, GBE, 1)
    dst3 = (edge_index_b[:, 1, :] + offs[:, None]).reshape(num_blocks, 1, GBE)

    logits2d, sig2d = pl.pallas_call(
        gcnnet2_kernel,
        grid=(num_blocks,),
        in_specs=[
            pl.BlockSpec((NB, IN_DIM), lambda b: (b, 0)),                       # x rows
            pl.BlockSpec((1, GBE, 1), lambda b: (b, 0, 0)),                     # src ids (sublanes)
            pl.BlockSpec((1, 1, GBE), lambda b: (b, 0, 0)),                     # dst ids (lanes)
            pl.BlockSpec((N_LAYERS_USED, IN_DIM, IN_DIM), lambda b: (0, 0, 0)),  # weights (resident)
            pl.BlockSpec((8, IN_DIM), lambda b: (0, 0)),                        # packed small params
        ],
        out_specs=[
            pl.BlockSpec((NB, 1), lambda b: (b, 0)),
            pl.BlockSpec((NB, 1), lambda b: (b, 0)),
        ],
        out_shape=(jax.ShapeDtypeStruct((B * N_NODES, 1), jnp.float32),
                   jax.ShapeDtypeStruct((B * N_NODES, 1), jnp.float32)),
        compiler_params=pltpu.CompilerParams(dimension_semantics=("parallel",)),
    )(xs, src3, dst3, kparams["wg"], kparams["small"])

    return logits2d.reshape(-1), sig2d.reshape(-1)                 # .view(-1)


def gcnnet2_reference(x_b, edge_index_b, params):
    """Pure-JAX f32 reference following the original (un-folded, un-batched) module structure."""
    outs = []
    for g in range(x_b.shape[0]):
        x = x_b[g]
        src, dst = edge_index_b[g, 0], edge_index_b[g, 1]
        adj = jnp.zeros((N_NODES, N_NODES), jnp.float32).at[dst, src].add(1.0)
        h = x @ params["we"].T + params["be"]
        feats = [h]
        for wgl, bgl in zip(params["wg"], params["bg"]):
            h = jnp.maximum(adj @ (h @ wgl.T) + bgl, 0.0)
            feats.append(h)
        cat = jnp.concatenate([feats[idx] @ params["ws"][s].T
                               for s, idx in enumerate(SKIP_WHICH)], axis=1)
        outs.append((cat @ params["wr"].T).reshape(-1))
    logits = jnp.concatenate(outs)
    return logits, jax.nn.sigmoid(logits)


def init_params(key):
    keys = jax.random.split(key, 16)
    k = iter(keys)
    params = {}
    scale = 1.0 / np.sqrt(IN_DIM)
    params["we"] = jax.random.normal(next(k), (IN_DIM, IN_DIM), jnp.float32) * scale
    params["be"] = jax.random.normal(next(k), (IN_DIM,), jnp.float32) * scale
    params["wg"], params["bg"] = [], []
    _in = IN_DIM
    for hdim in HIDDEN_DIMS:
        s = 1.0 / np.sqrt(_in)
        params["wg"].append(jax.random.normal(next(k), (hdim, _in), jnp.float32) * s)
        params["bg"].append(jax.random.normal(next(k), (hdim,), jnp.float32) * s)
        _in = hdim
    params["ws"] = []
    for which in SKIP_WHICH:
        d = HIDDEN_DIMS[which - 1]
        params["ws"].append(
            jax.random.normal(next(k), (SKIP_DIM, d), jnp.float32) / np.sqrt(d))
    total = len(SKIP_WHICH) * SKIP_DIM
    params["wr"] = jax.random.normal(next(k), (N_OUT, total), jnp.float32) / np.sqrt(total)
    return params


if __name__ == "__main__":
    key = jax.random.PRNGKey(0)
    kx, ke1, ke2, kp = jax.random.split(key, 4)

    x_b = jax.random.normal(kx, (BATCH, N_NODES, IN_DIM), jnp.float32)
    src = jax.random.randint(ke1, (BATCH, N_EDGES), 0, N_NODES, jnp.int32)
    dst = jax.random.randint(ke2, (BATCH, N_EDGES), 0, N_NODES, jnp.int32)
    edge_index_b = jnp.stack([src, dst], axis=1)           # (B, 2, E)

    params = init_params(kp)
    kparams = prepare_params(params)                       # one-time fold/pack (hoisted)

    logits, sig = gcnnet2_forward(x_b, edge_index_b, kparams)
    jax.block_until_ready((logits, sig))

    ref_logits, ref_sig = gcnnet2_reference(x_b, edge_index_b, params)
    # bf16 matmul operands (f32 accumulation) vs. the all-f32 reference drift ~1% per chained
    # matmul over the 3-layer chain; 5e-2 leaves margin.  The in-kernel adjacency counts are exact.
    np.testing.assert_allclose(np.asarray(logits), np.asarray(ref_logits),
                               rtol=5e-2, atol=5e-2)
    np.testing.assert_allclose(np.asarray(sig), np.asarray(ref_sig),
                               rtol=5e-2, atol=5e-2)

    print("KERNEL_OK")
</pallas_src>

<mosaic_0001>
module attributes {stable_mosaic.version = 11 : i64} {
  func.func @gcnnet2_kernel(%arg0: i32, %arg1: memref<256x128xf32, #tpu.memory_space<vmem>>, %arg2: memref<1x1024x1xi32, #tpu.memory_space<vmem>>, %arg3: memref<1x1x1024xi32, #tpu.memory_space<vmem>>, %arg4: memref<3x128x128xbf16, #tpu.memory_space<vmem>>, %arg5: memref<8x128xf32, #tpu.memory_space<vmem>>, %arg6: memref<256x1xf32, #tpu.memory_space<vmem>>, %arg7: memref<256x1xf32, #tpu.memory_space<vmem>>) attributes {dimension_semantics = [#tpu.dimension_semantics<parallel>], iteration_bounds = array<i64: 2>, scalar_prefetch = 0 : i64, scratch_operands = 0 : i64, tpu.core_type = #tpu.core_type<tc>, window_params = [{transform_indices = @transform_0, window_bounds = array<i64: 256, 128>}, {transform_indices = @transform_1, window_bounds = array<i64: 1, 1024, 1>}, {transform_indices = @transform_2, window_bounds = array<i64: 1, 1, 1024>}, {pipeline_mode = #tpu.pipeline_mode<synchronous>, transform_indices = @transform_3, window_bounds = array<i64: 3, 128, 128>}, {pipeline_mode = #tpu.pipeline_mode<synchronous>, transform_indices = @transform_4, window_bounds = array<i64: 8, 128>}, {transform_indices = @transform_5, window_bounds = array<i64: 256, 1>}, {transform_indices = @transform_6, window_bounds = array<i64: 256, 1>}]} {
    %c0 = arith.constant 0 : index
    %c0_0 = arith.constant 0 : index
    %c0_1 = arith.constant 0 : index
    %0 = vector.load %arg2[%c0, %c0_0, %c0_1] : memref<1x1024x1xi32, #tpu.memory_space<vmem>>, vector<1x1024x1xi32>
    %1 = vector.shape_cast %0 : vector<1x1024x1xi32> to vector<1024x1xi32>
    %c0_2 = arith.constant 0 : index
    %c0_3 = arith.constant 0 : index
    %c0_4 = arith.constant 0 : index
    %2 = vector.load %arg3[%c0_2, %c0_3, %c0_4] : memref<1x1x1024xi32, #tpu.memory_space<vmem>>, vector<1x1x1024xi32>
    %3 = vector.shape_cast %2 : vector<1x1x1024xi32> to vector<1x1024xi32>
    %4 = tpu.iota {dimensions = array<i32: 1>} : vector<1024x256xi32>
    %5 = vector.broadcast %1 : vector<1024x1xi32> to vector<1024x256xi32>
    %6 = arith.cmpi eq, %5, %4 : vector<1024x256xi32>
    %7 = arith.extui %6 : vector<1024x256xi1> to vector<1024x256xi32>
    %8 = arith.sitofp %7 : vector<1024x256xi32> to vector<1024x256xf32>
    %9 = arith.truncf %8 : vector<1024x256xf32> to vector<1024x256xbf16>
    %10 = tpu.iota {dimensions = array<i32: 0>} : vector<256x1024xi32>
    %11 = vector.broadcast %3 : vector<1x1024xi32> to vector<256x1024xi32>
    %12 = arith.cmpi eq, %11, %10 : vector<256x1024xi32>
    %13 = arith.extui %12 : vector<256x1024xi1> to vector<256x1024xi32>
    %14 = arith.sitofp %13 : vector<256x1024xi32> to vector<256x1024xf32>
    %15 = arith.truncf %14 : vector<256x1024xf32> to vector<256x1024xbf16>
    %cst = arith.constant dense<0.000000e+00> : vector<256x256xf32>
    %16 = tpu.matmul %15, %9, %cst {dimension_numbers = #tpu.dot_dimension_numbers<[1], [0], [0], [1], [0, 0, 1, 1], [], []>} : vector<256x1024xbf16>, vector<1024x256xbf16>, vector<256x256xf32> -> vector<256x256xf32>
    %17 = arith.truncf %16 : vector<256x256xf32> to vector<256x256xbf16>
    %c0_5 = arith.constant 0 : index
    %c0_6 = arith.constant 0 : index
    %18 = vector.load %arg1[%c0_5, %c0_6] : memref<256x128xf32, #tpu.memory_space<vmem>>, vector<256x128xf32>
    %19 = arith.truncf %18 : vector<256x128xf32> to vector<256x128xbf16>
    %c0_7 = arith.constant 0 : index
    %c0_8 = arith.constant 0 : index
    %20 = vector.load %arg5[%c0_7, %c0_8] : memref<8x128xf32, #tpu.memory_space<vmem>>, vector<1x128xf32>
    %c0_9 = arith.constant 0 : index
    %c0_10 = arith.constant 0 : index
    %c0_11 = arith.constant 0 : index
    %21 = vector.load %arg4[%c0_9, %c0_10, %c0_11] : memref<3x128x128xbf16, #tpu.memory_space<vmem>>, vector<1x128x128xbf16>
    %22 = vector.shape_cast %21 : vector<1x128x128xbf16> to vector<128x128xbf16>
    %cst_12 = arith.constant dense<0.000000e+00> : vector<256x128xf32>
    %23 = tpu.matmul %19, %22, %cst_12 {dimension_numbers = #tpu.dot_dimension_numbers<[1], [0], [0], [1], [0, 0, 1, 1], [], []>} : vector<256x128xbf16>, vector<128x128xbf16>, vector<256x128xf32> -> vector<256x128xf32>
    %24 = vector.broadcast %20 : vector<1x128xf32> to vector<256x128xf32>
    %25 = arith.addf %23, %24 : vector<256x128xf32>
    %26 = arith.truncf %25 : vector<256x128xf32> to vector<256x128xbf16>
    %cst_13 = arith.constant dense<0.000000e+00> : vector<256x128xf32>
    %27 = tpu.matmul %17, %26, %cst_13 {dimension_numbers = #tpu.dot_dimension_numbers<[1], [0], [0], [1], [0, 0, 1, 1], [], []>} : vector<256x256xbf16>, vector<256x128xbf16>, vector<256x128xf32> -> vector<256x128xf32>
    %c1 = arith.constant 1 : index
    %c0_14 = arith.constant 0 : index
    %28 = vector.load %arg5[%c1, %c0_14] : memref<8x128xf32, #tpu.memory_space<vmem>>, vector<1x128xf32>
    %29 = vector.broadcast %28 : vector<1x128xf32> to vector<256x128xf32>
    %30 = arith.addf %27, %29 : vector<256x128xf32>
    %cst_15 = arith.constant 0.000000e+00 : f32
    %31 = vector.broadcast %cst_15 : f32 to vector<256x128xf32>
    %32 = arith.maximumf %30, %31 : vector<256x128xf32>
    %c4 = arith.constant 4 : index
    %c0_16 = arith.constant 0 : index
    %33 = vector.load %arg5[%c4, %c0_16] : memref<8x128xf32, #tpu.memory_space<vmem>>, vector<1x128xf32>
    %34 = vector.broadcast %33 : vector<1x128xf32> to vector<256x128xf32>
    %35 = arith.mulf %32, %34 : vector<256x128xf32>
    %36 = arith.truncf %32 : vector<256x128xf32> to vector<256x128xbf16>
    %c1_17 = arith.constant 1 : index
    %c0_18 = arith.constant 0 : index
    %c0_19 = arith.constant 0 : index
    %37 = vector.load %arg4[%c1_17, %c0_18, %c0_19] : memref<3x128x128xbf16, #tpu.memory_space<vmem>>, vector<1x128x128xbf16>
    %38 = vector.shape_cast %37 : vector<1x128x128xbf16> to vector<128x128xbf16>
    %cst_20 = arith.constant dense<0.000000e+00> : vector<256x128xf32>
    %39 = tpu.matmul %36, %38, %cst_20 {dimension_numbers = #tpu.dot_dimension_numbers<[1], [0], [0], [1], [0, 0, 1, 1], [], []>} : vector<256x128xbf16>, vector<128x128xbf16>, vector<256x128xf32> -> vector<256x128xf32>
    %40 = arith.truncf %39 : vector<256x128xf32> to vector<256x128xbf16>
    %cst_21 = arith.constant dense<0.000000e+00> : vector<256x128xf32>
    %41 = tpu.matmul %17, %40, %cst_21 {dimension_numbers = #tpu.dot_dimension_numbers<[1], [0], [0], [1], [0, 0, 1, 1], [], []>} : vector<256x256xbf16>, vector<256x128xbf16>, vector<256x128xf32> -> vector<256x128xf32>
    %c2 = arith.constant 2 : index
    %c0_22 = arith.constant 0 : index
    %42 = vector.load %arg5[%c2, %c0_22] : memref<8x128xf32, #tpu.memory_space<vmem>>, vector<1x128xf32>
    %43 = vector.broadcast %42 : vector<1x128xf32> to vector<256x128xf32>
    %44 = arith.addf %41, %43 : vector<256x128xf32>
    %cst_23 = arith.constant 0.000000e+00 : f32
    %45 = vector.broadcast %cst_23 : f32 to vector<256x128xf32>
    %46 = arith.maximumf %44, %45 : vector<256x128xf32>
    %c5 = arith.constant 5 : index
    %c0_24 = arith.constant 0 : index
    %47 = vector.load %arg5[%c5, %c0_24] : memref<8x128xf32, #tpu.memory_space<vmem>>, vector<1x128xf32>
    %48 = vector.broadcast %47 : vector<1x128xf32> to vector<256x128xf32>
    %49 = arith.mulf %46, %48 : vector<256x128xf32>
    %50 = arith.addf %35, %49 : vector<256x128xf32>
    %51 = arith.truncf %46 : vector<256x128xf32> to vector<256x128xbf16>
    %c2_25 = arith.constant 2 : index
    %c0_26 = arith.constant 0 : index
    %c0_27 = arith.constant 0 : index
    %52 = vector.load %arg4[%c2_25, %c0_26, %c0_27] : memref<3x128x128xbf16, #tpu.memory_space<vmem>>, vector<1x128x128xbf16>
    %53 = vector.shape_cast %52 : vector<1x128x128xbf16> to vector<128x128xbf16>
    %cst_28 = arith.constant dense<0.000000e+00> : vector<256x128xf32>
    %54 = tpu.matmul %51, %53, %cst_28 {dimension_numbers = #tpu.dot_dimension_numbers<[1], [0], [0], [1], [0, 0, 1, 1], [], []>} : vector<256x128xbf16>, vector<128x128xbf16>, vector<256x128xf32> -> vector<256x128xf32>
    %55 = arith.truncf %54 : vector<256x128xf32> to vector<256x128xbf16>
    %cst_29 = arith.constant dense<0.000000e+00> : vector<256x128xf32>
    %56 = tpu.matmul %17, %55, %cst_29 {dimension_numbers = #tpu.dot_dimension_numbers<[1], [0], [0], [1], [0, 0, 1, 1], [], []>} : vector<256x256xbf16>, vector<256x128xbf16>, vector<256x128xf32> -> vector<256x128xf32>
    %c3 = arith.constant 3 : index
    %c0_30 = arith.constant 0 : index
    %57 = vector.load %arg5[%c3, %c0_30] : memref<8x128xf32, #tpu.memory_space<vmem>>, vector<1x128xf32>
    %58 = vector.broadcast %57 : vector<1x128xf32> to vector<256x128xf32>
    %59 = arith.addf %56, %58 : vector<256x128xf32>
    %cst_31 = arith.constant 0.000000e+00 : f32
    %60 = vector.broadcast %cst_31 : f32 to vector<256x128xf32>
    %61 = arith.maximumf %59, %60 : vector<256x128xf32>
    %c6 = arith.constant 6 : index
    %c0_32 = arith.constant 0 : index
    %62 = vector.load %arg5[%c6, %c0_32] : memref<8x128xf32, #tpu.memory_space<vmem>>, vector<1x128xf32>
    %63 = vector.broadcast %62 : vector<1x128xf32> to vector<256x128xf32>
    %64 = arith.mulf %61, %63 : vector<256x128xf32>
    %65 = arith.addf %50, %64 : vector<256x128xf32>
    %cst_33 = arith.constant dense<0.000000e+00> : vector<256xf32>
    %66 = vector.multi_reduction <add>, %65, %cst_33 [1] : vector<256x128xf32> to vector<256xf32>
    %67 = vector.shape_cast %66 : vector<256xf32> to vector<256x1xf32>
    %c0_34 = arith.constant 0 : index
    %c0_35 = arith.constant 0 : index
    %68 = vector.load %arg6[%c0_34, %c0_35] : memref<256x1xf32, #tpu.memory_space<vmem>>, vector<256x1xf32>
    tpu.vector_store %arg6[%c0_34, %c0_35], %67 {strides = array<i32>} : memref<256x1xf32, #tpu.memory_space<vmem>>, vector<256x1xf32>,
    %69 = arith.negf %67 : vector<256x1xf32>
    %70 = math.exp %69 : vector<256x1xf32>
    %cst_36 = arith.constant 1.000000e+00 : f32
    %71 = vector.broadcast %cst_36 : f32 to vector<256x1xf32>
    %72 = arith.addf %71, %70 : vector<256x1xf32>
    %73 = arith.divf %71, %72 : vector<256x1xf32>
    %c0_37 = arith.constant 0 : index
    %c0_38 = arith.constant 0 : index
    %74 = vector.load %arg7[%c0_37, %c0_38] : memref<256x1xf32, #tpu.memory_space<vmem>>, vector<256x1xf32>
    tpu.vector_store %arg7[%c0_37, %c0_38], %73 {strides = array<i32>} : memref<256x1xf32, #tpu.memory_space<vmem>>, vector<256x1xf32>,
    return
  }
  func.func @transform_0(%arg0: i32) -> (i32, i32) {
    %c0_i32 = arith.constant 0 : i32
    %c0_i32_0 = arith.constant 0 : i32
    return %arg0, %c0_i32 : i32, i32
  }
  func.func @transform_1(%arg0: i32) -> (i32, i32, i32) {
    %c0_i32 = arith.constant 0 : i32
    %c0_i32_0 = arith.constant 0 : i32
    %c0_i32_1 = arith.constant 0 : i32
    return %arg0, %c0_i32, %c0_i32_0 : i32, i32, i32
  }
  func.func @transform_2(%arg0: i32) -> (i32, i32, i32) {
    %c0_i32 = arith.constant 0 : i32
    %c0_i32_0 = arith.constant 0 : i32
    %c0_i32_1 = arith.constant 0 : i32
    return %arg0, %c0_i32, %c0_i32_0 : i32, i32, i32
  }
  func.func @transform_3(%arg0: i32) -> (i32, i32, i32) {
    %c0_i32 = arith.constant 0 : i32
    %c0_i32_0 = arith.constant 0 : i32
    %c0_i32_1 = arith.constant 0 : i32
    %c0_i32_2 = arith.constant 0 : i32
    return %c0_i32, %c0_i32_0, %c0_i32_1 : i32, i32, i32
  }
  func.func @transform_4(%arg0: i32) -> (i32, i32) {
    %c0_i32 = arith.constant 0 : i32
    %c0_i32_0 = arith.constant 0 : i32
    %c0_i32_1 = arith.constant 0 : i32
    return %c0_i32, %c0_i32_0 : i32, i32
  }
  func.func @transform_5(%arg0: i32) -> (i32, i32) {
    %c0_i32 = arith.constant 0 : i32
    %c0_i32_0 = arith.constant 0 : i32
    return %arg0, %c0_i32 : i32, i32
  }
  func.func @transform_6(%arg0: i32) -> (i32, i32) {
    %c0_i32 = arith.constant 0 : i32
    %c0_i32_0 = arith.constant 0 : i32
    return %arg0, %c0_i32 : i32, i32
  }
}

</mosaic_0001>

<llo_original>
// kernel: gcnnet2_forward.1
$region0: #{gcnnet2_forward.1}
  #allocation0 [shape = 'u32[]', space=smem, size = 0x4, offset = 0x4, fixed_abs, tag = 'smem constant byte address 0x4 - core index']
  #allocation1 [shape = 'u32[144,128]{1,0:T(1,128)}', space=vmem, size = 0x12000, scoped, tag = 'internal scratch']
  %s0 = inlined_call_operand.vmem [shape: f32[512,128], index: 0, kind: input, shape index: {}]
  %s1 = inlined_call_operand.vmem [shape: s32[2,1024,1], index: 1, kind: input, shape index: {}]
  %s2 = inlined_call_operand.vmem [shape: s32[2,1,1024], index: 2, kind: input, shape index: {}]
  %s3 = inlined_call_operand.vmem [shape: bf16[3,128,128], index: 3, kind: input, shape index: {}]
  %s4 = inlined_call_operand.vmem [shape: f32[8,128], index: 4, kind: input, shape index: {}]
  %s5 = inlined_call_operand.vmem [shape: f32[512,1], index: 5, kind: output, shape index: {0}]
  %s6 = inlined_call_operand.vmem [shape: f32[512,1], index: 6, kind: output, shape index: {1}]
  %7 = xla_tuple %s5, %s6
  %s8 = sld [smem:[#allocation0]]
  $region61: #{gcnnet2_forward.1} parent=0
    _
  %s10 = ssub.s32 1, %s8
  %s11 = scalar_select 0, %s10, %s8
  loop: start=0, step=1, limit=4
  $region2: #{gcnnet2_forward.1} parent=0 // loop_pre_header
    _
  $region3: #{gcnnet2_forward.1} parent=0 // loop_header
    %s13 = sphi 0, %s17
    %p14 = scmp.ge.s32.totalorder %s13, 4
    %s23 = sphi 0, %s25
    %s26 = sphi 0, %s23
    %s27 = sphi 0, %s26
    %s43 = sphi 0, %s27
    %s49 = sphi 0, %s51
    %s52 = sphi 0, %s49
    %s53 = sphi 0, %s52
    %s69 = sphi 0, %s53
    %s75 = sphi 0, %s77
    %s78 = sphi 0, %s75
    %s79 = sphi 0, %s78
    %s95 = sphi 0, %s79
    %s99 = sphi 0, %s99
    %s101 = sphi 0, %s99
    %s102 = sphi 0, %s101
    %s116 = sphi 0, %s102
    %s120 = sphi 0, %s120
    %s122 = sphi 0, %s120
    %s123 = sphi 0, %s122
    %s137 = sphi 0, %s123
    %s143 = sphi 0, %s145
    %s146 = sphi 0, %s143
    %s147 = sphi 0, %s146
    %s163 = sphi 0, %s147
    %s169 = sphi 0, %s171
    %s172 = sphi 0, %s169
    %s173 = sphi 0, %s172
    %s189 = sphi 0, %s173
  $region4: #{gcnnet2_forward.1} parent=0 // loop_header_branch
    %16 = sbr.rel (%p14) target = $region8
  $region5: #{gcnnet2_forward.1} parent=0 // loop_body
    %s18 = ssub.s32 %s13, 1
    %s19 = ssub.s32 %s13, 2
    %s20 = sadd.s32 %s13, 1
    %s21 = ssub.s32 %s13, %s20
    %p22 = scmp.eq.s32.totalorder %s21, 0
    %s24 = sadd.s32 %s23, 1
    %s25 = scalar_select %p22, %s23, %s24
    %p28 = pneg %p22
    %p29 = scmp.eq.s32.totalorder %s13, 1
    %p30 = por %p28, %p29
    %p31 = scmp.ne.s32.totalorder %s23, %s26
    %p32 = scmp.eq.s32.totalorder %s13, 0
    %p33 = por %p31, %p32
    %p34 = scmp.ne.s32.totalorder %s23, %s26
    %p35 = scmp.eq.s32.totalorder %s18, 1
    %p36 = por %p34, %p35
    %p37 = scmp.ne.s32.totalorder %s26, %s27
    %p38 = scmp.eq.s32.totalorder %s18, 0
    %p39 = por %p37, %p38
    %p40 = scmp.ne.s32.totalorder %s26, %s27
    %p41 = scmp.eq.s32.totalorder %s19, 1
    %p42 = por %p40, %p41
    %p44 = scmp.ne.s32.totalorder %s27, %s43
    %p45 = scmp.eq.s32.totalorder %s19, 0
    %p46 = por %p44, %p45
    %s47 = ssub.s32 %s13, %s20
    %p48 = scmp.eq.s32.totalorder %s47, 0
    %s50 = sadd.s32 %s49, 1
    %s51 = scalar_select %p48, %s49, %s50
    %p54 = pneg %p48
    %p55 = scmp.eq.s32.totalorder %s13, 1
    %p56 = por %p54, %p55
    %p57 = scmp.ne.s32.totalorder %s49, %s52
    %p58 = scmp.eq.s32.totalorder %s13, 0
    %p59 = por %p57, %p58
    %p60 = scmp.ne.s32.totalorder %s49, %s52
    %p61 = scmp.eq.s32.totalorder %s18, 1
    %p62 = por %p60, %p61
    %p63 = scmp.ne.s32.totalorder %s52, %s53
    %p64 = scmp.eq.s32.totalorder %s18, 0
    %p65 = por %p63, %p64
    %p66 = scmp.ne.s32.totalorder %s52, %s53
    %p67 = scmp.eq.s32.totalorder %s19, 1
    %p68 = por %p66, %p67
    %p70 = scmp.ne.s32.totalorder %s53, %s69
    %p71 = scmp.eq.s32.totalorder %s19, 0
    %p72 = por %p70, %p71
    %s73 = ssub.s32 %s13, %s20
    %p74 = scmp.eq.s32.totalorder %s73, 0
    %s76 = sadd.s32 %s75, 1
    %s77 = scalar_select %p74, %s75, %s76
    %p80 = pneg %p74
    %p81 = scmp.eq.s32.totalorder %s13, 1
    %p82 = por %p80, %p81
    %p83 = scmp.ne.s32.totalorder %s75, %s78
    %p84 = scmp.eq.s32.totalorder %s13, 0
    %p85 = por %p83, %p84
    %p86 = scmp.ne.s32.totalorder %s75, %s78
    %p87 = scmp.eq.s32.totalorder %s18, 1
    %p88 = por %p86, %p87
    %p89 = scmp.ne.s32.totalorder %s78, %s79
    %p90 = scmp.eq.s32.totalorder %s18, 0
    %p91 = por %p89, %p90
    %p92 = scmp.ne.s32.totalorder %s78, %s79
    %p93 = scmp.eq.s32.totalorder %s19, 1
    %p94 = por %p92, %p93
    %p96 = scmp.ne.s32.totalorder %s79, %s95
    %p97 = scmp.eq.s32.totalorder %s19, 0
    %p98 = por %p96, %p97
    %s100 = sadd.s32 %s99, 1
    %p103 = scmp.eq.s32.totalorder %s13, 1
    %p104 = scmp.ne.s32.totalorder %s99, %s101
    %p105 = scmp.eq.s32.totalorder %s13, 0
    %p106 = por %p104, %p105
    %p107 = scmp.ne.s32.totalorder %s99, %s101
    %p108 = scmp.eq.s32.totalorder %s18, 1
    %p109 = por %p107, %p108
    %p110 = scmp.ne.s32.totalorder %s101, %s102
    %p111 = scmp.eq.s32.totalorder %s18, 0
    %p112 = por %p110, %p111
    %p113 = scmp.ne.s32.totalorder %s101, %s102
    %p114 = scmp.eq.s32.totalorder %s19, 1
    %p115 = por %p113, %p114
    %p117 = scmp.ne.s32.totalorder %s102, %s116
    %p118 = scmp.eq.s32.totalorder %s19, 0
    %p119 = por %p117, %p118
    %s121 = sadd.s32 %s120, 1
    %p124 = scmp.eq.s32.totalorder %s13, 1
    %p125 = scmp.ne.s32.totalorder %s120, %s122
    %p126 = scmp.eq.s32.totalorder %s13, 0
    %p127 = por %p125, %p126
    %p128 = scmp.ne.s32.totalorder %s120, %s122
    %p129 = scmp.eq.s32.totalorder %s18, 1
    %p130 = por %p128, %p129
    %p131 = scmp.ne.s32.totalorder %s122, %s123
    %p132 = scmp.eq.s32.totalorder %s18, 0
    %p133 = por %p131, %p132
    %p134 = scmp.ne.s32.totalorder %s122, %s123
    %p135 = scmp.eq.s32.totalorder %s19, 1
    %p136 = por %p134, %p135
    %p138 = scmp.ne.s32.totalorder %s123, %s137
    %p139 = scmp.eq.s32.totalorder %s19, 0
    %p140 = por %p138, %p139
    %s141 = ssub.s32 %s13, %s20
    %p142 = scmp.eq.s32.totalorder %s141, 0
    %s144 = sadd.s32 %s143, 1
    %s145 = scalar_select %p142, %s143, %s144
    %p148 = pneg %p142
    %p149 = scmp.eq.s32.totalorder %s13, 1
    %p150 = por %p148, %p149
    %p151 = scmp.ne.s32.totalorder %s143, %s146
    %p152 = scmp.eq.s32.totalorder %s13, 0
    %p153 = por %p151, %p152
    %p154 = scmp.ne.s32.totalorder %s143, %s146
    %p155 = scmp.eq.s32.totalorder %s18, 1
    %p156 = por %p154, %p155
    %p157 = scmp.ne.s32.totalorder %s146, %s147
    %p158 = scmp.eq.s32.totalorder %s18, 0
    %p159 = por %p157, %p158
    %p160 = scmp.ne.s32.totalorder %s146, %s147
    %p161 = scmp.eq.s32.totalorder %s19, 1
    %p162 = por %p160, %p161
    %p164 = scmp.ne.s32.totalorder %s147, %s163
    %p165 = scmp.eq.s32.totalorder %s19, 0
    %p166 = por %p164, %p165
    %s167 = ssub.s32 %s13, %s20
    %p168 = scmp.eq.s32.totalorder %s167, 0
    %s170 = sadd.s32 %s169, 1
    %s171 = scalar_select %p168, %s169, %s170
    %p174 = pneg %p168
    %p175 = scmp.eq.s32.totalorder %s13, 1
    %p176 = por %p174, %p175
    %p177 = scmp.ne.s32.totalorder %s169, %s172
    %p178 = scmp.eq.s32.totalorder %s13, 0
    %p179 = por %p177, %p178
    %p180 = scmp.ne.s32.totalorder %s169, %s172
    %p181 = scmp.eq.s32.totalorder %s18, 1
    %p182 = por %p180, %p181
    %p183 = scmp.ne.s32.totalorder %s172, %s173
    %p184 = scmp.eq.s32.totalorder %s18, 0
    %p185 = por %p183, %p184
    %p186 = scmp.ne.s32.totalorder %s172, %s173
    %p187 = scmp.eq.s32.totalorder %s19, 1
    %p188 = por %p186, %p187
    %p190 = scmp.ne.s32.totalorder %s173, %s189
    %p191 = scmp.eq.s32.totalorder %s19, 0
    %p192 = por %p190, %p191
    %p193 = scmp.le.s32.totalorder 1, %s13
    %p194 = scmp.lt.s32.totalorder %s13, 3
    %p195 = pnand %p193, %p194
    %p196 = pneg %p195
    // Predicated region
    $region9: #{gcnnet2_forward.1} parent=5 // pred_check
      _
    $region10: #{gcnnet2_forward.1} parent=5 // pred_check_branch
      %198 = sbr.rel (%p195) target = $region12
    $region11: #{gcnnet2_forward.1} parent=5 // pred_region
      %s199 = ssub.s32 %s13, 1
      // Predicated region
      $region13: #{gcnnet2_forward.1} parent=11 // pred_check
        %p200 = pneg %p112
      $region14: #{gcnnet2_forward.1} parent=11 // pred_check_branch
        %202 = sbr.rel (%p200) target = $region16
      $region15: #{gcnnet2_forward.1} parent=11 // pred_region
        _
      $region16: #{gcnnet2_forward.1} parent=11 // pred_fallthru
        _
      // Predicated region
      $region17: #{gcnnet2_forward.1} parent=11 // pred_check
        %p203 = pneg %p133
      $region18: #{gcnnet2_forward.1} parent=11 // pred_check_branch
        %205 = sbr.rel (%p203) target = $region20
      $region19: #{gcnnet2_forward.1} parent=11 // pred_region
        _
      $region20: #{gcnnet2_forward.1} parent=11 // pred_fallthru
        _
    $region12: #{gcnnet2_forward.1} parent=5 // pred_fallthru
      _
    %p206 = scmp.lt.s32.totalorder %s13, 2
    // Predicated region
    $region21: #{gcnnet2_forward.1} parent=5 // pred_check
      %p207 = pneg %p206
    $region22: #{gcnnet2_forward.1} parent=5 // pred_check_branch
      %209 = sbr.rel (%p207) target = $region24
    $region23: #{gcnnet2_forward.1} parent=5 // pred_region
      // Predicated region
      $region25: #{gcnnet2_forward.1} parent=23 // pred_check
        %p210 = pneg %p33
      $region26: #{gcnnet2_forward.1} parent=23 // pred_check_branch
        %212 = sbr.rel (%p210) target = $region28
      $region27: #{gcnnet2_forward.1} parent=23 // pred_region
        %s213 = smul.u32 32, %s13
        %p214 = scmp.lt.s32.totalorder %s213, 63
        %s215 = scalar_select %p214, %s213, 63
        %s216 = smul.addr %s215, 8
        %s217 = scalar_lea.vmem %s0, %s216
        %s218 = smul.u32 32, %s13
      $region28: #{gcnnet2_forward.1} parent=23 // pred_fallthru
        _
      // Predicated region
      $region29: #{gcnnet2_forward.1} parent=23 // pred_check
        %p219 = pneg %p59
      $region30: #{gcnnet2_forward.1} parent=23 // pred_check_branch
        %221 = sbr.rel (%p219) target = $region32
      $region31: #{gcnnet2_forward.1} parent=23 // pred_region
        %p222 = scmp.lt.s32.totalorder %s13, 1
        %s223 = scalar_select %p222, %s13, 1
        %s224 = smul.addr %s223, 128
        %s225 = smul.addr %s224, 8
        %s226 = scalar_lea.vmem %s1, %s225
      $region32: #{gcnnet2_forward.1} parent=23 // pred_fallthru
        _
      // Predicated region
      $region33: #{gcnnet2_forward.1} parent=23 // pred_check
        %p227 = pneg %p85
      $region34: #{gcnnet2_forward.1} parent=23 // pred_check_branch
        %229 = sbr.rel (%p227) target = $region36
      $region35: #{gcnnet2_forward.1} parent=23 // pred_region
        %p230 = scmp.lt.s32.totalorder %s13, 1
        %s231 = scalar_select %p230, %s13, 1
        %s232 = smul.addr %s231, 8
        %s233 = scalar_lea.vmem %s2, %s232
      $region36: #{gcnnet2_forward.1} parent=23 // pred_fallthru
        _
    $region24: #{gcnnet2_forward.1} parent=5 // pred_fallthru
      _
    %p234 = scmp.le.s32.totalorder 1, %s13
    %p235 = scmp.lt.s32.totalorder %s13, 3
    %p236 = pnand %p234, %p235
    %p237 = pneg %p236
    // Predicated region
    $region37: #{gcnnet2_forward.1} parent=5 // pred_check
      _
    $region38: #{gcnnet2_forward.1} parent=5 // pred_check_branch
      %239 = sbr.rel (%p236) target = $region40
    $region39: #{gcnnet2_forward.1} parent=5 // pred_region
      %s240 = ssub.s32 %s13, 1
      %s241 = smul.u32 32, %s18
      %p242 = scmp.lt.s32.totalorder %s241, 63
      %s243 = scalar_select %p242, %s241, 63
      %s244 = smul.addr %s243, 8
      %s245 = scalar_lea.vmem %s0, %s244
      %p246 = pneg %p39
      %p247 = pneg %p36
      %p248 = scmp.lt.s32.totalorder %s18, 1
      %s249 = scalar_select %p248, %s18, 1
      %s250 = smul.addr %s249, 128
      %s251 = smul.addr %s250, 8
      %s252 = scalar_lea.vmem %s1, %s251
      %p253 = pneg %p65
      %p254 = pneg %p62
      %p255 = scmp.lt.s32.totalorder %s18, 1
      %s256 = scalar_select %p255, %s18, 1
      %s257 = smul.addr %s256, 8
      %s258 = scalar_lea.vmem %s2, %s257
      %p259 = pneg %p91
      %p260 = pneg %p88
      %p261 = pneg %p112
      %p262 = pneg %p109
      %p263 = pneg %p133
      %p264 = pneg %p130
      %p265 = pneg %p159
      %p266 = pneg %p156
      %s267 = smul.u32 32, %s18
      %p268 = scmp.lt.s32.totalorder %s267, 63
      %s269 = scalar_select %p268, %s267, 63
      %s270 = smul.addr %s269, 8
      %s271 = scalar_lea.vmem %s5, %s270
      %p272 = pneg %p185
      %p273 = pneg %p182
      %s274 = smul.u32 32, %s18
      %p275 = scmp.lt.s32.totalorder %s274, 63
      %s276 = scalar_select %p275, %s274, 63
      %s277 = smul.addr %s276, 8
      %s278 = scalar_lea.vmem %s6, %s277
      %s279 = smul.u32 32, %s18
      %p280 = scmp.lt.s32.totalorder %s279, 63
      %s281 = scalar_select %p280, %s279, 63
      %s282 = smul.addr %s281, 8
      %s283 = scalar_lea.vmem %s0, %s282
      %s284 = smul.u32 32, %s18
      %p285 = scmp.lt.s32.totalorder %s18, 1
      %s286 = scalar_select %p285, %s18, 1
      %s287 = smul.addr %s286, 128
      %s288 = smul.addr %s287, 8
      %s289 = scalar_lea.vmem %s1, %s288
      %p290 = scmp.lt.s32.totalorder %s18, 1
      %s291 = scalar_select %p290, %s18, 1
      %s292 = smul.addr %s291, 8
      %s293 = scalar_lea.vmem %s2, %s292
      %s294 = smul.u32 32, %s18
      %p295 = scmp.lt.s32.totalorder %s294, 63
      %s296 = scalar_select %p295, %s294, 63
      %s297 = smul.addr %s296, 8
      %s298 = scalar_lea.vmem %s5, %s297
      %s299 = smul.u32 32, %s18
      %s300 = smul.u32 32, %s18
      %p301 = scmp.lt.s32.totalorder %s300, 63
      %s302 = scalar_select %p301, %s300, 63
      %s303 = smul.addr %s302, 8
      %s304 = scalar_lea.vmem %s6, %s303
      %s305 = smul.u32 32, %s18
      %v307 = vld [vmem:[%s289] sm:$0xff]
      %v308 = vld [vmem:[%s289 + $0x8] sm:$0xff]
      %v309 = vld [vmem:[%s289 + $0x10] sm:$0xff]
      %v310 = vld [vmem:[%s289 + $0x18] sm:$0xff]
      %v311 = vld [vmem:[%s289 + $0x20] sm:$0xff]
      %v312 = vld [vmem:[%s289 + $0x28] sm:$0xff]
      %v313 = vld [vmem:[%s289 + $0x30] sm:$0xff]
      %v314 = vld [vmem:[%s289 + $0x38] sm:$0xff]
      %v315 = vld [vmem:[%s289 + $0x40] sm:$0xff]
      %v316 = vld [vmem:[%s289 + $0x48] sm:$0xff]
      %v317 = vld [vmem:[%s289 + $0x50] sm:$0xff]
      %v318 = vld [vmem:[%s289 + $0x58] sm:$0xff]
      %v319 = vld [vmem:[%s289 + $0x60] sm:$0xff]
      %v320 = vld [vmem:[%s289 + $0x68] sm:$0xff]
      %v321 = vld [vmem:[%s289 + $0x70] sm:$0xff]
      %v322 = vld [vmem:[%s289 + $0x78] sm:$0xff]
      %v323 = vld [vmem:[%s289 + $0x80] sm:$0xff]
      %v324 = vld [vmem:[%s289 + $0x88] sm:$0xff]
      %v325 = vld [vmem:[%s289 + $0x90] sm:$0xff]
      %v326 = vld [vmem:[%s289 + $0x98] sm:$0xff]
      %v327 = vld [vmem:[%s289 + $0xa0] sm:$0xff]
      %v328 = vld [vmem:[%s289 + $0xa8] sm:$0xff]
      %v329 = vld [vmem:[%s289 + $0xb0] sm:$0xff]
      %v330 = vld [vmem:[%s289 + $0xb8] sm:$0xff]
      %v331 = vld [vmem:[%s289 + $0xc0] sm:$0xff]
      %v332 = vld [vmem:[%s289 + $0xc8] sm:$0xff]
      %v333 = vld [vmem:[%s289 + $0xd0] sm:$0xff]
      %v334 = vld [vmem:[%s289 + $0xd8] sm:$0xff]
      %v335 = vld [vmem:[%s289 + $0xe0] sm:$0xff]
      %v336 = vld [vmem:[%s289 + $0xe8] sm:$0xff]
      %v337 = vld [vmem:[%s289 + $0xf0] sm:$0xff]
      %v338 = vld [vmem:[%s289 + $0xf8] sm:$0xff]
      %v339 = vld [vmem:[%s289 + $0x100] sm:$0xff]
      %v340 = vld [vmem:[%s289 + $0x108] sm:$0xff]
      %v341 = vld [vmem:[%s289 + $0x110] sm:$0xff]
      %v342 = vld [vmem:[%s289 + $0x118] sm:$0xff]
      %v343 = vld [vmem:[%s289 + $0x120] sm:$0xff]
      %v344 = vld [vmem:[%s289 + $0x128] sm:$0xff]
      %v345 = vld [vmem:[%s289 + $0x130] sm:$0xff]
      %v346 = vld [vmem:[%s289 + $0x138] sm:$0xff]
      %v347 = vld [vmem:[%s289 + $0x140] sm:$0xff]
      %v348 = vld [vmem:[%s289 + $0x148] sm:$0xff]
      %v349 = vld [vmem:[%s289 + $0x150] sm:$0xff]
      %v350 = vld [vmem:[%s289 + $0x158] sm:$0xff]
      %v351 = vld [vmem:[%s289 + $0x160] sm:$0xff]
      %v352 = vld [vmem:[%s289 + $0x168] sm:$0xff]
      %v353 = vld [vmem:[%s289 + $0x170] sm:$0xff]
      %v354 = vld [vmem:[%s289 + $0x178] sm:$0xff]
      %v355 = vld [vmem:[%s289 + $0x180] sm:$0xff]
      %v356 = vld [vmem:[%s289 + $0x188] sm:$0xff]
      %v357 = vld [vmem:[%s289 + $0x190] sm:$0xff]
      %v358 = vld [vmem:[%s289 + $0x198] sm:$0xff]
      %v359 = vld [vmem:[%s289 + $0x1a0] sm:$0xff]
      %v360 = vld [vmem:[%s289 + $0x1a8] sm:$0xff]
      %v361 = vld [vmem:[%s289 + $0x1b0] sm:$0xff]
      %v362 = vld [vmem:[%s289 + $0x1b8] sm:$0xff]
      %v363 = vld [vmem:[%s289 + $0x1c0] sm:$0xff]
      %v364 = vld [vmem:[%s289 + $0x1c8] sm:$0xff]
      %v365 = vld [vmem:[%s289 + $0x1d0] sm:$0xff]
      %v366 = vld [vmem:[%s289 + $0x1d8] sm:$0xff]
      %v367 = vld [vmem:[%s289 + $0x1e0] sm:$0xff]
      %v368 = vld [vmem:[%s289 + $0x1e8] sm:$0xff]
      %v369 = vld [vmem:[%s289 + $0x1f0] sm:$0xff]
      %v370 = vld [vmem:[%s289 + $0x1f8] sm:$0xff]
      %v371 = vld [vmem:[%s289 + $0x200] sm:$0xff]
      %v372 = vld [vmem:[%s289 + $0x208] sm:$0xff]
      %v373 = vld [vmem:[%s289 + $0x210] sm:$0xff]
      %v374 = vld [vmem:[%s289 + $0x218] sm:$0xff]
      %v375 = vld [vmem:[%s289 + $0x220] sm:$0xff]
      %v376 = vld [vmem:[%s289 + $0x228] sm:$0xff]
      %v377 = vld [vmem:[%s289 + $0x230] sm:$0xff]
      %v378 = vld [vmem:[%s289 + $0x238] sm:$0xff]
      %v379 = vld [vmem:[%s289 + $0x240] sm:$0xff]
      %v380 = vld [vmem:[%s289 + $0x248] sm:$0xff]
      %v381 = vld [vmem:[%s289 + $0x250] sm:$0xff]
      %v382 = vld [vmem:[%s289 + $0x258] sm:$0xff]
      %v383 = vld [vmem:[%s289 + $0x260] sm:$0xff]
      %v384 = vld [vmem:[%s289 + $0x268] sm:$0xff]
      %v385 = vld [vmem:[%s289 + $0x270] sm:$0xff]
      %v386 = vld [vmem:[%s289 + $0x278] sm:$0xff]
      %v387 = vld [vmem:[%s289 + $0x280] sm:$0xff]
      %v388 = vld [vmem:[%s289 + $0x288] sm:$0xff]
      %v389 = vld [vmem:[%s289 + $0x290] sm:$0xff]
      %v390 = vld [vmem:[%s289 + $0x298] sm:$0xff]
      %v391 = vld [vmem:[%s289 + $0x2a0] sm:$0xff]
      %v392 = vld [vmem:[%s289 + $0x2a8] sm:$0xff]
      %v393 = vld [vmem:[%s289 + $0x2b0] sm:$0xff]
      %v394 = vld [vmem:[%s289 + $0x2b8] sm:$0xff]
      %v395 = vld [vmem:[%s289 + $0x2c0] sm:$0xff]
      %v396 = vld [vmem:[%s289 + $0x2c8] sm:$0xff]
      %v397 = vld [vmem:[%s289 + $0x2d0] sm:$0xff]
      %v398 = vld [vmem:[%s289 + $0x2d8] sm:$0xff]
      %v399 = vld [vmem:[%s289 + $0x2e0] sm:$0xff]
      %v400 = vld [vmem:[%s289 + $0x2e8] sm:$0xff]
      %v401 = vld [vmem:[%s289 + $0x2f0] sm:$0xff]
      %v402 = vld [vmem:[%s289 + $0x2f8] sm:$0xff]
      %v403 = vld [vmem:[%s289 + $0x300] sm:$0xff]
      %v404 = vld [vmem:[%s289 + $0x308] sm:$0xff]
      %v405 = vld [vmem:[%s289 + $0x310] sm:$0xff]
      %v406 = vld [vmem:[%s289 + $0x318] sm:$0xff]
      %v407 = vld [vmem:[%s289 + $0x320] sm:$0xff]
      %v408 = vld [vmem:[%s289 + $0x328] sm:$0xff]
      %v409 = vld [vmem:[%s289 + $0x330] sm:$0xff]
      %v410 = vld [vmem:[%s289 + $0x338] sm:$0xff]
      %v411 = vld [vmem:[%s289 + $0x340] sm:$0xff]
      %v412 = vld [vmem:[%s289 + $0x348] sm:$0xff]
      %v413 = vld [vmem:[%s289 + $0x350] sm:$0xff]
      %v414 = vld [vmem:[%s289 + $0x358] sm:$0xff]
      %v415 = vld [vmem:[%s289 + $0x360] sm:$0xff]
      %v416 = vld [vmem:[%s289 + $0x368] sm:$0xff]
      %v417 = vld [vmem:[%s289 + $0x370] sm:$0xff]
      %v418 = vld [vmem:[%s289 + $0x378] sm:$0xff]
      %v419 = vld [vmem:[%s289 + $0x380] sm:$0xff]
      %v420 = vld [vmem:[%s289 + $0x388] sm:$0xff]
      %v421 = vld [vmem:[%s289 + $0x390] sm:$0xff]
      %v422 = vld [vmem:[%s289 + $0x398] sm:$0xff]
      %v423 = vld [vmem:[%s289 + $0x3a0] sm:$0xff]
      %v424 = vld [vmem:[%s289 + $0x3a8] sm:$0xff]
      %v425 = vld [vmem:[%s289 + $0x3b0] sm:$0xff]
      %v426 = vld [vmem:[%s289 + $0x3b8] sm:$0xff]
      %v427 = vld [vmem:[%s289 + $0x3c0] sm:$0xff]
      %v428 = vld [vmem:[%s289 + $0x3c8] sm:$0xff]
      %v429 = vld [vmem:[%s289 + $0x3d0] sm:$0xff]
      %v430 = vld [vmem:[%s289 + $0x3d8] sm:$0xff]
      %v431 = vld [vmem:[%s289 + $0x3e0] sm:$0xff]
      %v432 = vld [vmem:[%s289 + $0x3e8] sm:$0xff]
      %v433 = vld [vmem:[%s289 + $0x3f0] sm:$0xff]
      %v434 = vld [vmem:[%s289 + $0x3f8] sm:$0xff]
      %v435 = vld [vmem:[%s293] sm:$0xff]
      %v436 = vlaneseq
      %v437 = vand.u32 %v436, 127
      %v438 = vadd.s32 %v437, 128
      %439 = vset.pattern.permute.xlu0 0
      %440 = vperm.xlu0 %439, %v307
      %v441 = vpop.permute.xlu0 %440
      %442 = vset.pattern.permute.xlu0 0
      %443 = vperm.xlu0 %442, %v308
      %v444 = vpop.permute.xlu0 %443
      %445 = vset.pattern.permute.xlu0 0
      %446 = vperm.xlu0 %445, %v309
      %v447 = vpop.permute.xlu0 %446
      %448 = vset.pattern.permute.xlu0 0
      %449 = vperm.xlu0 %448, %v310
      %v450 = vpop.permute.xlu0 %449
      %451 = vset.pattern.permute.xlu0 0
      %452 = vperm.xlu0 %451, %v311
      %v453 = vpop.permute.xlu0 %452
      %454 = vset.pattern.permute.xlu0 0
      %455 = vperm.xlu0 %454, %v312
      %v456 = vpop.permute.xlu0 %455
      %457 = vset.pattern.permute.xlu0 0
      %458 = vperm.xlu0 %457, %v313
      %v459 = vpop.permute.xlu0 %458
      %460 = vset.pattern.permute.xlu0 0
      %461 = vperm.xlu0 %460, %v314
      %v462 = vpop.permute.xlu0 %461
      %463 = vset.pattern.permute.xlu0 0
      %464 = vperm.xlu0 %463, %v315
      %v465 = vpop.permute.xlu0 %464
      %466 = vset.pattern.permute.xlu0 0
      %467 = vperm.xlu0 %466, %v316
      %v468 = vpop.permute.xlu0 %467
      %469 = vset.pattern.permute.xlu0 0
      %470 = vperm.xlu0 %469, %v317
      %v471 = vpop.permute.xlu0 %470
      %472 = vset.pattern.permute.xlu0 0
      %473 = vperm.xlu0 %472, %v318
      %v474 = vpop.permute.xlu0 %473
      %475 = vset.pattern.permute.xlu0 0
      %476 = vperm.xlu0 %475, %v319
      %v477 = vpop.permute.xlu0 %476
      %478 = vset.pattern.permute.xlu0 0
      %479 = vperm.xlu0 %478, %v320
      %v480 = vpop.permute.xlu0 %479
      %481 = vset.pattern.permute.xlu0 0
      %482 = vperm.xlu0 %481, %v321
      %v483 = vpop.permute.xlu0 %482
      %484 = vset.pattern.permute.xlu0 0
      %485 = vperm.xlu0 %484, %v322
      %v486 = vpop.permute.xlu0 %485
      %487 = vset.pattern.permute.xlu0 0
      %488 = vperm.xlu0 %487, %v323
      %v489 = vpop.permute.xlu0 %488
      %490 = vset.pattern.permute.xlu0 0
      %491 = vperm.xlu0 %490, %v324
      %v492 = vpop.permute.xlu0 %491
      %493 = vset.pattern.permute.xlu0 0
      %494 = vperm.xlu0 %493, %v325
      %v495 = vpop.permute.xlu0 %494
      %496 = vset.pattern.permute.xlu0 0
      %497 = vperm.xlu0 %496, %v326
      %v498 = vpop.permute.xlu0 %497
      %499 = vset.pattern.permute.xlu0 0
      %500 = vperm.xlu0 %499, %v327
      %v501 = vpop.permute.xlu0 %500
      %502 = vset.pattern.permute.xlu0 0
      %503 = vperm.xlu0 %502, %v328
      %v504 = vpop.permute.xlu0 %503
      %505 = vset.pattern.permute.xlu0 0
      %506 = vperm.xlu0 %505, %v329
      %v507 = vpop.permute.xlu0 %506
      %508 = vset.pattern.permute.xlu0 0
      %509 = vperm.xlu0 %508, %v330
      %v510 = vpop.permute.xlu0 %509
      %511 = vset.pattern.permute.xlu0 0
      %512 = vperm.xlu0 %511, %v331
      %v513 = vpop.permute.xlu0 %512
      %514 = vset.pattern.permute.xlu0 0
      %515 = vperm.xlu0 %514, %v332
      %v516 = vpop.permute.xlu0 %515
      %517 = vset.pattern.permute.xlu0 0
      %518 = vperm.xlu0 %517, %v333
      %v519 = vpop.permute.xlu0 %518
      %520 = vset.pattern.permute.xlu0 0
      %521 = vperm.xlu0 %520, %v334
      %v522 = vpop.permute.xlu0 %521
      %523 = vset.pattern.permute.xlu0 0
      %524 = vperm.xlu0 %523, %v335
      %v525 = vpop.permute.xlu0 %524
      %526 = vset.pattern.permute.xlu0 0
      %527 = vperm.xlu0 %526, %v336
      %v528 = vpop.permute.xlu0 %527
      %529 = vset.pattern.permute.xlu0 0
      %530 = vperm.xlu0 %529, %v337
      %v531 = vpop.permute.xlu0 %530
      %532 = vset.pattern.permute.xlu0 0
      %533 = vperm.xlu0 %532, %v338
      %v534 = vpop.permute.xlu0 %533
      %535 = vset.pattern.permute.xlu0 0
      %536 = vperm.xlu0 %535, %v339
      %v537 = vpop.permute.xlu0 %536
      %538 = vset.pattern.permute.xlu0 0
      %539 = vperm.xlu0 %538, %v340
      %v540 = vpop.permute.xlu0 %539
      %541 = vset.pattern.permute.xlu0 0
      %542 = vperm.xlu0 %541, %v341
      %v543 = vpop.permute.xlu0 %542
      %544 = vset.pattern.permute.xlu0 0
      %545 = vperm.xlu0 %544, %v342
      %v546 = vpop.permute.xlu0 %545
      %547 = vset.pattern.permute.xlu0 0
      %548 = vperm.xlu0 %547, %v343
      %v549 = vpop.permute.xlu0 %548
      %550 = vset.pattern.permute.xlu0 0
      %551 = vperm.xlu0 %550, %v344
      %v552 = vpop.permute.xlu0 %551
      %553 = vset.pattern.permute.xlu0 0
      %554 = vperm.xlu0 %553, %v345
      %v555 = vpop.permute.xlu0 %554
      %556 = vset.pattern.permute.xlu0 0
      %557 = vperm.xlu0 %556, %v346
      %v558 = vpop.permute.xlu0 %557
      %559 = vset.pattern.permute.xlu0 0
      %560 = vperm.xlu0 %559, %v347
      %v561 = vpop.permute.xlu0 %560
      %562 = vset.pattern.permute.xlu0 0
      %563 = vperm.xlu0 %562, %v348
      %v564 = vpop.permute.xlu0 %563
      %565 = vset.pattern.permute.xlu0 0
      %566 = vperm.xlu0 %565, %v349
      %v567 = vpop.permute.xlu0 %566
      %568 = vset.pattern.permute.xlu0 0
      %569 = vperm.xlu0 %568, %v350
      %v570 = vpop.permute.xlu0 %569
      %571 = vset.pattern.permute.xlu0 0
      %572 = vperm.xlu0 %571, %v351
      %v573 = vpop.permute.xlu0 %572
      %574 = vset.pattern.permute.xlu0 0
      %575 = vperm.xlu0 %574, %v352
      %v576 = vpop.permute.xlu0 %575
      %577 = vset.pattern.permute.xlu0 0
      %578 = vperm.xlu0 %577, %v353
      %v579 = vpop.permute.xlu0 %578
      %580 = vset.pattern.permute.xlu0 0
      %581 = vperm.xlu0 %580, %v354
      %v582 = vpop.permute.xlu0 %581
      %583 = vset.pattern.permute.xlu0 0
      %584 = vperm.xlu0 %583, %v355
      %v585 = vpop.permute.xlu0 %584
      %586 = vset.pattern.permute.xlu0 0
      %587 = vperm.xlu0 %586, %v356
      %v588 = vpop.permute.xlu0 %587
      %589 = vset.pattern.permute.xlu0 0
      %590 = vperm.xlu0 %589, %v357
      %v591 = vpop.permute.xlu0 %590
      %592 = vset.pattern.permute.xlu0 0
      %593 = vperm.xlu0 %592, %v358
      %v594 = vpop.permute.xlu0 %593
      %595 = vset.pattern.permute.xlu0 0
      %596 = vperm.xlu0 %595, %v359
      %v597 = vpop.permute.xlu0 %596
      %598 = vset.pattern.permute.xlu0 0
      %599 = vperm.xlu0 %598, %v360
      %v600 = vpop.permute.xlu0 %599
      %601 = vset.pattern.permute.xlu0 0
      %602 = vperm.xlu0 %601, %v361
      %v603 = vpop.permute.xlu0 %602
      %604 = vset.pattern.permute.xlu0 0
      %605 = vperm.xlu0 %604, %v362
      %v606 = vpop.permute.xlu0 %605
      %607 = vset.pattern.permute.xlu0 0
      %608 = vperm.xlu0 %607, %v363
      %v609 = vpop.permute.xlu0 %608
      %610 = vset.pattern.permute.xlu0 0
      %611 = vperm.xlu0 %610, %v364
      %v612 = vpop.permute.xlu0 %611
      %613 = vset.pattern.permute.xlu0 0
      %614 = vperm.xlu0 %613, %v365
      %v615 = vpop.permute.xlu0 %614
      %616 = vset.pattern.permute.xlu0 0
      %617 = vperm.xlu0 %616, %v366
      %v618 = vpop.permute.xlu0 %617
      %619 = vset.pattern.permute.xlu0 0
      %620 = vperm.xlu0 %619, %v367
      %v621 = vpop.permute.xlu0 %620
      %622 = vset.pattern.permute.xlu0 0
      %623 = vperm.xlu0 %622, %v368
      %v624 = vpop.permute.xlu0 %623
      %625 = vset.pattern.permute.xlu0 0
      %626 = vperm.xlu0 %625, %v369
      %v627 = vpop.permute.xlu0 %626
      %628 = vset.pattern.permute.xlu0 0
      %629 = vperm.xlu0 %628, %v370
      %v630 = vpop.permute.xlu0 %629
      %631 = vset.pattern.permute.xlu0 0
      %632 = vperm.xlu0 %631, %v371
      %v633 = vpop.permute.xlu0 %632
      %634 = vset.pattern.permute.xlu0 0
      %635 = vperm.xlu0 %634, %v372
      %v636 = vpop.permute.xlu0 %635
      %637 = vset.pattern.permute.xlu0 0
      %638 = vperm.xlu0 %637, %v373
      %v639 = vpop.permute.xlu0 %638
      %640 = vset.pattern.permute.xlu0 0
      %641 = vperm.xlu0 %640, %v374
      %v642 = vpop.permute.xlu0 %641
      %643 = vset.pattern.permute.xlu0 0
      %644 = vperm.xlu0 %643, %v375
      %v645 = vpop.permute.xlu0 %644
      %646 = vset.pattern.permute.xlu0 0
      %647 = vperm.xlu0 %646, %v376
      %v648 = vpop.permute.xlu0 %647
      %649 = vset.pattern.permute.xlu0 0
      %650 = vperm.xlu0 %649, %v377
      %v651 = vpop.permute.xlu0 %650
      %652 = vset.pattern.permute.xlu0 0
      %653 = vperm.xlu0 %652, %v378
      %v654 = vpop.permute.xlu0 %653
      %655 = vset.pattern.permute.xlu0 0
      %656 = vperm.xlu0 %655, %v379
      %v657 = vpop.permute.xlu0 %656
      %658 = vset.pattern.permute.xlu0 0
      %659 = vperm.xlu0 %658, %v380
      %v660 = vpop.permute.xlu0 %659
      %661 = vset.pattern.permute.xlu0 0
      %662 = vperm.xlu0 %661, %v381
      %v663 = vpop.permute.xlu0 %662
      %664 = vset.pattern.permute.xlu0 0
      %665 = vperm.xlu0 %664, %v382
      %v666 = vpop.permute.xlu0 %665
      %667 = vset.pattern.permute.xlu0 0
      %668 = vperm.xlu0 %667, %v383
      %v669 = vpop.permute.xlu0 %668
      %670 = vset.pattern.permute.xlu0 0
      %671 = vperm.xlu0 %670, %v384
      %v672 = vpop.permute.xlu0 %671
      %673 = vset.pattern.permute.xlu0 0
      %674 = vperm.xlu0 %673, %v385
      %v675 = vpop.permute.xlu0 %674
      %676 = vset.pattern.permute.xlu0 0
      %677 = vperm.xlu0 %676, %v386
      %v678 = vpop.permute.xlu0 %677
      %679 = vset.pattern.permute.xlu0 0
      %680 = vperm.xlu0 %679, %v387
      %v681 = vpop.permute.xlu0 %680
      %682 = vset.pattern.permute.xlu0 0
      %683 = vperm.xlu0 %682, %v388
      %v684 = vpop.permute.xlu0 %683
      %685 = vset.pattern.permute.xlu0 0
      %686 = vperm.xlu0 %685, %v389
      %v687 = vpop.permute.xlu0 %686
      %688 = vset.pattern.permute.xlu0 0
      %689 = vperm.xlu0 %688, %v390
      %v690 = vpop.permute.xlu0 %689
      %691 = vset.pattern.permute.xlu0 0
      %692 = vperm.xlu0 %691, %v391
      %v693 = vpop.permute.xlu0 %692
      %694 = vset.pattern.permute.xlu0 0
      %695 = vperm.xlu0 %694, %v392
      %v696 = vpop.permute.xlu0 %695
      %697 = vset.pattern.permute.xlu0 0
      %698 = vperm.xlu0 %697, %v393
      %v699 = vpop.permute.xlu0 %698
      %700 = vset.pattern.permute.xlu0 0
      %701 = vperm.xlu0 %700, %v394
      %v702 = vpop.permute.xlu0 %701
      %703 = vset.pattern.permute.xlu0 0
      %704 = vperm.xlu0 %703, %v395
      %v705 = vpop.permute.xlu0 %704
      %706 = vset.pattern.permute.xlu0 0
      %707 = vperm.xlu0 %706, %v396
      %v708 = vpop.permute.xlu0 %707
      %709 = vset.pattern.permute.xlu0 0
      %710 = vperm.xlu0 %709, %v397
      %v711 = vpop.permute.xlu0 %710
      %712 = vset.pattern.permute.xlu0 0
      %713 = vperm.xlu0 %712, %v398
      %v714 = vpop.permute.xlu0 %713
      %715 = vset.pattern.permute.xlu0 0
      %716 = vperm.xlu0 %715, %v399
      %v717 = vpop.permute.xlu0 %716
      %718 = vset.pattern.permute.xlu0 0
      %719 = vperm.xlu0 %718, %v400
      %v720 = vpop.permute.xlu0 %719
      %721 = vset.pattern.permute.xlu0 0
      %722 = vperm.xlu0 %721, %v401
      %v723 = vpop.permute.xlu0 %722
      %724 = vset.pattern.permute.xlu0 0
      %725 = vperm.xlu0 %724, %v402
      %v726 = vpop.permute.xlu0 %725
      %727 = vset.pattern.permute.xlu0 0
      %728 = vperm.xlu0 %727, %v403
      %v729 = vpop.permute.xlu0 %728
      %730 = vset.pattern.permute.xlu0 0
      %731 = vperm.xlu0 %730, %v404
      %v732 = vpop.permute.xlu0 %731
      %733 = vset.pattern.permute.xlu0 0
      %734 = vperm.xlu0 %733, %v405
      %v735 = vpop.permute.xlu0 %734
      %736 = vset.pattern.permute.xlu0 0
      %737 = vperm.xlu0 %736, %v406
      %v738 = vpop.permute.xlu0 %737
      %739 = vset.pattern.permute.xlu0 0
      %740 = vperm.xlu0 %739, %v407
      %v741 = vpop.permute.xlu0 %740
      %742 = vset.pattern.permute.xlu0 0
      %743 = vperm.xlu0 %742, %v408
      %v744 = vpop.permute.xlu0 %743
      %745 = vset.pattern.permute.xlu0 0
      %746 = vperm.xlu0 %745, %v409
      %v747 = vpop.permute.xlu0 %746
      %748 = vset.pattern.permute.xlu0 0
      %749 = vperm.xlu0 %748, %v410
      %v750 = vpop.permute.xlu0 %749
      %751 = vset.pattern.permute.xlu0 0
      %752 = vperm.xlu0 %751, %v411
      %v753 = vpop.permute.xlu0 %752
      %754 = vset.pattern.permute.xlu0 0
      %755 = vperm.xlu0 %754, %v412
      %v756 = vpop.permute.xlu0 %755
      %757 = vset.pattern.permute.xlu0 0
      %758 = vperm.xlu0 %757, %v413
      %v759 = vpop.permute.xlu0 %758
      %760 = vset.pattern.permute.xlu0 0
      %761 = vperm.xlu0 %760, %v414
      %v762 = vpop.permute.xlu0 %761
      %763 = vset.pattern.permute.xlu0 0
      %764 = vperm.xlu0 %763, %v415
      %v765 = vpop.permute.xlu0 %764
      %766 = vset.pattern.permute.xlu0 0
      %767 = vperm.xlu0 %766, %v416
      %v768 = vpop.permute.xlu0 %767
      %769 = vset.pattern.permute.xlu0 0
      %770 = vperm.xlu0 %769, %v417
      %v771 = vpop.permute.xlu0 %770
      %772 = vset.pattern.permute.xlu0 0
      %773 = vperm.xlu0 %772, %v418
      %v774 = vpop.permute.xlu0 %773
      %775 = vset.pattern.permute.xlu0 0
      %776 = vperm.xlu0 %775, %v419
      %v777 = vpop.permute.xlu0 %776
      %778 = vset.pattern.permute.xlu0 0
      %779 = vperm.xlu0 %778, %v420
      %v780 = vpop.permute.xlu0 %779
      %781 = vset.pattern.permute.xlu0 0
      %782 = vperm.xlu0 %781, %v421
      %v783 = vpop.permute.xlu0 %782
      %784 = vset.pattern.permute.xlu0 0
      %785 = vperm.xlu0 %784, %v422
      %v786 = vpop.permute.xlu0 %785
      %787 = vset.pattern.permute.xlu0 0
      %788 = vperm.xlu0 %787, %v423
      %v789 = vpop.permute.xlu0 %788
      %790 = vset.pattern.permute.xlu0 0
      %791 = vperm.xlu0 %790, %v424
      %v792 = vpop.permute.xlu0 %791
      %793 = vset.pattern.permute.xlu0 0
      %794 = vperm.xlu0 %793, %v425
      %v795 = vpop.permute.xlu0 %794
      %796 = vset.pattern.permute.xlu0 0
      %797 = vperm.xlu0 %796, %v426
      %v798 = vpop.permute.xlu0 %797
      %799 = vset.pattern.permute.xlu0 0
      %800 = vperm.xlu0 %799, %v427
      %v801 = vpop.permute.xlu0 %800
      %802 = vset.pattern.permute.xlu0 0
      %803 = vperm.xlu0 %802, %v428
      %v804 = vpop.permute.xlu0 %803
      %805 = vset.pattern.permute.xlu0 0
      %806 = vperm.xlu0 %805, %v429
      %v807 = vpop.permute.xlu0 %806
      %808 = vset.pattern.permute.xlu0 0
      %809 = vperm.xlu0 %808, %v430
      %v810 = vpop.permute.xlu0 %809
      %811 = vset.pattern.permute.xlu0 0
      %812 = vperm.xlu0 %811, %v431
      %v813 = vpop.permute.xlu0 %812
      %814 = vset.pattern.permute.xlu0 0
      %815 = vperm.xlu0 %814, %v432
      %v816 = vpop.permute.xlu0 %815
      %817 = vset.pattern.permute.xlu0 0
      %818 = vperm.xlu0 %817, %v433
      %v819 = vpop.permute.xlu0 %818
      %820 = vset.pattern.permute.xlu0 0
      %821 = vperm.xlu0 %820, %v434
      %v822 = vpop.permute.xlu0 %821
      %vm823 = vcmp.eq.s32.totalorder %v441, %v437
      %vm824 = vcmp.eq.s32.totalorder %v441, %v438
      %vm825 = vcmp.eq.s32.totalorder %v444, %v437
      %vm826 = vcmp.eq.s32.totalorder %v444, %v438
      %vm827 = vcmp.eq.s32.totalorder %v447, %v437
      %vm828 = vcmp.eq.s32.totalorder %v447, %v438
      %vm829 = vcmp.eq.s32.totalorder %v450, %v437
      %vm830 = vcmp.eq.s32.totalorder %v450, %v438
      %vm831 = vcmp.eq.s32.totalorder %v453, %v437
      %vm832 = vcmp.eq.s32.totalorder %v453, %v438
      %vm833 = vcmp.eq.s32.totalorder %v456, %v437
      %vm834 = vcmp.eq.s32.totalorder %v456, %v438
      %vm835 = vcmp.eq.s32.totalorder %v459, %v437
      %vm836 = vcmp.eq.s32.totalorder %v459, %v438
      %vm837 = vcmp.eq.s32.totalorder %v462, %v437
      %vm838 = vcmp.eq.s32.totalorder %v462, %v438
      %vm839 = vcmp.eq.s32.totalorder %v465, %v437
      %vm840 = vcmp.eq.s32.totalorder %v465, %v438
      %vm841 = vcmp.eq.s32.totalorder %v468, %v437
      %vm842 = vcmp.eq.s32.totalorder %v468, %v438
      %vm843 = vcmp.eq.s32.totalorder %v471, %v437
      %vm844 = vcmp.eq.s32.totalorder %v471, %v438
      %vm845 = vcmp.eq.s32.totalorder %v474, %v437
      %vm846 = vcmp.eq.s32.totalorder %v474, %v438
      %vm847 = vcmp.eq.s32.totalorder %v477, %v437
      %vm848 = vcmp.eq.s32.totalorder %v477, %v438
      %vm849 = vcmp.eq.s32.totalorder %v480, %v437
      %vm850 = vcmp.eq.s32.totalorder %v480, %v438
      %vm851 = vcmp.eq.s32.totalorder %v483, %v437
      %vm852 = vcmp.eq.s32.totalorder %v483, %v438
      %vm853 = vcmp.eq.s32.totalorder %v486, %v437
      %vm854 = vcmp.eq.s32.totalorder %v486, %v438
      %vm855 = vcmp.eq.s32.totalorder %v489, %v437
      %vm856 = vcmp.eq.s32.totalorder %v489, %v438
      %vm857 = vcmp.eq.s32.totalorder %v492, %v437
      %vm858 = vcmp.eq.s32.totalorder %v492, %v438
      %vm859 = vcmp.eq.s32.totalorder %v495, %v437
      %vm860 = vcmp.eq.s32.totalorder %v495, %v438
      %vm861 = vcmp.eq.s32.totalorder %v498, %v437
      %vm862 = vcmp.eq.s32.totalorder %v498, %v438
      %vm863 = vcmp.eq.s32.totalorder %v501, %v437
      %vm864 = vcmp.eq.s32.totalorder %v501, %v438
      %vm865 = vcmp.eq.s32.totalorder %v504, %v437
      %vm866 = vcmp.eq.s32.totalorder %v504, %v438
      %vm867 = vcmp.eq.s32.totalorder %v507, %v437
      %vm868 = vcmp.eq.s32.totalorder %v507, %v438
      %vm869 = vcmp.eq.s32.totalorder %v510, %v437
      %vm870 = vcmp.eq.s32.totalorder %v510, %v438
      %vm871 = vcmp.eq.s32.totalorder %v513, %v437
      %vm872 = vcmp.eq.s32.totalorder %v513, %v438
      %vm873 = vcmp.eq.s32.totalorder %v516, %v437
      %vm874 = vcmp.eq.s32.totalorder %v516, %v438
      %vm875 = vcmp.eq.s32.totalorder %v519, %v437
      %vm876 = vcmp.eq.s32.totalorder %v519, %v438
      %vm877 = vcmp.eq.s32.totalorder %v522, %v437
      %vm878 = vcmp.eq.s32.totalorder %v522, %v438
      %vm879 = vcmp.eq.s32.totalorder %v525, %v437
      %vm880 = vcmp.eq.s32.totalorder %v525, %v438
      %vm881 = vcmp.eq.s32.totalorder %v528, %v437
      %vm882 = vcmp.eq.s32.totalorder %v528, %v438
      %vm883 = vcmp.eq.s32.totalorder %v531, %v437
      %vm884 = vcmp.eq.s32.totalorder %v531, %v438
      %vm885 = vcmp.eq.s32.totalorder %v534, %v437
      %vm886 = vcmp.eq.s32.totalorder %v534, %v438
      %vm887 = vcmp.eq.s32.totalorder %v537, %v437
      %vm888 = vcmp.eq.s32.totalorder %v537, %v438
      %vm889 = vcmp.eq.s32.totalorder %v540, %v437
      %vm890 = vcmp.eq.s32.totalorder %v540, %v438
      %vm891 = vcmp.eq.s32.totalorder %v543, %v437
      %vm892 = vcmp.eq.s32.totalorder %v543, %v438
      %vm893 = vcmp.eq.s32.totalorder %v546, %v437
      %vm894 = vcmp.eq.s32.totalorder %v546, %v438
      %vm895 = vcmp.eq.s32.totalorder %v549, %v437
      %vm896 = vcmp.eq.s32.totalorder %v549, %v438
      %vm897 = vcmp.eq.s32.totalorder %v552, %v437
      %vm898 = vcmp.eq.s32.totalorder %v552, %v438
      %vm899 = vcmp.eq.s32.totalorder %v555, %v437
      %vm900 = vcmp.eq.s32.totalorder %v555, %v438
      %vm901 = vcmp.eq.s32.totalorder %v558, %v437
      %vm902 = vcmp.eq.s32.totalorder %v558, %v438
      %vm903 = vcmp.eq.s32.totalorder %v561, %v437
      %vm904 = vcmp.eq.s32.totalorder %v561, %v438
      %vm905 = vcmp.eq.s32.totalorder %v564, %v437
      %vm906 = vcmp.eq.s32.totalorder %v564, %v438
      %vm907 = vcmp.eq.s32.totalorder %v567, %v437
      %vm908 = vcmp.eq.s32.totalorder %v567, %v438
      %vm909 = vcmp.eq.s32.totalorder %v570, %v437
      %vm910 = vcmp.eq.s32.totalorder %v570, %v438
      %vm911 = vcmp.eq.s32.totalorder %v573, %v437
      %vm912 = vcmp.eq.s32.totalorder %v573, %v438
      %vm913 = vcmp.eq.s32.totalorder %v576, %v437
      %vm914 = vcmp.eq.s32.totalorder %v576, %v438
      %vm915 = vcmp.eq.s32.totalorder %v579, %v437
      %vm916 = vcmp.eq.s32.totalorder %v579, %v438
      %vm917 = vcmp.eq.s32.totalorder %v582, %v437
      %vm918 = vcmp.eq.s32.totalorder %v582, %v438
      %vm919 = vcmp.eq.s32.totalorder %v585, %v437
      %vm920 = vcmp.eq.s32.totalorder %v585, %v438
      %vm921 = vcmp.eq.s32.totalorder %v588, %v437
      %vm922 = vcmp.eq.s32.totalorder %v588, %v438
      %vm923 = vcmp.eq.s32.totalorder %v591, %v437
      %vm924 = vcmp.eq.s32.totalorder %v591, %v438
      %vm925 = vcmp.eq.s32.totalorder %v594, %v437
      %vm926 = vcmp.eq.s32.totalorder %v594, %v438
      %vm927 = vcmp.eq.s32.totalorder %v597, %v437
      %vm928 = vcmp.eq.s32.totalorder %v597, %v438
      %vm929 = vcmp.eq.s32.totalorder %v600, %v437
      %vm930 = vcmp.eq.s32.totalorder %v600, %v438
      %vm931 = vcmp.eq.s32.totalorder %v603, %v437
      %vm932 = vcmp.eq.s32.totalorder %v603, %v438
      %vm933 = vcmp.eq.s32.totalorder %v606, %v437
      %vm934 = vcmp.eq.s32.totalorder %v606, %v438
      %vm935 = vcmp.eq.s32.totalorder %v609, %v437
      %vm936 = vcmp.eq.s32.totalorder %v609, %v438
      %vm937 = vcmp.eq.s32.totalorder %v612, %v437
      %vm938 = vcmp.eq.s32.totalorder %v612, %v438
      %vm939 = vcmp.eq.s32.totalorder %v615, %v437
      %vm940 = vcmp.eq.s32.totalorder %v615, %v438
      %vm941 = vcmp.eq.s32.totalorder %v618, %v437
      %vm942 = vcmp.eq.s32.totalorder %v618, %v438
      %vm943 = vcmp.eq.s32.totalorder %v621, %v437
      %vm944 = vcmp.eq.s32.totalorder %v621, %v438
      %vm945 = vcmp.eq.s32.totalorder %v624, %v437
      %vm946 = vcmp.eq.s32.totalorder %v624, %v438
      %vm947 = vcmp.eq.s32.totalorder %v627, %v437
      %vm948 = vcmp.eq.s32.totalorder %v627, %v438
      %vm949 = vcmp.eq.s32.totalorder %v630, %v437
      %vm950 = vcmp.eq.s32.totalorder %v630, %v438
      %vm951 = vcmp.eq.s32.totalorder %v633, %v437
      %vm952 = vcmp.eq.s32.totalorder %v633, %v438
      %vm953 = vcmp.eq.s32.totalorder %v636, %v437
      %vm954 = vcmp.eq.s32.totalorder %v636, %v438
      %vm955 = vcmp.eq.s32.totalorder %v639, %v437
      %vm956 = vcmp.eq.s32.totalorder %v639, %v438
      %vm957 = vcmp.eq.s32.totalorder %v642, %v437
      %vm958 = vcmp.eq.s32.totalorder %v642, %v438
      %vm959 = vcmp.eq.s32.totalorder %v645, %v437
      %vm960 = vcmp.eq.s32.totalorder %v645, %v438
      %vm961 = vcmp.eq.s32.totalorder %v648, %v437
      %vm962 = vcmp.eq.s32.totalorder %v648, %v438
      %vm963 = vcmp.eq.s32.totalorder %v651, %v437
      %vm964 = vcmp.eq.s32.totalorder %v651, %v438
      %vm965 = vcmp.eq.s32.totalorder %v654, %v437
      %vm966 = vcmp.eq.s32.totalorder %v654, %v438
      %vm967 = vcmp.eq.s32.totalorder %v657, %v437
      %vm968 = vcmp.eq.s32.totalorder %v657, %v438
      %vm969 = vcmp.eq.s32.totalorder %v660, %v437
      %vm970 = vcmp.eq.s32.totalorder %v660, %v438
      %vm971 = vcmp.eq.s32.totalorder %v663, %v437
      %vm972 = vcmp.eq.s32.totalorder %v663, %v438
      %vm973 = vcmp.eq.s32.totalorder %v666, %v437
      %vm974 = vcmp.eq.s32.totalorder %v666, %v438
      %vm975 = vcmp.eq.s32.totalorder %v669, %v437
      %vm976 = vcmp.eq.s32.totalorder %v669, %v438
      %vm977 = vcmp.eq.s32.totalorder %v672, %v437
      %vm978 = vcmp.eq.s32.totalorder %v672, %v438
      %vm979 = vcmp.eq.s32.totalorder %v675, %v437
      %vm980 = vcmp.eq.s32.totalorder %v675, %v438
      %vm981 = vcmp.eq.s32.totalorder %v678, %v437
      %vm982 = vcmp.eq.s32.totalorder %v678, %v438
      %vm983 = vcmp.eq.s32.totalorder %v681, %v437
      %vm984 = vcmp.eq.s32.totalorder %v681, %v438
      %vm985 = vcmp.eq.s32.totalorder %v684, %v437
      %vm986 = vcmp.eq.s32.totalorder %v684, %v438
      %vm987 = vcmp.eq.s32.totalorder %v687, %v437
      %vm988 = vcmp.eq.s32.totalorder %v687, %v438
      %vm989 = vcmp.eq.s32.totalorder %v690, %v437
      %vm990 = vcmp.eq.s32.totalorder %v690, %v438
      %vm991 = vcmp.eq.s32.totalorder %v693, %v437
      %vm992 = vcmp.eq.s32.totalorder %v693, %v438
      %vm993 = vcmp.eq.s32.totalorder %v696, %v437
      %vm994 = vcmp.eq.s32.totalorder %v696, %v438
      %vm995 = vcmp.eq.s32.totalorder %v699, %v437
      %vm996 = vcmp.eq.s32.totalorder %v699, %v438
      %vm997 = vcmp.eq.s32.totalorder %v702, %v437
      %vm998 = vcmp.eq.s32.totalorder %v702, %v438
      %vm999 = vcmp.eq.s32.totalorder %v705, %v437
      %vm1000 = vcmp.eq.s32.totalorder %v705, %v438
      %vm1001 = vcmp.eq.s32.totalorder %v708, %v437
      %vm1002 = vcmp.eq.s32.totalorder %v708, %v438
      %vm1003 = vcmp.eq.s32.totalorder %v711, %v437
      %vm1004 = vcmp.eq.s32.totalorder %v711, %v438
      %vm1005 = vcmp.eq.s32.totalorder %v714, %v437
      %vm1006 = vcmp.eq.s32.totalorder %v714, %v438
      %vm1007 = vcmp.eq.s32.totalorder %v717, %v437
      %vm1008 = vcmp.eq.s32.totalorder %v717, %v438
      %vm1009 = vcmp.eq.s32.totalorder %v720, %v437
      %vm1010 = vcmp.eq.s32.totalorder %v720, %v438
      %vm1011 = vcmp.eq.s32.totalorder %v723, %v437
      %vm1012 = vcmp.eq.s32.totalorder %v723, %v438
      %vm1013 = vcmp.eq.s32.totalorder %v726, %v437
      %vm1014 = vcmp.eq.s32.totalorder %v726, %v438
      %vm1015 = vcmp.eq.s32.totalorder %v729, %v437
      %vm1016 = vcmp.eq.s32.totalorder %v729, %v438
      %vm1017 = vcmp.eq.s32.totalorder %v732, %v437
      %vm1018 = vcmp.eq.s32.totalorder %v732, %v438
      %vm1019 = vcmp.eq.s32.totalorder %v735, %v437
      %vm1020 = vcmp.eq.s32.totalorder %v735, %v438
      %vm1021 = vcmp.eq.s32.totalorder %v738, %v437
      %vm1022 = vcmp.eq.s32.totalorder %v738, %v438
      %vm1023 = vcmp.eq.s32.totalorder %v741, %v437
      %vm1024 = vcmp.eq.s32.totalorder %v741, %v438
      %vm1025 = vcmp.eq.s32.totalorder %v744, %v437
      %vm1026 = vcmp.eq.s32.totalorder %v744, %v438
      %vm1027 = vcmp.eq.s32.totalorder %v747, %v437
      %vm1028 = vcmp.eq.s32.totalorder %v747, %v438
      %vm1029 = vcmp.eq.s32.totalorder %v750, %v437
      %vm1030 = vcmp.eq.s32.totalorder %v750, %v438
      %vm1031 = vcmp.eq.s32.totalorder %v753, %v437
      %vm1032 = vcmp.eq.s32.totalorder %v753, %v438
      %vm1033 = vcmp.eq.s32.totalorder %v756, %v437
      %vm1034 = vcmp.eq.s32.totalorder %v756, %v438
      %vm1035 = vcmp.eq.s32.totalorder %v759, %v437
      %vm1036 = vcmp.eq.s32.totalorder %v759, %v438
      %vm1037 = vcmp.eq.s32.totalorder %v762, %v437
      %vm1038 = vcmp.eq.s32.totalorder %v762, %v438
      %vm1039 = vcmp.eq.s32.totalorder %v765, %v437
      %vm1040 = vcmp.eq.s32.totalorder %v765, %v438
      %vm1041 = vcmp.eq.s32.totalorder %v768, %v437
      %vm1042 = vcmp.eq.s32.totalorder %v768, %v438
      %vm1043 = vcmp.eq.s32.totalorder %v771, %v437
      %vm1044 = vcmp.eq.s32.totalorder %v771, %v438
      %vm1045 = vcmp.eq.s32.totalorder %v774, %v437
      %vm1046 = vcmp.eq.s32.totalorder %v774, %v438
      %vm1047 = vcmp.eq.s32.totalorder %v777, %v437
      %vm1048 = vcmp.eq.s32.totalorder %v777, %v438
      %vm1049 = vcmp.eq.s32.totalorder %v780, %v437
      %vm1050 = vcmp.eq.s32.totalorder %v780, %v438
      %vm1051 = vcmp.eq.s32.totalorder %v783, %v437
      %vm1052 = vcmp.eq.s32.totalorder %v783, %v438
      %vm1053 = vcmp.eq.s32.totalorder %v786, %v437
      %vm1054 = vcmp.eq.s32.totalorder %v786, %v438
      %vm1055 = vcmp.eq.s32.totalorder %v789, %v437
      %vm1056 = vcmp.eq.s32.totalorder %v789, %v438
      %vm1057 = vcmp.eq.s32.totalorder %v792, %v437
      %vm1058 = vcmp.eq.s32.totalorder %v792, %v438
      %vm1059 = vcmp.eq.s32.totalorder %v795, %v437
      %vm1060 = vcmp.eq.s32.totalorder %v795, %v438
      %vm1061 = vcmp.eq.s32.totalorder %v798, %v437
      %vm1062 = vcmp.eq.s32.totalorder %v798, %v438
      %vm1063 = vcmp.eq.s32.totalorder %v801, %v437
      %vm1064 = vcmp.eq.s32.totalorder %v801, %v438
      %vm1065 = vcmp.eq.s32.totalorder %v804, %v437
      %vm1066 = vcmp.eq.s32.totalorder %v804, %v438
      %vm1067 = vcmp.eq.s32.totalorder %v807, %v437
      %vm1068 = vcmp.eq.s32.totalorder %v807, %v438
      %vm1069 = vcmp.eq.s32.totalorder %v810, %v437
      %vm1070 = vcmp.eq.s32.totalorder %v810, %v438
      %vm1071 = vcmp.eq.s32.totalorder %v813, %v437
      %vm1072 = vcmp.eq.s32.totalorder %v813, %v438
      %vm1073 = vcmp.eq.s32.totalorder %v816, %v437
      %vm1074 = vcmp.eq.s32.totalorder %v816, %v438
      %vm1075 = vcmp.eq.s32.totalorder %v819, %v437
      %vm1076 = vcmp.eq.s32.totalorder %v819, %v438
      %vm1077 = vcmp.eq.s32.totalorder %v822, %v437
      %vm1078 = vcmp.eq.s32.totalorder %v822, %v438
      %v1079 = vsel %vm823, 1, 0
      %v1080 = vsel %vm824, 1, 0
      %v1081 = vsel %vm825, 1, 0
      %v1082 = vsel %vm826, 1, 0
      %v1083 = vsel %vm827, 1, 0
      %v1084 = vsel %vm828, 1, 0
      %v1085 = vsel %vm829, 1, 0
      %v1086 = vsel %vm830, 1, 0
      %v1087 = vsel %vm831, 1, 0
      %v1088 = vsel %vm832, 1, 0
      %v1089 = vsel %vm833, 1, 0
      %v1090 = vsel %vm834, 1, 0
      %v1091 = vsel %vm835, 1, 0
      %v1092 = vsel %vm836, 1, 0
      %v1093 = vsel %vm837, 1, 0
      %v1094 = vsel %vm838, 1, 0
      %v1095 = vsel %vm839, 1, 0
      %v1096 = vsel %vm840, 1, 0
      %v1097 = vsel %vm841, 1, 0
      %v1098 = vsel %vm842, 1, 0
      %v1099 = vsel %vm843, 1, 0
      %v1100 = vsel %vm844, 1, 0
      %v1101 = vsel %vm845, 1, 0
      %v1102 = vsel %vm846, 1, 0
      %v1103 = vsel %vm847, 1, 0
      %v1104 = vsel %vm848, 1, 0
      %v1105 = vsel %vm849, 1, 0
      %v1106 = vsel %vm850, 1, 0
      %v1107 = vsel %vm851, 1, 0
      %v1108 = vsel %vm852, 1, 0
      %v1109 = vsel %vm853, 1, 0
      %v1110 = vsel %vm854, 1, 0
      %v1111 = vsel %vm855, 1, 0
      %v1112 = vsel %vm856, 1, 0
      %v1113 = vsel %vm857, 1, 0
      %v1114 = vsel %vm858, 1, 0
      %v1115 = vsel %vm859, 1, 0
      %v1116 = vsel %vm860, 1, 0
      %v1117 = vsel %vm861, 1, 0
      %v1118 = vsel %vm862, 1, 0
      %v1119 = vsel %vm863, 1, 0
      %v1120 = vsel %vm864, 1, 0
      %v1121 = vsel %vm865, 1, 0
      %v1122 = vsel %vm866, 1, 0
      %v1123 = vsel %vm867, 1, 0
      %v1124 = vsel %vm868, 1, 0
      %v1125 = vsel %vm869, 1, 0
      %v1126 = vsel %vm870, 1, 0
      %v1127 = vsel %vm871, 1, 0
      %v1128 = vsel %vm872, 1, 0
      %v1129 = vsel %vm873, 1, 0
      %v1130 = vsel %vm874, 1, 0
      %v1131 = vsel %vm875, 1, 0
      %v1132 = vsel %vm876, 1, 0
      %v1133 = vsel %vm877, 1, 0
      %v1134 = vsel %vm878, 1, 0
      %v1135 = vsel %vm879, 1, 0
      %v1136 = vsel %vm880, 1, 0
      %v1137 = vsel %vm881, 1, 0
      %v1138 = vsel %vm882, 1, 0
      %v1139 = vsel %vm883, 1, 0
      %v1140 = vsel %vm884, 1, 0
      %v1141 = vsel %vm885, 1, 0
      %v1142 = vsel %vm886, 1, 0
      %v1143 = vsel %vm887, 1, 0
      %v1144 = vsel %vm888, 1, 0
      %v1145 = vsel %vm889, 1, 0
      %v1146 = vsel %vm890, 1, 0
      %v1147 = vsel %vm891, 1, 0
      %v1148 = vsel %vm892, 1, 0
      %v1149 = vsel %vm893, 1, 0
      %v1150 = vsel %vm894, 1, 0
      %v1151 = vsel %vm895, 1, 0
      %v1152 = vsel %vm896, 1, 0
      %v1153 = vsel %vm897, 1, 0
      %v1154 = vsel %vm898, 1, 0
      %v1155 = vsel %vm899, 1, 0
      %v1156 = vsel %vm900, 1, 0
      %v1157 = vsel %vm901, 1, 0
      %v1158 = vsel %vm902, 1, 0
      %v1159 = vsel %vm903, 1, 0
      %v1160 = vsel %vm904, 1, 0
      %v1161 = vsel %vm905, 1, 0
      %v1162 = vsel %vm906, 1, 0
      %v1163 = vsel %vm907, 1, 0
      %v1164 = vsel %vm908, 1, 0
      %v1165 = vsel %vm909, 1, 0
      %v1166 = vsel %vm910, 1, 0
      %v1167 = vsel %vm911, 1, 0
      %v1168 = vsel %vm912, 1, 0
      %v1169 = vsel %vm913, 1, 0
      %v1170 = vsel %vm914, 1, 0
      %v1171 = vsel %vm915, 1, 0
      %v1172 = vsel %vm916, 1, 0
      %v1173 = vsel %vm917, 1, 0
      %v1174 = vsel %vm918, 1, 0
      %v1175 = vsel %vm919, 1, 0
      %v1176 = vsel %vm920, 1, 0
      %v1177 = vsel %vm921, 1, 0
      %v1178 = vsel %vm922, 1, 0
      %v1179 = vsel %vm923, 1, 0
      %v1180 = vsel %vm924, 1, 0
      %v1181 = vsel %vm925, 1, 0
      %v1182 = vsel %vm926, 1, 0
      %v1183 = vsel %vm927, 1, 0
      %v1184 = vsel %vm928, 1, 0
      %v1185 = vsel %vm929, 1, 0
      %v1186 = vsel %vm930, 1, 0
      %v1187 = vsel %vm931, 1, 0
      %v1188 = vsel %vm932, 1, 0
      %v1189 = vsel %vm933, 1, 0
      %v1190 = vsel %vm934, 1, 0
      %v1191 = vsel %vm935, 1, 0
      %v1192 = vsel %vm936, 1, 0
      %v1193 = vsel %vm937, 1, 0
      %v1194 = vsel %vm938, 1, 0
      %v1195 = vsel %vm939, 1, 0
      %v1196 = vsel %vm940, 1, 0
      %v1197 = vsel %vm941, 1, 0
      %v1198 = vsel %vm942, 1, 0
      %v1199 = vsel %vm943, 1, 0
      %v1200 = vsel %vm944, 1, 0
      %v1201 = vsel %vm945, 1, 0
      %v1202 = vsel %vm946, 1, 0
      %v1203 = vsel %vm947, 1, 0
      %v1204 = vsel %vm948, 1, 0
      %v1205 = vsel %vm949, 1, 0
      %v1206 = vsel %vm950, 1, 0
      %v1207 = vsel %vm951, 1, 0
      %v1208 = vsel %vm952, 1, 0
      %v1209 = vsel %vm953, 1, 0
      %v1210 = vsel %vm954, 1, 0
      %v1211 = vsel %vm955, 1, 0
      %v1212 = vsel %vm956, 1, 0
      %v1213 = vsel %vm957, 1, 0
      %v1214 = vsel %vm958, 1, 0
      %v1215 = vsel %vm959, 1, 0
      %v1216 = vsel %vm960, 1, 0
      %v1217 = vsel %vm961, 1, 0
      %v1218 = vsel %vm962, 1, 0
      %v1219 = vsel %vm963, 1, 0
      %v1220 = vsel %vm964, 1, 0
      %v1221 = vsel %vm965, 1, 0
      %v1222 = vsel %vm966, 1, 0
      %v1223 = vsel %vm967, 1, 0
      %v1224 = vsel %vm968, 1, 0
      %v1225 = vsel %vm969, 1, 0
      %v1226 = vsel %vm970, 1, 0
      %v1227 = vsel %vm971, 1, 0
      %v1228 = vsel %vm972, 1, 0
      %v1229 = vsel %vm973, 1, 0
      %v1230 = vsel %vm974, 1, 0
      %v1231 = vsel %vm975, 1, 0
      %v1232 = vsel %vm976, 1, 0
      %v1233 = vsel %vm977, 1, 0
      %v1234 = vsel %vm978, 1, 0
      %v1235 = vsel %vm979, 1, 0
      %v1236 = vsel %vm980, 1, 0
      %v1237 = vsel %vm981, 1, 0
      %v1238 = vsel %vm982, 1, 0
      %v1239 = vsel %vm983, 1, 0
      %v1240 = vsel %vm984, 1, 0
      %v1241 = vsel %vm985, 1, 0
      %v1242 = vsel %vm986, 1, 0
      %v1243 = vsel %vm987, 1, 0
      %v1244 = vsel %vm988, 1, 0
      %v1245 = vsel %vm989, 1, 0
      %v1246 = vsel %vm990, 1, 0
      %v1247 = vsel %vm991, 1, 0
      %v1248 = vsel %vm992, 1, 0
      %v1249 = vsel %vm993, 1, 0
      %v1250 = vsel %vm994, 1, 0
      %v1251 = vsel %vm995, 1, 0
      %v1252 = vsel %vm996, 1, 0
      %v1253 = vsel %vm997, 1, 0
      %v1254 = vsel %vm998, 1, 0
      %v1255 = vsel %vm999, 1, 0
      %v1256 = vsel %vm1000, 1, 0
      %v1257 = vsel %vm1001, 1, 0
      %v1258 = vsel %vm1002, 1, 0
      %v1259 = vsel %vm1003, 1, 0
      %v1260 = vsel %vm1004, 1, 0
      %v1261 = vsel %vm1005, 1, 0
      %v1262 = vsel %vm1006, 1, 0
      %v1263 = vsel %vm1007, 1, 0
      %v1264 = vsel %vm1008, 1, 0
      %v1265 = vsel %vm1009, 1, 0
      %v1266 = vsel %vm1010, 1, 0
      %v1267 = vsel %vm1011, 1, 0
      %v1268 = vsel %vm1012, 1, 0
      %v1269 = vsel %vm1013, 1, 0
      %v1270 = vsel %vm1014, 1, 0
      %v1271 = vsel %vm1015, 1, 0
      %v1272 = vsel %vm1016, 1, 0
      %v1273 = vsel %vm1017, 1, 0
      %v1274 = vsel %vm1018, 1, 0
      %v1275 = vsel %vm1019, 1, 0
      %v1276 = vsel %vm1020, 1, 0
      %v1277 = vsel %vm1021, 1, 0
      %v1278 = vsel %vm1022, 1, 0
      %v1279 = vsel %vm1023, 1, 0
      %v1280 = vsel %vm1024, 1, 0
      %v1281 = vsel %vm1025, 1, 0
      %v1282 = vsel %vm1026, 1, 0
      %v1283 = vsel %vm1027, 1, 0
      %v1284 = vsel %vm1028, 1, 0
      %v1285 = vsel %vm1029, 1, 0
      %v1286 = vsel %vm1030, 1, 0
      %v1287 = vsel %vm1031, 1, 0
      %v1288 = vsel %vm1032, 1, 0
      %v1289 = vsel %vm1033, 1, 0
      %v1290 = vsel %vm1034, 1, 0
      %v1291 = vsel %vm1035, 1, 0
      %v1292 = vsel %vm1036, 1, 0
      %v1293 = vsel %vm1037, 1, 0
      %v1294 = vsel %vm1038, 1, 0
      %v1295 = vsel %vm1039, 1, 0
      %v1296 = vsel %vm1040, 1, 0
      %v1297 = vsel %vm1041, 1, 0
      %v1298 = vsel %vm1042, 1, 0
      %v1299 = vsel %vm1043, 1, 0
      %v1300 = vsel %vm1044, 1, 0
      %v1301 = vsel %vm1045, 1, 0
      %v1302 = vsel %vm1046, 1, 0
      %v1303 = vsel %vm1047, 1, 0
      %v1304 = vsel %vm1048, 1, 0
      %v1305 = vsel %vm1049, 1, 0
      %v1306 = vsel %vm1050, 1, 0
      %v1307 = vsel %vm1051, 1, 0
      %v1308 = vsel %vm1052, 1, 0
      %v1309 = vsel %vm1053, 1, 0
      %v1310 = vsel %vm1054, 1, 0
      %v1311 = vsel %vm1055, 1, 0
      %v1312 = vsel %vm1056, 1, 0
      %v1313 = vsel %vm1057, 1, 0
      %v1314 = vsel %vm1058, 1, 0
      %v1315 = vsel %vm1059, 1, 0
      %v1316 = vsel %vm1060, 1, 0
      %v1317 = vsel %vm1061, 1, 0
      %v1318 = vsel %vm1062, 1, 0
      %v1319 = vsel %vm1063, 1, 0
      %v1320 = vsel %vm1064, 1, 0
      %v1321 = vsel %vm1065, 1, 0
      %v1322 = vsel %vm1066, 1, 0
      %v1323 = vsel %vm1067, 1, 0
      %v1324 = vsel %vm1068, 1, 0
      %v1325 = vsel %vm1069, 1, 0
      %v1326 = vsel %vm1070, 1, 0
      %v1327 = vsel %vm1071, 1, 0
      %v1328 = vsel %vm1072, 1, 0
      %v1329 = vsel %vm1073, 1, 0
      %v1330 = vsel %vm1074, 1, 0
      %v1331 = vsel %vm1075, 1, 0
      %v1332 = vsel %vm1076, 1, 0
      %v1333 = vsel %vm1077, 1, 0
      %v1334 = vsel %vm1078, 1, 0
      %v1335 = vcvt.s32.f32 %v1079
      %v1336 = vcvt.s32.f32 %v1080
      %v1337 = vcvt.s32.f32 %v1081
      %v1338 = vcvt.s32.f32 %v1082
      %v1339 = vcvt.s32.f32 %v1083
      %v1340 = vcvt.s32.f32 %v1084
      %v1341 = vcvt.s32.f32 %v1085
      %v1342 = vcvt.s32.f32 %v1086
      %v1343 = vcvt.s32.f32 %v1087
      %v1344 = vcvt.s32.f32 %v1088
      %v1345 = vcvt.s32.f32 %v1089
      %v1346 = vcvt.s32.f32 %v1090
      %v1347 = vcvt.s32.f32 %v1091
      %v1348 = vcvt.s32.f32 %v1092
      %v1349 = vcvt.s32.f32 %v1093
      %v1350 = vcvt.s32.f32 %v1094
      %v1351 = vcvt.s32.f32 %v1095
      %v1352 = vcvt.s32.f32 %v1096
      %v1353 = vcvt.s32.f32 %v1097
      %v1354 = vcvt.s32.f32 %v1098
      %v1355 = vcvt.s32.f32 %v1099
      %v1356 = vcvt.s32.f32 %v1100
      %v1357 = vcvt.s32.f32 %v1101
      %v1358 = vcvt.s32.f32 %v1102
      %v1359 = vcvt.s32.f32 %v1103
      %v1360 = vcvt.s32.f32 %v1104
      %v1361 = vcvt.s32.f32 %v1105
      %v1362 = vcvt.s32.f32 %v1106
      %v1363 = vcvt.s32.f32 %v1107
      %v1364 = vcvt.s32.f32 %v1108
      %v1365 = vcvt.s32.f32 %v1109
      %v1366 = vcvt.s32.f32 %v1110
      %v1367 = vcvt.s32.f32 %v1111
      %v1368 = vcvt.s32.f32 %v1112
      %v1369 = vcvt.s32.f32 %v1113
      %v1370 = vcvt.s32.f32 %v1114
      %v1371 = vcvt.s32.f32 %v1115
      %v1372 = vcvt.s32.f32 %v1116
      %v1373 = vcvt.s32.f32 %v1117
      %v1374 = vcvt.s32.f32 %v1118
      %v1375 = vcvt.s32.f32 %v1119
      %v1376 = vcvt.s32.f32 %v1120
      %v1377 = vcvt.s32.f32 %v1121
      %v1378 = vcvt.s32.f32 %v1122
      %v1379 = vcvt.s32.f32 %v1123
      %v1380 = vcvt.s32.f32 %v1124
      %v1381 = vcvt.s32.f32 %v1125
      %v1382 = vcvt.s32.f32 %v1126
      %v1383 = vcvt.s32.f32 %v1127
      %v1384 = vcvt.s32.f32 %v1128
      %v1385 = vcvt.s32.f32 %v1129
      %v1386 = vcvt.s32.f32 %v1130
      %v1387 = vcvt.s32.f32 %v1131
      %v1388 = vcvt.s32.f32 %v1132
      %v1389 = vcvt.s32.f32 %v1133
      %v1390 = vcvt.s32.f32 %v1134
      %v1391 = vcvt.s32.f32 %v1135
      %v1392 = vcvt.s32.f32 %v1136
      %v1393 = vcvt.s32.f32 %v1137
      %v1394 = vcvt.s32.f32 %v1138
      %v1395 = vcvt.s32.f32 %v1139
      %v1396 = vcvt.s32.f32 %v1140
      %v1397 = vcvt.s32.f32 %v1141
      %v1398 = vcvt.s32.f32 %v1142
      %v1399 = vcvt.s32.f32 %v1143
      %v1400 = vcvt.s32.f32 %v1144
      %v1401 = vcvt.s32.f32 %v1145
      %v1402 = vcvt.s32.f32 %v1146
      %v1403 = vcvt.s32.f32 %v1147
      %v1404 = vcvt.s32.f32 %v1148
      %v1405 = vcvt.s32.f32 %v1149
      %v1406 = vcvt.s32.f32 %v1150
      %v1407 = vcvt.s32.f32 %v1151
      %v1408 = vcvt.s32.f32 %v1152
      %v1409 = vcvt.s32.f32 %v1153
      %v1410 = vcvt.s32.f32 %v1154
      %v1411 = vcvt.s32.f32 %v1155
      %v1412 = vcvt.s32.f32 %v1156
      %v1413 = vcvt.s32.f32 %v1157
      %v1414 = vcvt.s32.f32 %v1158
      %v1415 = vcvt.s32.f32 %v1159
      %v1416 = vcvt.s32.f32 %v1160
      %v1417 = vcvt.s32.f32 %v1161
      %v1418 = vcvt.s32.f32 %v1162
      %v1419 = vcvt.s32.f32 %v1163
      %v1420 = vcvt.s32.f32 %v1164
      %v1421 = vcvt.s32.f32 %v1165
      %v1422 = vcvt.s32.f32 %v1166
      %v1423 = vcvt.s32.f32 %v1167
      %v1424 = vcvt.s32.f32 %v1168
      %v1425 = vcvt.s32.f32 %v1169
      %v1426 = vcvt.s32.f32 %v1170
      %v1427 = vcvt.s32.f32 %v1171
      %v1428 = vcvt.s32.f32 %v1172
      %v1429 = vcvt.s32.f32 %v1173
      %v1430 = vcvt.s32.f32 %v1174
      %v1431 = vcvt.s32.f32 %v1175
      %v1432 = vcvt.s32.f32 %v1176
      %v1433 = vcvt.s32.f32 %v1177
      %v1434 = vcvt.s32.f32 %v1178
      %v1435 = vcvt.s32.f32 %v1179
      %v1436 = vcvt.s32.f32 %v1180
      %v1437 = vcvt.s32.f32 %v1181
      %v1438 = vcvt.s32.f32 %v1182
      %v1439 = vcvt.s32.f32 %v1183
      %v1440 = vcvt.s32.f32 %v1184
      %v1441 = vcvt.s32.f32 %v1185
      %v1442 = vcvt.s32.f32 %v1186
      %v1443 = vcvt.s32.f32 %v1187
      %v1444 = vcvt.s32.f32 %v1188
      %v1445 = vcvt.s32.f32 %v1189
      %v1446 = vcvt.s32.f32 %v1190
      %v1447 = vcvt.s32.f32 %v1191
      %v1448 = vcvt.s32.f32 %v1192
      %v1449 = vcvt.s32.f32 %v1193
      %v1450 = vcvt.s32.f32 %v1194
      %v1451 = vcvt.s32.f32 %v1195
      %v1452 = vcvt.s32.f32 %v1196
      %v1453 = vcvt.s32.f32 %v1197
      %v1454 = vcvt.s32.f32 %v1198
      %v1455 = vcvt.s32.f32 %v1199
      %v1456 = vcvt.s32.f32 %v1200
      %v1457 = vcvt.s32.f32 %v1201
      %v1458 = vcvt.s32.f32 %v1202
      %v1459 = vcvt.s32.f32 %v1203
      %v1460 = vcvt.s32.f32 %v1204
      %v1461 = vcvt.s32.f32 %v1205
      %v1462 = vcvt.s32.f32 %v1206
      %v1463 = vcvt.s32.f32 %v1207
      %v1464 = vcvt.s32.f32 %v1208
      %v1465 = vcvt.s32.f32 %v1209
      %v1466 = vcvt.s32.f32 %v1210
      %v1467 = vcvt.s32.f32 %v1211
      %v1468 = vcvt.s32.f32 %v1212
      %v1469 = vcvt.s32.f32 %v1213
      %v1470 = vcvt.s32.f32 %v1214
      %v1471 = vcvt.s32.f32 %v1215
      %v1472 = vcvt.s32.f32 %v1216
      %v1473 = vcvt.s32.f32 %v1217
      %v1474 = vcvt.s32.f32 %v1218
      %v1475 = vcvt.s32.f32 %v1219
      %v1476 = vcvt.s32.f32 %v1220
      %v1477 = vcvt.s32.f32 %v1221
      %v1478 = vcvt.s32.f32 %v1222
      %v1479 = vcvt.s32.f32 %v1223
      %v1480 = vcvt.s32.f32 %v1224
      %v1481 = vcvt.s32.f32 %v1225
      %v1482 = vcvt.s32.f32 %v1226
      %v1483 = vcvt.s32.f32 %v1227
      %v1484 = vcvt.s32.f32 %v1228
      %v1485 = vcvt.s32.f32 %v1229
      %v1486 = vcvt.s32.f32 %v1230
      %v1487 = vcvt.s32.f32 %v1231
      %v1488 = vcvt.s32.f32 %v1232
      %v1489 = vcvt.s32.f32 %v1233
      %v1490 = vcvt.s32.f32 %v1234
      %v1491 = vcvt.s32.f32 %v1235
      %v1492 = vcvt.s32.f32 %v1236
      %v1493 = vcvt.s32.f32 %v1237
      %v1494 = vcvt.s32.f32 %v1238
      %v1495 = vcvt.s32.f32 %v1239
      %v1496 = vcvt.s32.f32 %v1240
      %v1497 = vcvt.s32.f32 %v1241
      %v1498 = vcvt.s32.f32 %v1242
      %v1499 = vcvt.s32.f32 %v1243
      %v1500 = vcvt.s32.f32 %v1244
      %v1501 = vcvt.s32.f32 %v1245
      %v1502 = vcvt.s32.f32 %v1246
      %v1503 = vcvt.s32.f32 %v1247
      %v1504 = vcvt.s32.f32 %v1248
      %v1505 = vcvt.s32.f32 %v1249
      %v1506 = vcvt.s32.f32 %v1250
      %v1507 = vcvt.s32.f32 %v1251
      %v1508 = vcvt.s32.f32 %v1252
      %v1509 = vcvt.s32.f32 %v1253
      %v1510 = vcvt.s32.f32 %v1254
      %v1511 = vcvt.s32.f32 %v1255
      %v1512 = vcvt.s32.f32 %v1256
      %v1513 = vcvt.s32.f32 %v1257
      %v1514 = vcvt.s32.f32 %v1258
      %v1515 = vcvt.s32.f32 %v1259
      %v1516 = vcvt.s32.f32 %v1260
      %v1517 = vcvt.s32.f32 %v1261
      %v1518 = vcvt.s32.f32 %v1262
      %v1519 = vcvt.s32.f32 %v1263
      %v1520 = vcvt.s32.f32 %v1264
      %v1521 = vcvt.s32.f32 %v1265
      %v1522 = vcvt.s32.f32 %v1266
      %v1523 = vcvt.s32.f32 %v1267
      %v1524 = vcvt.s32.f32 %v1268
      %v1525 = vcvt.s32.f32 %v1269
      %v1526 = vcvt.s32.f32 %v1270
      %v1527 = vcvt.s32.f32 %v1271
      %v1528 = vcvt.s32.f32 %v1272
      %v1529 = vcvt.s32.f32 %v1273
      %v1530 = vcvt.s32.f32 %v1274
      %v1531 = vcvt.s32.f32 %v1275
      %v1532 = vcvt.s32.f32 %v1276
      %v1533 = vcvt.s32.f32 %v1277
      %v1534 = vcvt.s32.f32 %v1278
      %v1535 = vcvt.s32.f32 %v1279
      %v1536 = vcvt.s32.f32 %v1280
      %v1537 = vcvt.s32.f32 %v1281
      %v1538 = vcvt.s32.f32 %v1282
      %v1539 = vcvt.s32.f32 %v1283
      %v1540 = vcvt.s32.f32 %v1284
      %v1541 = vcvt.s32.f32 %v1285
      %v1542 = vcvt.s32.f32 %v1286
      %v1543 = vcvt.s32.f32 %v1287
      %v1544 = vcvt.s32.f32 %v1288
      %v1545 = vcvt.s32.f32 %v1289
      %v1546 = vcvt.s32.f32 %v1290
      %v1547 = vcvt.s32.f32 %v1291
      %v1548 = vcvt.s32.f32 %v1292
      %v1549 = vcvt.s32.f32 %v1293
      %v1550 = vcvt.s32.f32 %v1294
      %v1551 = vcvt.s32.f32 %v1295
      %v1552 = vcvt.s32.f32 %v1296
      %v1553 = vcvt.s32.f32 %v1297
      %v1554 = vcvt.s32.f32 %v1298
      %v1555 = vcvt.s32.f32 %v1299
      %v1556 = vcvt.s32.f32 %v1300
      %v1557 = vcvt.s32.f32 %v1301
      %v1558 = vcvt.s32.f32 %v1302
      %v1559 = vcvt.s32.f32 %v1303
      %v1560 = vcvt.s32.f32 %v1304
      %v1561 = vcvt.s32.f32 %v1305
      %v1562 = vcvt.s32.f32 %v1306
      %v1563 = vcvt.s32.f32 %v1307
      %v1564 = vcvt.s32.f32 %v1308
      %v1565 = vcvt.s32.f32 %v1309
      %v1566 = vcvt.s32.f32 %v1310
      %v1567 = vcvt.s32.f32 %v1311
      %v1568 = vcvt.s32.f32 %v1312
      %v1569 = vcvt.s32.f32 %v1313
      %v1570 = vcvt.s32.f32 %v1314
      %v1571 = vcvt.s32.f32 %v1315
      %v1572 = vcvt.s32.f32 %v1316
      %v1573 = vcvt.s32.f32 %v1317
      %v1574 = vcvt.s32.f32 %v1318
      %v1575 = vcvt.s32.f32 %v1319
      %v1576 = vcvt.s32.f32 %v1320
      %v1577 = vcvt.s32.f32 %v1321
      %v1578 = vcvt.s32.f32 %v1322
      %v1579 = vcvt.s32.f32 %v1323
      %v1580 = vcvt.s32.f32 %v1324
      %v1581 = vcvt.s32.f32 %v1325
      %v1582 = vcvt.s32.f32 %v1326
      %v1583 = vcvt.s32.f32 %v1327
      %v1584 = vcvt.s32.f32 %v1328
      %v1585 = vcvt.s32.f32 %v1329
      %v1586 = vcvt.s32.f32 %v1330
      %v1587 = vcvt.s32.f32 %v1331
      %v1588 = vcvt.s32.f32 %v1332
      %v1589 = vcvt.s32.f32 %v1333
      %v1590 = vcvt.s32.f32 %v1334
      %v1591 = vpack.c.bf16 %v1337, %v1335
      %v1592 = vpack.c.bf16 %v1338, %v1336
      %v1593 = vpack.c.bf16 %v1341, %v1339
      %v1594 = vpack.c.bf16 %v1342, %v1340
      %v1595 = vpack.c.bf16 %v1345, %v1343
      %v1596 = vpack.c.bf16 %v1346, %v1344
      %v1597 = vpack.c.bf16 %v1349, %v1347
      %v1598 = vpack.c.bf16 %v1350, %v1348
      %v1599 = vpack.c.bf16 %v1353, %v1351
      %v1600 = vpack.c.bf16 %v1354, %v1352
      %v1601 = vpack.c.bf16 %v1357, %v1355
      %v1602 = vpack.c.bf16 %v1358, %v1356
      %v1603 = vpack.c.bf16 %v1361, %v1359
      %v1604 = vpack.c.bf16 %v1362, %v1360
      %v1605 = vpack.c.bf16 %v1365, %v1363
      %v1606 = vpack.c.bf16 %v1366, %v1364
      %v1607 = vpack.c.bf16 %v1369, %v1367
      %v1608 = vpack.c.bf16 %v1370, %v1368
      %v1609 = vpack.c.bf16 %v1373, %v1371
      %v1610 = vpack.c.bf16 %v1374, %v1372
      %v1611 = vpack.c.bf16 %v1377, %v1375
      %v1612 = vpack.c.bf16 %v1378, %v1376
      %v1613 = vpack.c.bf16 %v1381, %v1379
      %v1614 = vpack.c.bf16 %v1382, %v1380
      %v1615 = vpack.c.bf16 %v1385, %v1383
      %v1616 = vpack.c.bf16 %v1386, %v1384
      %v1617 = vpack.c.bf16 %v1389, %v1387
      %v1618 = vpack.c.bf16 %v1390, %v1388
      %v1619 = vpack.c.bf16 %v1393, %v1391
      %v1620 = vpack.c.bf16 %v1394, %v1392
      %v1621 = vpack.c.bf16 %v1397, %v1395
      %v1622 = vpack.c.bf16 %v1398, %v1396
      %v1623 = vpack.c.bf16 %v1401, %v1399
      %v1624 = vpack.c.bf16 %v1402, %v1400
      %v1625 = vpack.c.bf16 %v1405, %v1403
      %v1626 = vpack.c.bf16 %v1406, %v1404
      %v1627 = vpack.c.bf16 %v1409, %v1407
      %v1628 = vpack.c.bf16 %v1410, %v1408
      %v1629 = vpack.c.bf16 %v1413, %v1411
      %v1630 = vpack.c.bf16 %v1414, %v1412
      %v1631 = vpack.c.bf16 %v1417, %v1415
      %v1632 = vpack.c.bf16 %v1418, %v1416
      %v1633 = vpack.c.bf16 %v1421, %v1419
      %v1634 = vpack.c.bf16 %v1422, %v1420
      %v1635 = vpack.c.bf16 %v1425, %v1423
      %v1636 = vpack.c.bf16 %v1426, %v1424
      %v1637 = vpack.c.bf16 %v1429, %v1427
      %v1638 = vpack.c.bf16 %v1430, %v1428
      %v1639 = vpack.c.bf16 %v1433, %v1431
      %v1640 = vpack.c.bf16 %v1434, %v1432
      %v1641 = vpack.c.bf16 %v1437, %v1435
      %v1642 = vpack.c.bf16 %v1438, %v1436
      %v1643 = vpack.c.bf16 %v1441, %v1439
      %v1644 = vpack.c.bf16 %v1442, %v1440
      %v1645 = vpack.c.bf16 %v1445, %v1443
      %v1646 = vpack.c.bf16 %v1446, %v1444
      %v1647 = vpack.c.bf16 %v1449, %v1447
      %v1648 = vpack.c.bf16 %v1450, %v1448
      %v1649 = vpack.c.bf16 %v1453, %v1451
      %v1650 = vpack.c.bf16 %v1454, %v1452
      %v1651 = vpack.c.bf16 %v1457, %v1455
      %v1652 = vpack.c.bf16 %v1458, %v1456
      %v1653 = vpack.c.bf16 %v1461, %v1459
      %v1654 = vpack.c.bf16 %v1462, %v1460
      %v1655 = vpack.c.bf16 %v1465, %v1463
      %v1656 = vpack.c.bf16 %v1466, %v1464
      %v1657 = vpack.c.bf16 %v1469, %v1467
      %v1658 = vpack.c.bf16 %v1470, %v1468
      %v1659 = vpack.c.bf16 %v1473, %v1471
      %v1660 = vpack.c.bf16 %v1474, %v1472
      %v1661 = vpack.c.bf16 %v1477, %v1475
      %v1662 = vpack.c.bf16 %v1478, %v1476
      %v1663 = vpack.c.bf16 %v1481, %v1479
      %v1664 = vpack.c.bf16 %v1482, %v1480
      %v1665 = vpack.c.bf16 %v1485, %v1483
      %v1666 = vpack.c.bf16 %v1486, %v1484
      %v1667 = vpack.c.bf16 %v1489, %v1487
      %v1668 = vpack.c.bf16 %v1490, %v1488
      %v1669 = vpack.c.bf16 %v1493, %v1491
      %v1670 = vpack.c.bf16 %v1494, %v1492
      %v1671 = vpack.c.bf16 %v1497, %v1495
      %v1672 = vpack.c.bf16 %v1498, %v1496
      %v1673 = vpack.c.bf16 %v1501, %v1499
      %v1674 = vpack.c.bf16 %v1502, %v1500
      %v1675 = vpack.c.bf16 %v1505, %v1503
      %v1676 = vpack.c.bf16 %v1506, %v1504
      %v1677 = vpack.c.bf16 %v1509, %v1507
      %v1678 = vpack.c.bf16 %v1510, %v1508
      %v1679 = vpack.c.bf16 %v1513, %v1511
      %v1680 = vpack.c.bf16 %v1514, %v1512
      %v1681 = vpack.c.bf16 %v1517, %v1515
      %v1682 = vpack.c.bf16 %v1518, %v1516
      %v1683 = vpack.c.bf16 %v1521, %v1519
      %v1684 = vpack.c.bf16 %v1522, %v1520
      %v1685 = vpack.c.bf16 %v1525, %v1523
      %v1686 = vpack.c.bf16 %v1526, %v1524
      %v1687 = vpack.c.bf16 %v1529, %v1527
      %v1688 = vpack.c.bf16 %v1530, %v1528
      %v1689 = vpack.c.bf16 %v1533, %v1531
      %v1690 = vpack.c.bf16 %v1534, %v1532
      %v1691 = vpack.c.bf16 %v1537, %v1535
      %v1692 = vpack.c.bf16 %v1538, %v1536
      %v1693 = vpack.c.bf16 %v1541, %v1539
      %v1694 = vpack.c.bf16 %v1542, %v1540
      %v1695 = vpack.c.bf16 %v1545, %v1543
      %v1696 = vpack.c.bf16 %v1546, %v1544
      %v1697 = vpack.c.bf16 %v1549, %v1547
      %v1698 = vpack.c.bf16 %v1550, %v1548
      %v1699 = vpack.c.bf16 %v1553, %v1551
      %v1700 = vpack.c.bf16 %v1554, %v1552
      %v1701 = vpack.c.bf16 %v1557, %v1555
      %v1702 = vpack.c.bf16 %v1558, %v1556
      %v1703 = vpack.c.bf16 %v1561, %v1559
      %v1704 = vpack.c.bf16 %v1562, %v1560
      %v1705 = vpack.c.bf16 %v1565, %v1563
      %v1706 = vpack.c.bf16 %v1566, %v1564
      %v1707 = vpack.c.bf16 %v1569, %v1567
      %v1708 = vpack.c.bf16 %v1570, %v1568
      %v1709 = vpack.c.bf16 %v1573, %v1571
      %v1710 = vpack.c.bf16 %v1574, %v1572
      %v1711 = vpack.c.bf16 %v1577, %v1575
      %v1712 = vpack.c.bf16 %v1578, %v1576
      %v1713 = vpack.c.bf16 %v1581, %v1579
      %v1714 = vpack.c.bf16 %v1582, %v1580
      %v1715 = vpack.c.bf16 %v1585, %v1583
      %v1716 = vpack.c.bf16 %v1586, %v1584
      %v1717 = vpack.c.bf16 %v1589, %v1587
      %v1718 = vpack.c.bf16 %v1590, %v1588
      %v1719 = vlaneseq
      %v1720 = vshrl.u32 %v1719, 7
      %v1721 = vadd.s32 %v1720, 8
      %v1722 = vadd.s32 %v1720, 16
      %v1723 = vadd.s32 %v1720, 24
      %v1724 = vadd.s32 %v1720, 32
      %v1725 = vadd.s32 %v1720, 40
      %v1726 = vadd.s32 %v1720, 48
      %v1727 = vadd.s32 %v1720, 56
      %v1728 = vadd.s32 %v1720, 64
      %v1729 = vadd.s32 %v1720, 72
      %v1730 = vadd.s32 %v1720, 80
      %v1731 = vadd.s32 %v1720, 88
      %v1732 = vadd.s32 %v1720, 96
      %v1733 = vadd.s32 %v1720, 104
      %v1734 = vadd.s32 %v1720, 112
      %v1735 = vadd.s32 %v1720, 120
      %v1736 = vadd.s32 %v1720, 128
      %v1737 = vadd.s32 %v1720, 136
      %v1738 = vadd.s32 %v1720, 144
      %v1739 = vadd.s32 %v1720, 152
      %v1740 = vadd.s32 %v1720, 160
      %v1741 = vadd.s32 %v1720, 168
      %v1742 = vadd.s32 %v1720, 176
      %v1743 = vadd.s32 %v1720, 184
      %v1744 = vadd.s32 %v1720, 192
      %v1745 = vadd.s32 %v1720, 200
      %v1746 = vadd.s32 %v1720, 208
      %v1747 = vadd.s32 %v1720, 216
      %v1748 = vadd.s32 %v1720, 224
      %v1749 = vadd.s32 %v1720, 232
      %v1750 = vadd.s32 %v1720, 240
      %v1751 = vadd.s32 %v1720, 248
      %v1752 = vlaneseq
      %v1753 = vshrl.u32 %v1752, 7
      %v1754 = vsub.s32 0, %v1753
      %v1755 = vrot.slane %v435, %v1754
      %v1756 = vlaneseq
      %v1757 = vshrl.u32 %v1756, 7
      %v1758 = vsub.s32 1, %v1757
      %v1759 = vrot.slane %v435, %v1758
      %v1760 = vlaneseq
      %v1761 = vshrl.u32 %v1760, 7
      %v1762 = vsub.s32 2, %v1761
      %v1763 = vrot.slane %v435, %v1762
      %v1764 = vlaneseq
      %v1765 = vshrl.u32 %v1764, 7
      %v1766 = vsub.s32 3, %v1765
      %v1767 = vrot.slane %v435, %v1766
      %v1768 = vlaneseq
      %v1769 = vshrl.u32 %v1768, 7
      %v1770 = vsub.s32 4, %v1769
      %v1771 = vrot.slane %v435, %v1770
      %v1772 = vlaneseq
      %v1773 = vshrl.u32 %v1772, 7
      %v1774 = vsub.s32 5, %v1773
      %v1775 = vrot.slane %v435, %v1774
      %v1776 = vlaneseq
      %v1777 = vshrl.u32 %v1776, 7
      %v1778 = vsub.s32 6, %v1777
      %v1779 = vrot.slane %v435, %v1778
      %v1780 = vlaneseq
      %v1781 = vshrl.u32 %v1780, 7
      %v1782 = vsub.s32 7, %v1781
      %v1783 = vrot.slane %v435, %v1782
      %vm1784 = vcmp.eq.s32.totalorder %v1755, %v1720
      %vm1785 = vcmp.eq.s32.totalorder %v1759, %v1720
      %vm1786 = vcmp.eq.s32.totalorder %v1763, %v1720
      %vm1787 = vcmp.eq.s32.totalorder %v1767, %v1720
      %vm1788 = vcmp.eq.s32.totalorder %v1771, %v1720
      %vm1789 = vcmp.eq.s32.totalorder %v1775, %v1720
      %vm1790 = vcmp.eq.s32.totalorder %v1779, %v1720
      %vm1791 = vcmp.eq.s32.totalorder %v1783, %v1720
      %vm1792 = vcmp.eq.s32.totalorder %v1755, %v1721
      %vm1793 = vcmp.eq.s32.totalorder %v1759, %v1721
      %vm1794 = vcmp.eq.s32.totalorder %v1763, %v1721
      %vm1795 = vcmp.eq.s32.totalorder %v1767, %v1721
      %vm1796 = vcmp.eq.s32.totalorder %v1771, %v1721
      %vm1797 = vcmp.eq.s32.totalorder %v1775, %v1721
      %vm1798 = vcmp.eq.s32.totalorder %v1779, %v1721
      %vm1799 = vcmp.eq.s32.totalorder %v1783, %v1721
      %vm1800 = vcmp.eq.s32.totalorder %v1755, %v1722
      %vm1801 = vcmp.eq.s32.totalorder %v1759, %v1722
      %vm1802 = vcmp.eq.s32.totalorder %v1763, %v1722
      %vm1803 = vcmp.eq.s32.totalorder %v1767, %v1722
      %vm1804 = vcmp.eq.s32.totalorder %v1771, %v1722
      %vm1805 = vcmp.eq.s32.totalorder %v1775, %v1722
      %vm1806 = vcmp.eq.s32.totalorder %v1779, %v1722
      %vm1807 = vcmp.eq.s32.totalorder %v1783, %v1722
      %vm1808 = vcmp.eq.s32.totalorder %v1755, %v1723
      %vm1809 = vcmp.eq.s32.totalorder %v1759, %v1723
      %vm1810 = vcmp.eq.s32.totalorder %v1763, %v1723
      %vm1811 = vcmp.eq.s32.totalorder %v1767, %v1723
      %vm1812 = vcmp.eq.s32.totalorder %v1771, %v1723
      %vm1813 = vcmp.eq.s32.totalorder %v1775, %v1723
      %vm1814 = vcmp.eq.s32.totalorder %v1779, %v1723
      %vm1815 = vcmp.eq.s32.totalorder %v1783, %v1723
      %vm1816 = vcmp.eq.s32.totalorder %v1755, %v1724
      %vm1817 = vcmp.eq.s32.totalorder %v1759, %v1724
      %vm1818 = vcmp.eq.s32.totalorder %v1763, %v1724
      %vm1819 = vcmp.eq.s32.totalorder %v1767, %v1724
      %vm1820 = vcmp.eq.s32.totalorder %v1771, %v1724
      %vm1821 = vcmp.eq.s32.totalorder %v1775, %v1724
      %vm1822 = vcmp.eq.s32.totalorder %v1779, %v1724
      %vm1823 = vcmp.eq.s32.totalorder %v1783, %v1724
      %vm1824 = vcmp.eq.s32.totalorder %v1755, %v1725
      %vm1825 = vcmp.eq.s32.totalorder %v1759, %v1725
      %vm1826 = vcmp.eq.s32.totalorder %v1763, %v1725
      %vm1827 = vcmp.eq.s32.totalorder %v1767, %v1725
      %vm1828 = vcmp.eq.s32.totalorder %v1771, %v1725
      %vm1829 = vcmp.eq.s32.totalorder %v1775, %v1725
      %vm1830 = vcmp.eq.s32.totalorder %v1779, %v1725
      %vm1831 = vcmp.eq.s32.totalorder %v1783, %v1725
      %vm1832 = vcmp.eq.s32.totalorder %v1755, %v1726
      %vm1833 = vcmp.eq.s32.totalorder %v1759, %v1726
      %vm1834 = vcmp.eq.s32.totalorder %v1763, %v1726
      %vm1835 = vcmp.eq.s32.totalorder %v1767, %v1726
      %vm1836 = vcmp.eq.s32.totalorder %v1771, %v1726
      %vm1837 = vcmp.eq.s32.totalorder %v1775, %v1726
      %vm1838 = vcmp.eq.s32.totalorder %v1779, %v1726
      %vm1839 = vcmp.eq.s32.totalorder %v1783, %v1726
      %vm1840 = vcmp.eq.s32.totalorder %v1755, %v1727
      %vm1841 = vcmp.eq.s32.totalorder %v1759, %v1727
      %vm1842 = vcmp.eq.s32.totalorder %v1763, %v1727
      %vm1843 = vcmp.eq.s32.totalorder %v1767, %v1727
      %vm1844 = vcmp.eq.s32.totalorder %v1771, %v1727
      %vm1845 = vcmp.eq.s32.totalorder %v1775, %v1727
      %vm1846 = vcmp.eq.s32.totalorder %v1779, %v1727
      %vm1847 = vcmp.eq.s32.totalorder %v1783, %v1727
      %vm1848 = vcmp.eq.s32.totalorder %v1755, %v1728
      %vm1849 = vcmp.eq.s32.totalorder %v1759, %v1728
      %vm1850 = vcmp.eq.s32.totalorder %v1763, %v1728
      %vm1851 = vcmp.eq.s32.totalorder %v1767, %v1728
      %vm1852 = vcmp.eq.s32.totalorder %v1771, %v1728
      %vm1853 = vcmp.eq.s32.totalorder %v1775, %v1728
      %vm1854 = vcmp.eq.s32.totalorder %v1779, %v1728
      %vm1855 = vcmp.eq.s32.totalorder %v1783, %v1728
      %vm1856 = vcmp.eq.s32.totalorder %v1755, %v1729
      %vm1857 = vcmp.eq.s32.totalorder %v1759, %v1729
      %vm1858 = vcmp.eq.s32.totalorder %v1763, %v1729
      %vm1859 = vcmp.eq.s32.totalorder %v1767, %v1729
      %vm1860 = vcmp.eq.s32.totalorder %v1771, %v1729
      %vm1861 = vcmp.eq.s32.totalorder %v1775, %v1729
      %vm1862 = vcmp.eq.s32.totalorder %v1779, %v1729
      %vm1863 = vcmp.eq.s32.totalorder %v1783, %v1729
      %vm1864 = vcmp.eq.s32.totalorder %v1755, %v1730
      %vm1865 = vcmp.eq.s32.totalorder %v1759, %v1730
      %vm1866 = vcmp.eq.s32.totalorder %v1763, %v1730
      %vm1867 = vcmp.eq.s32.totalorder %v1767, %v1730
      %vm1868 = vcmp.eq.s32.totalorder %v1771, %v1730
      %vm1869 = vcmp.eq.s32.totalorder %v1775, %v1730
      %vm1870 = vcmp.eq.s32.totalorder %v1779, %v1730
      %vm1871 = vcmp.eq.s32.totalorder %v1783, %v1730
      %vm1872 = vcmp.eq.s32.totalorder %v1755, %v1731
      %vm1873 = vcmp.eq.s32.totalorder %v1759, %v1731
      %vm1874 = vcmp.eq.s32.totalorder %v1763, %v1731
      %vm1875 = vcmp.eq.s32.totalorder %v1767, %v1731
      %vm1876 = vcmp.eq.s32.totalorder %v1771, %v1731
      %vm1877 = vcmp.eq.s32.totalorder %v1775, %v1731
      %vm1878 = vcmp.eq.s32.totalorder %v1779, %v1731
      %vm1879 = vcmp.eq.s32.totalorder %v1783, %v1731
      %vm1880 = vcmp.eq.s32.totalorder %v1755, %v1732
      %vm1881 = vcmp.eq.s32.totalorder %v1759, %v1732
      %vm1882 = vcmp.eq.s32.totalorder %v1763, %v1732
      %vm1883 = vcmp.eq.s32.totalorder %v1767, %v1732
      %vm1884 = vcmp.eq.s32.totalorder %v1771, %v1732
      %vm1885 = vcmp.eq.s32.totalorder %v1775, %v1732
      %vm1886 = vcmp.eq.s32.totalorder %v1779, %v1732
      %vm1887 = vcmp.eq.s32.totalorder %v1783, %v1732
      %vm1888 = vcmp.eq.s32.totalorder %v1755, %v1733
      %vm1889 = vcmp.eq.s32.totalorder %v1759, %v1733
      %vm1890 = vcmp.eq.s32.totalorder %v1763, %v1733
      %vm1891 = vcmp.eq.s32.totalorder %v1767, %v1733
      %vm1892 = vcmp.eq.s32.totalorder %v1771, %v1733
      %vm1893 = vcmp.eq.s32.totalorder %v1775, %v1733
      %vm1894 = vcmp.eq.s32.totalorder %v1779, %v1733
      %vm1895 = vcmp.eq.s32.totalorder %v1783, %v1733
      %vm1896 = vcmp.eq.s32.totalorder %v1755, %v1734
      %vm1897 = vcmp.eq.s32.totalorder %v1759, %v1734
      %vm1898 = vcmp.eq.s32.totalorder %v1763, %v1734
      %vm1899 = vcmp.eq.s32.totalorder %v1767, %v1734
      %vm1900 = vcmp.eq.s32.totalorder %v1771, %v1734
      %vm1901 = vcmp.eq.s32.totalorder %v1775, %v1734
      %vm1902 = vcmp.eq.s32.totalorder %v1779, %v1734
      %vm1903 = vcmp.eq.s32.totalorder %v1783, %v1734
      %vm1904 = vcmp.eq.s32.totalorder %v1755, %v1735
      %vm1905 = vcmp.eq.s32.totalorder %v1759, %v1735
      %vm1906 = vcmp.eq.s32.totalorder %v1763, %v1735
      %vm1907 = vcmp.eq.s32.totalorder %v1767, %v1735
      %vm1908 = vcmp.eq.s32.totalorder %v1771, %v1735
      %vm1909 = vcmp.eq.s32.totalorder %v1775, %v1735
      %vm1910 = vcmp.eq.s32.totalorder %v1779, %v1735
      %vm1911 = vcmp.eq.s32.totalorder %v1783, %v1735
      %vm1912 = vcmp.eq.s32.totalorder %v1755, %v1736
      %vm1913 = vcmp.eq.s32.totalorder %v1759, %v1736
      %vm1914 = vcmp.eq.s32.totalorder %v1763, %v1736
      %vm1915 = vcmp.eq.s32.totalorder %v1767, %v1736
      %vm1916 = vcmp.eq.s32.totalorder %v1771, %v1736
      %vm1917 = vcmp.eq.s32.totalorder %v1775, %v1736
      %vm1918 = vcmp.eq.s32.totalorder %v1779, %v1736
      %vm1919 = vcmp.eq.s32.totalorder %v1783, %v1736
      %vm1920 = vcmp.eq.s32.totalorder %v1755, %v1737
      %vm1921 = vcmp.eq.s32.totalorder %v1759, %v1737
      %vm1922 = vcmp.eq.s32.totalorder %v1763, %v1737
      %vm1923 = vcmp.eq.s32.totalorder %v1767, %v1737
      %vm1924 = vcmp.eq.s32.totalorder %v1771, %v1737
      %vm1925 = vcmp.eq.s32.totalorder %v1775, %v1737
      %vm1926 = vcmp.eq.s32.totalorder %v1779, %v1737
      %vm1927 = vcmp.eq.s32.totalorder %v1783, %v1737
      %vm1928 = vcmp.eq.s32.totalorder %v1755, %v1738
      %vm1929 = vcmp.eq.s32.totalorder %v1759, %v1738
      %vm1930 = vcmp.eq.s32.totalorder %v1763, %v1738
      %vm1931 = vcmp.eq.s32.totalorder %v1767, %v1738
      %vm1932 = vcmp.eq.s32.totalorder %v1771, %v1738
      %vm1933 = vcmp.eq.s32.totalorder %v1775, %v1738
      %vm1934 = vcmp.eq.s32.totalorder %v1779, %v1738
      %vm1935 = vcmp.eq.s32.totalorder %v1783, %v1738
      %vm1936 = vcmp.eq.s32.totalorder %v1755, %v1739
      %vm1937 = vcmp.eq.s32.totalorder %v1759, %v1739
      %vm1938 = vcmp.eq.s32.totalorder %v1763, %v1739
      %vm1939 = vcmp.eq.s32.totalorder %v1767, %v1739
      %vm1940 = vcmp.eq.s32.totalorder %v1771, %v1739
      %vm1941 = vcmp.eq.s32.totalorder %v1775, %v1739
      %vm1942 = vcmp.eq.s32.totalorder %v1779, %v1739
      %vm1943 = vcmp.eq.s32.totalorder %v1783, %v1739
      %vm1944 = vcmp.eq.s32.totalorder %v1755, %v1740
      %vm1945 = vcmp.eq.s32.totalorder %v1759, %v1740
      %vm1946 = vcmp.eq.s32.totalorder %v1763, %v1740
      %vm1947 = vcmp.eq.s32.totalorder %v1767, %v1740
      %vm1948 = vcmp.eq.s32.totalorder %v1771, %v1740
      %vm1949 = vcmp.eq.s32.totalorder %v1775, %v1740
      %vm1950 = vcmp.eq.s32.totalorder %v1779, %v1740
      %vm1951 = vcmp.eq.s32.totalorder %v1783, %v1740
      %vm1952 = vcmp.eq.s32.totalorder %v1755, %v1741
      %vm1953 = vcmp.eq.s32.totalorder %v1759, %v1741
      %vm1954 = vcmp.eq.s32.totalorder %v1763, %v1741
      %vm1955 = vcmp.eq.s32.totalorder %v1767, %v1741
      %vm1956 = vcmp.eq.s32.totalorder %v1771, %v1741
      %vm1957 = vcmp.eq.s32.totalorder %v1775, %v1741
      %vm1958 = vcmp.eq.s32.totalorder %v1779, %v1741
      %vm1959 = vcmp.eq.s32.totalorder %v1783, %v1741
      %vm1960 = vcmp.eq.s32.totalorder %v1755, %v1742
      %vm1961 = vcmp.eq.s32.totalorder %v1759, %v1742
      %vm1962 = vcmp.eq.s32.totalorder %v1763, %v1742
      %vm1963 = vcmp.eq.s32.totalorder %v1767, %v1742
      %vm1964 = vcmp.eq.s32.totalorder %v1771, %v1742
      %vm1965 = vcmp.eq.s32.totalorder %v1775, %v1742
      %vm1966 = vcmp.eq.s32.totalorder %v1779, %v1742
      %vm1967 = vcmp.eq.s32.totalorder %v1783, %v1742
      %vm1968 = vcmp.eq.s32.totalorder %v1755, %v1743
      %vm1969 = vcmp.eq.s32.totalorder %v1759, %v1743
      %vm1970 = vcmp.eq.s32.totalorder %v1763, %v1743
      %vm1971 = vcmp.eq.s32.totalorder %v1767, %v1743
      %vm1972 = vcmp.eq.s32.totalorder %v1771, %v1743
      %vm1973 = vcmp.eq.s32.totalorder %v1775, %v1743
      %vm1974 = vcmp.eq.s32.totalorder %v1779, %v1743
      %vm1975 = vcmp.eq.s32.totalorder %v1783, %v1743
      %vm1976 = vcmp.eq.s32.totalorder %v1755, %v1744
      %vm1977 = vcmp.eq.s32.totalorder %v1759, %v1744
      %vm1978 = vcmp.eq.s32.totalorder %v1763, %v1744
      %vm1979 = vcmp.eq.s32.totalorder %v1767, %v1744
      %vm1980 = vcmp.eq.s32.totalorder %v1771, %v1744
      %vm1981 = vcmp.eq.s32.totalorder %v1775, %v1744
      %vm1982 = vcmp.eq.s32.totalorder %v1779, %v1744
      %vm1983 = vcmp.eq.s32.totalorder %v1783, %v1744
      %vm1984 = vcmp.eq.s32.totalorder %v1755, %v1745
      %vm1985 = vcmp.eq.s32.totalorder %v1759, %v1745
      %vm1986 = vcmp.eq.s32.totalorder %v1763, %v1745
      %vm1987 = vcmp.eq.s32.totalorder %v1767, %v1745
      %vm1988 = vcmp.eq.s32.totalorder %v1771, %v1745
      %vm1989 = vcmp.eq.s32.totalorder %v1775, %v1745
      %vm1990 = vcmp.eq.s32.totalorder %v1779, %v1745
      %vm1991 = vcmp.eq.s32.totalorder %v1783, %v1745
      %vm1992 = vcmp.eq.s32.totalorder %v1755, %v1746
      %vm1993 = vcmp.eq.s32.totalorder %v1759, %v1746
      %vm1994 = vcmp.eq.s32.totalorder %v1763, %v1746
      %vm1995 = vcmp.eq.s32.totalorder %v1767, %v1746
      %vm1996 = vcmp.eq.s32.totalorder %v1771, %v1746
      %vm1997 = vcmp.eq.s32.totalorder %v1775, %v1746
      %vm1998 = vcmp.eq.s32.totalorder %v1779, %v1746
      %vm1999 = vcmp.eq.s32.totalorder %v1783, %v1746
      %vm2000 = vcmp.eq.s32.totalorder %v1755, %v1747
      %vm2001 = vcmp.eq.s32.totalorder %v1759, %v1747
      %vm2002 = vcmp.eq.s32.totalorder %v1763, %v1747
      %vm2003 = vcmp.eq.s32.totalorder %v1767, %v1747
      %vm2004 = vcmp.eq.s32.totalorder %v1771, %v1747
      %vm2005 = vcmp.eq.s32.totalorder %v1775, %v1747
      %vm2006 = vcmp.eq.s32.totalorder %v1779, %v1747
      %vm2007 = vcmp.eq.s32.totalorder %v1783, %v1747
      %vm2008 = vcmp.eq.s32.totalorder %v1755, %v1748
      %vm2009 = vcmp.eq.s32.totalorder %v1759, %v1748
      %vm2010 = vcmp.eq.s32.totalorder %v1763, %v1748
      %vm2011 = vcmp.eq.s32.totalorder %v1767, %v1748
      %vm2012 = vcmp.eq.s32.totalorder %v1771, %v1748
      %vm2013 = vcmp.eq.s32.totalorder %v1775, %v1748
      %vm2014 = vcmp.eq.s32.totalorder %v1779, %v1748
      %vm2015 = vcmp.eq.s32.totalorder %v1783, %v1748
      %vm2016 = vcmp.eq.s32.totalorder %v1755, %v1749
      %vm2017 = vcmp.eq.s32.totalorder %v1759, %v1749
      %vm2018 = vcmp.eq.s32.totalorder %v1763, %v1749
      %vm2019 = vcmp.eq.s32.totalorder %v1767, %v1749
      %vm2020 = vcmp.eq.s32.totalorder %v1771, %v1749
      %vm2021 = vcmp.eq.s32.totalorder %v1775, %v1749
      %vm2022 = vcmp.eq.s32.totalorder %v1779, %v1749
      %vm2023 = vcmp.eq.s32.totalorder %v1783, %v1749
      %vm2024 = vcmp.eq.s32.totalorder %v1755, %v1750
      %vm2025 = vcmp.eq.s32.totalorder %v1759, %v1750
      %vm2026 = vcmp.eq.s32.totalorder %v1763, %v1750
      %vm2027 = vcmp.eq.s32.totalorder %v1767, %v1750
      %vm2028 = vcmp.eq.s32.totalorder %v1771, %v1750
      %vm2029 = vcmp.eq.s32.totalorder %v1775, %v1750
      %vm2030 = vcmp.eq.s32.totalorder %v1779, %v1750
      %vm2031 = vcmp.eq.s32.totalorder %v1783, %v1750
      %vm2032 = vcmp.eq.s32.totalorder %v1755, %v1751
      %vm2033 = vcmp.eq.s32.totalorder %v1759, %v1751
      %vm2034 = vcmp.eq.s32.totalorder %v1763, %v1751
      %vm2035 = vcmp.eq.s32.totalorder %v1767, %v1751
      %vm2036 = vcmp.eq.s32.totalorder %v1771, %v1751
      %vm2037 = vcmp.eq.s32.totalorder %v1775, %v1751
      %vm2038 = vcmp.eq.s32.totalorder %v1779, %v1751
      %vm2039 = vcmp.eq.s32.totalorder %v1783, %v1751
      %v2040 = vsel %vm1784, 1, 0
      %v2041 = vsel %vm1785, 1, 0
      %v2042 = vsel %vm1786, 1, 0
      %v2043 = vsel %vm1787, 1, 0
      %v2044 = vsel %vm1788, 1, 0
      %v2045 = vsel %vm1789, 1, 0
      %v2046 = vsel %vm1790, 1, 0
      %v2047 = vsel %vm1791, 1, 0
      %v2048 = vsel %vm1792, 1, 0
      %v2049 = vsel %vm1793, 1, 0
      %v2050 = vsel %vm1794, 1, 0
      %v2051 = vsel %vm1795, 1, 0
      %v2052 = vsel %vm1796, 1, 0
      %v2053 = vsel %vm1797, 1, 0
      %v2054 = vsel %vm1798, 1, 0
      %v2055 = vsel %vm1799, 1, 0
      %v2056 = vsel %vm1800, 1, 0
      %v2057 = vsel %vm1801, 1, 0
      %v2058 = vsel %vm1802, 1, 0
      %v2059 = vsel %vm1803, 1, 0
      %v2060 = vsel %vm1804, 1, 0
      %v2061 = vsel %vm1805, 1, 0
      %v2062 = vsel %vm1806, 1, 0
      %v2063 = vsel %vm1807, 1, 0
      %v2064 = vsel %vm1808, 1, 0
      %v2065 = vsel %vm1809, 1, 0
      %v2066 = vsel %vm1810, 1, 0
      %v2067 = vsel %vm1811, 1, 0
      %v2068 = vsel %vm1812, 1, 0
      %v2069 = vsel %vm1813, 1, 0
      %v2070 = vsel %vm1814, 1, 0
      %v2071 = vsel %vm1815, 1, 0
      %v2072 = vsel %vm1816, 1, 0
      %v2073 = vsel %vm1817, 1, 0
      %v2074 = vsel %vm1818, 1, 0
      %v2075 = vsel %vm1819, 1, 0
      %v2076 = vsel %vm1820, 1, 0
      %v2077 = vsel %vm1821, 1, 0
      %v2078 = vsel %vm1822, 1, 0
      %v2079 = vsel %vm1823, 1, 0
      %v2080 = vsel %vm1824, 1, 0
      %v2081 = vsel %vm1825, 1, 0
      %v2082 = vsel %vm1826, 1, 0
      %v2083 = vsel %vm1827, 1, 0
      %v2084 = vsel %vm1828, 1, 0
      %v2085 = vsel %vm1829, 1, 0
      %v2086 = vsel %vm1830, 1, 0
      %v2087 = vsel %vm1831, 1, 0
      %v2088 = vsel %vm1832, 1, 0
      %v2089 = vsel %vm1833, 1, 0
      %v2090 = vsel %vm1834, 1, 0
      %v2091 = vsel %vm1835, 1, 0
      %v2092 = vsel %vm1836, 1, 0
      %v2093 = vsel %vm1837, 1, 0
      %v2094 = vsel %vm1838, 1, 0
      %v2095 = vsel %vm1839, 1, 0
      %v2096 = vsel %vm1840, 1, 0
      %v2097 = vsel %vm1841, 1, 0
      %v2098 = vsel %vm1842, 1, 0
      %v2099 = vsel %vm1843, 1, 0
      %v2100 = vsel %vm1844, 1, 0
      %v2101 = vsel %vm1845, 1, 0
      %v2102 = vsel %vm1846, 1, 0
      %v2103 = vsel %vm1847, 1, 0
      %v2104 = vsel %vm1848, 1, 0
      %v2105 = vsel %vm1849, 1, 0
      %v2106 = vsel %vm1850, 1, 0
      %v2107 = vsel %vm1851, 1, 0
      %v2108 = vsel %vm1852, 1, 0
      %v2109 = vsel %vm1853, 1, 0
      %v2110 = vsel %vm1854, 1, 0
      %v2111 = vsel %vm1855, 1, 0
      %v2112 = vsel %vm1856, 1, 0
      %v2113 = vsel %vm1857, 1, 0
      %v2114 = vsel %vm1858, 1, 0
      %v2115 = vsel %vm1859, 1, 0
      %v2116 = vsel %vm1860, 1, 0
      %v2117 = vsel %vm1861, 1, 0
      %v2118 = vsel %vm1862, 1, 0
      %v2119 = vsel %vm1863, 1, 0
      %v2120 = vsel %vm1864, 1, 0
      %v2121 = vsel %vm1865, 1, 0
      %v2122 = vsel %vm1866, 1, 0
      %v2123 = vsel %vm1867, 1, 0
      %v2124 = vsel %vm1868, 1, 0
      %v2125 = vsel %vm1869, 1, 0
      %v2126 = vsel %vm1870, 1, 0
      %v2127 = vsel %vm1871, 1, 0
      %v2128 = vsel %vm1872, 1, 0
      %v2129 = vsel %vm1873, 1, 0
      %v2130 = vsel %vm1874, 1, 0
      %v2131 = vsel %vm1875, 1, 0
      %v2132 = vsel %vm1876, 1, 0
      %v2133 = vsel %vm1877, 1, 0
      %v2134 = vsel %vm1878, 1, 0
      %v2135 = vsel %vm1879, 1, 0
      %v2136 = vsel %vm1880, 1, 0
      %v2137 = vsel %vm1881, 1, 0
      %v2138 = vsel %vm1882, 1, 0
      %v2139 = vsel %vm1883, 1, 0
      %v2140 = vsel %vm1884, 1, 0
      %v2141 = vsel %vm1885, 1, 0
      %v2142 = vsel %vm1886, 1, 0
      %v2143 = vsel %vm1887, 1, 0
      %v2144 = vsel %vm1888, 1, 0
      %v2145 = vsel %vm1889, 1, 0
      %v2146 = vsel %vm1890, 1, 0
      %v2147 = vsel %vm1891, 1, 0
      %v2148 = vsel %vm1892, 1, 0
      %v2149 = vsel %vm1893, 1, 0
      %v2150 = vsel %vm1894, 1, 0
      %v2151 = vsel %vm1895, 1, 0
      %v2152 = vsel %vm1896, 1, 0
      %v2153 = vsel %vm1897, 1, 0
      %v2154 = vsel %vm1898, 1, 0
      %v2155 = vsel %vm1899, 1, 0
      %v2156 = vsel %vm1900, 1, 0
      %v2157 = vsel %vm1901, 1, 0
      %v2158 = vsel %vm1902, 1, 0
      %v2159 = vsel %vm1903, 1, 0
      %v2160 = vsel %vm1904, 1, 0
      %v2161 = vsel %vm1905, 1, 0
      %v2162 = vsel %vm1906, 1, 0
      %v2163 = vsel %vm1907, 1, 0
      %v2164 = vsel %vm1908, 1, 0
      %v2165 = vsel %vm1909, 1, 0
      %v2166 = vsel %vm1910, 1, 0
      %v2167 = vsel %vm1911, 1, 0
      %v2168 = vsel %vm1912, 1, 0
      %v2169 = vsel %vm1913, 1, 0
      %v2170 = vsel %vm1914, 1, 0
      %v2171 = vsel %vm1915, 1, 0
      %v2172 = vsel %vm1916, 1, 0
      %v2173 = vsel %vm1917, 1, 0
      %v2174 = vsel %vm1918, 1, 0
      %v2175 = vsel %vm1919, 1, 0
      %v2176 = vsel %vm1920, 1, 0
      %v2177 = vsel %vm1921, 1, 0
      %v2178 = vsel %vm1922, 1, 0
      %v2179 = vsel %vm1923, 1, 0
      %v2180 = vsel %vm1924, 1, 0
      %v2181 = vsel %vm1925, 1, 0
      %v2182 = vsel %vm1926, 1, 0
      %v2183 = vsel %vm1927, 1, 0
      %v2184 = vsel %vm1928, 1, 0
      %v2185 = vsel %vm1929, 1, 0
      %v2186 = vsel %vm1930, 1, 0
      %v2187 = vsel %vm1931, 1, 0
      %v2188 = vsel %vm1932, 1, 0
      %v2189 = vsel %vm1933, 1, 0
      %v2190 = vsel %vm1934, 1, 0
      %v2191 = vsel %vm1935, 1, 0
      %v2192 = vsel %vm1936, 1, 0
      %v2193 = vsel %vm1937, 1, 0
      %v2194 = vsel %vm1938, 1, 0
      %v2195 = vsel %vm1939, 1, 0
      %v2196 = vsel %vm1940, 1, 0
      %v2197 = vsel %vm1941, 1, 0
      %v2198 = vsel %vm1942, 1, 0
      %v2199 = vsel %vm1943, 1, 0
      %v2200 = vsel %vm1944, 1, 0
      %v2201 = vsel %vm1945, 1, 0
      %v2202 = vsel %vm1946, 1, 0
      %v2203 = vsel %vm1947, 1, 0
      %v2204 = vsel %vm1948, 1, 0
      %v2205 = vsel %vm1949, 1, 0
      %v2206 = vsel %vm1950, 1, 0
      %v2207 = vsel %vm1951, 1, 0
      %v2208 = vsel %vm1952, 1, 0
      %v2209 = vsel %vm1953, 1, 0
      %v2210 = vsel %vm1954, 1, 0
      %v2211 = vsel %vm1955, 1, 0
      %v2212 = vsel %vm1956, 1, 0
      %v2213 = vsel %vm1957, 1, 0
      %v2214 = vsel %vm1958, 1, 0
      %v2215 = vsel %vm1959, 1, 0
      %v2216 = vsel %vm1960, 1, 0
      %v2217 = vsel %vm1961, 1, 0
      %v2218 = vsel %vm1962, 1, 0
      %v2219 = vsel %vm1963, 1, 0
      %v2220 = vsel %vm1964, 1, 0
      %v2221 = vsel %vm1965, 1, 0
      %v2222 = vsel %vm1966, 1, 0
      %v2223 = vsel %vm1967, 1, 0
      %v2224 = vsel %vm1968, 1, 0
      %v2225 = vsel %vm1969, 1, 0
      %v2226 = vsel %vm1970, 1, 0
      %v2227 = vsel %vm1971, 1, 0
      %v2228 = vsel %vm1972, 1, 0
      %v2229 = vsel %vm1973, 1, 0
      %v2230 = vsel %vm1974, 1, 0
      %v2231 = vsel %vm1975, 1, 0
      %v2232 = vsel %vm1976, 1, 0
      %v2233 = vsel %vm1977, 1, 0
      %v2234 = vsel %vm1978, 1, 0
      %v2235 = vsel %vm1979, 1, 0
      %v2236 = vsel %vm1980, 1, 0
      %v2237 = vsel %vm1981, 1, 0
      %v2238 = vsel %vm1982, 1, 0
      %v2239 = vsel %vm1983, 1, 0
      %v2240 = vsel %vm1984, 1, 0
      %v2241 = vsel %vm1985, 1, 0
      %v2242 = vsel %vm1986, 1, 0
      %v2243 = vsel %vm1987, 1, 0
      %v2244 = vsel %vm1988, 1, 0
      %v2245 = vsel %vm1989, 1, 0
      %v2246 = vsel %vm1990, 1, 0
      %v2247 = vsel %vm1991, 1, 0
      %v2248 = vsel %vm1992, 1, 0
      %v2249 = vsel %vm1993, 1, 0
      %v2250 = vsel %vm1994, 1, 0
      %v2251 = vsel %vm1995, 1, 0
      %v2252 = vsel %vm1996, 1, 0
      %v2253 = vsel %vm1997, 1, 0
      %v2254 = vsel %vm1998, 1, 0
      %v2255 = vsel %vm1999, 1, 0
      %v2256 = vsel %vm2000, 1, 0
      %v2257 = vsel %vm2001, 1, 0
      %v2258 = vsel %vm2002, 1, 0
      %v2259 = vsel %vm2003, 1, 0
      %v2260 = vsel %vm2004, 1, 0
      %v2261 = vsel %vm2005, 1, 0
      %v2262 = vsel %vm2006, 1, 0
      %v2263 = vsel %vm2007, 1, 0
      %v2264 = vsel %vm2008, 1, 0
      %v2265 = vsel %vm2009, 1, 0
      %v2266 = vsel %vm2010, 1, 0
      %v2267 = vsel %vm2011, 1, 0
      %v2268 = vsel %vm2012, 1, 0
      %v2269 = vsel %vm2013, 1, 0
      %v2270 = vsel %vm2014, 1, 0
      %v2271 = vsel %vm2015, 1, 0
      %v2272 = vsel %vm2016, 1, 0
      %v2273 = vsel %vm2017, 1, 0
      %v2274 = vsel %vm2018, 1, 0
      %v2275 = vsel %vm2019, 1, 0
      %v2276 = vsel %vm2020, 1, 0
      %v2277 = vsel %vm2021, 1, 0
      %v2278 = vsel %vm2022, 1, 0
      %v2279 = vsel %vm2023, 1, 0
      %v2280 = vsel %vm2024, 1, 0
      %v2281 = vsel %vm2025, 1, 0
      %v2282 = vsel %vm2026, 1, 0
      %v2283 = vsel %vm2027, 1, 0
      %v2284 = vsel %vm2028, 1, 0
      %v2285 = vsel %vm2029, 1, 0
      %v2286 = vsel %vm2030, 1, 0
      %v2287 = vsel %vm2031, 1, 0
      %v2288 = vsel %vm2032, 1, 0
      %v2289 = vsel %vm2033, 1, 0
      %v2290 = vsel %vm2034, 1, 0
      %v2291 = vsel %vm2035, 1, 0
      %v2292 = vsel %vm2036, 1, 0
      %v2293 = vsel %vm2037, 1, 0
      %v2294 = vsel %vm2038, 1, 0
      %v2295 = vsel %vm2039, 1, 0
      %v2296 = vcvt.s32.f32 %v2040
      %v2297 = vcvt.s32.f32 %v2041
      %v2298 = vcvt.s32.f32 %v2042
      %v2299 = vcvt.s32.f32 %v2043
      %v2300 = vcvt.s32.f32 %v2044
      %v2301 = vcvt.s32.f32 %v2045
      %v2302 = vcvt.s32.f32 %v2046
      %v2303 = vcvt.s32.f32 %v2047
      %v2304 = vcvt.s32.f32 %v2048
      %v2305 = vcvt.s32.f32 %v2049
      %v2306 = vcvt.s32.f32 %v2050
      %v2307 = vcvt.s32.f32 %v2051
      %v2308 = vcvt.s32.f32 %v2052
      %v2309 = vcvt.s32.f32 %v2053
      %v2310 = vcvt.s32.f32 %v2054
      %v2311 = vcvt.s32.f32 %v2055
      %v2312 = vcvt.s32.f32 %v2056
      %v2313 = vcvt.s32.f32 %v2057
      %v2314 = vcvt.s32.f32 %v2058
      %v2315 = vcvt.s32.f32 %v2059
      %v2316 = vcvt.s32.f32 %v2060
      %v2317 = vcvt.s32.f32 %v2061
      %v2318 = vcvt.s32.f32 %v2062
      %v2319 = vcvt.s32.f32 %v2063
      %v2320 = vcvt.s32.f32 %v2064
      %v2321 = vcvt.s32.f32 %v2065
      %v2322 = vcvt.s32.f32 %v2066
      %v2323 = vcvt.s32.f32 %v2067
      %v2324 = vcvt.s32.f32 %v2068
      %v2325 = vcvt.s32.f32 %v2069
      %v2326 = vcvt.s32.f32 %v2070
      %v2327 = vcvt.s32.f32 %v2071
      %v2328 = vcvt.s32.f32 %v2072
      %v2329 = vcvt.s32.f32 %v2073
      %v2330 = vcvt.s32.f32 %v2074
      %v2331 = vcvt.s32.f32 %v2075
      %v2332 = vcvt.s32.f32 %v2076
      %v2333 = vcvt.s32.f32 %v2077
      %v2334 = vcvt.s32.f32 %v2078
      %v2335 = vcvt.s32.f32 %v2079
      %v2336 = vcvt.s32.f32 %v2080
      %v2337 = vcvt.s32.f32 %v2081
      %v2338 = vcvt.s32.f32 %v2082
      %v2339 = vcvt.s32.f32 %v2083
      %v2340 = vcvt.s32.f32 %v2084
      %v2341 = vcvt.s32.f32 %v2085
      %v2342 = vcvt.s32.f32 %v2086
      %v2343 = vcvt.s32.f32 %v2087
      %v2344 = vcvt.s32.f32 %v2088
      %v2345 = vcvt.s32.f32 %v2089
      %v2346 = vcvt.s32.f32 %v2090
      %v2347 = vcvt.s32.f32 %v2091
      %v2348 = vcvt.s32.f32 %v2092
      %v2349 = vcvt.s32.f32 %v2093
      %v2350 = vcvt.s32.f32 %v2094
      %v2351 = vcvt.s32.f32 %v2095
      %v2352 = vcvt.s32.f32 %v2096
      %v2353 = vcvt.s32.f32 %v2097
      %v2354 = vcvt.s32.f32 %v2098
      %v2355 = vcvt.s32.f32 %v2099
      %v2356 = vcvt.s32.f32 %v2100
      %v2357 = vcvt.s32.f32 %v2101
      %v2358 = vcvt.s32.f32 %v2102
      %v2359 = vcvt.s32.f32 %v2103
      %v2360 = vcvt.s32.f32 %v2104
      %v2361 = vcvt.s32.f32 %v2105
      %v2362 = vcvt.s32.f32 %v2106
      %v2363 = vcvt.s32.f32 %v2107
      %v2364 = vcvt.s32.f32 %v2108
      %v2365 = vcvt.s32.f32 %v2109
      %v2366 = vcvt.s32.f32 %v2110
      %v2367 = vcvt.s32.f32 %v2111
      %v2368 = vcvt.s32.f32 %v2112
      %v2369 = vcvt.s32.f32 %v2113
      %v2370 = vcvt.s32.f32 %v2114
      %v2371 = vcvt.s32.f32 %v2115
      %v2372 = vcvt.s32.f32 %v2116
      %v2373 = vcvt.s32.f32 %v2117
      %v2374 = vcvt.s32.f32 %v2118
      %v2375 = vcvt.s32.f32 %v2119
      %v2376 = vcvt.s32.f32 %v2120
      %v2377 = vcvt.s32.f32 %v2121
      %v2378 = vcvt.s32.f32 %v2122
      %v2379 = vcvt.s32.f32 %v2123
      %v2380 = vcvt.s32.f32 %v2124
      %v2381 = vcvt.s32.f32 %v2125
      %v2382 = vcvt.s32.f32 %v2126
      %v2383 = vcvt.s32.f32 %v2127
      %v2384 = vcvt.s32.f32 %v2128
      %v2385 = vcvt.s32.f32 %v2129
      %v2386 = vcvt.s32.f32 %v2130
      %v2387 = vcvt.s32.f32 %v2131
      %v2388 = vcvt.s32.f32 %v2132
      %v2389 = vcvt.s32.f32 %v2133
      %v2390 = vcvt.s32.f32 %v2134
      %v2391 = vcvt.s32.f32 %v2135
      %v2392 = vcvt.s32.f32 %v2136
      %v2393 = vcvt.s32.f32 %v2137
      %v2394 = vcvt.s32.f32 %v2138
      %v2395 = vcvt.s32.f32 %v2139
      %v2396 = vcvt.s32.f32 %v2140
      %v2397 = vcvt.s32.f32 %v2141
      %v2398 = vcvt.s32.f32 %v2142
      %v2399 = vcvt.s32.f32 %v2143
      %v2400 = vcvt.s32.f32 %v2144
      %v2401 = vcvt.s32.f32 %v2145
      %v2402 = vcvt.s32.f32 %v2146
      %v2403 = vcvt.s32.f32 %v2147
      %v2404 = vcvt.s32.f32 %v2148
      %v2405 = vcvt.s32.f32 %v2149
      %v2406 = vcvt.s32.f32 %v2150
      %v2407 = vcvt.s32.f32 %v2151
      %v2408 = vcvt.s32.f32 %v2152
      %v2409 = vcvt.s32.f32 %v2153
      %v2410 = vcvt.s32.f32 %v2154
      %v2411 = vcvt.s32.f32 %v2155
      %v2412 = vcvt.s32.f32 %v2156
      %v2413 = vcvt.s32.f32 %v2157
      %v2414 = vcvt.s32.f32 %v2158
      %v2415 = vcvt.s32.f32 %v2159
      %v2416 = vcvt.s32.f32 %v2160
      %v2417 = vcvt.s32.f32 %v2161
      %v2418 = vcvt.s32.f32 %v2162
      %v2419 = vcvt.s32.f32 %v2163
      %v2420 = vcvt.s32.f32 %v2164
      %v2421 = vcvt.s32.f32 %v2165
      %v2422 = vcvt.s32.f32 %v2166
      %v2423 = vcvt.s32.f32 %v2167
      %v2424 = vcvt.s32.f32 %v2168
      %v2425 = vcvt.s32.f32 %v2169
      %v2426 = vcvt.s32.f32 %v2170
      %v2427 = vcvt.s32.f32 %v2171
      %v2428 = vcvt.s32.f32 %v2172
      %v2429 = vcvt.s32.f32 %v2173
      %v2430 = vcvt.s32.f32 %v2174
      %v2431 = vcvt.s32.f32 %v2175
      %v2432 = vcvt.s32.f32 %v2176
      %v2433 = vcvt.s32.f32 %v2177
      %v2434 = vcvt.s32.f32 %v2178
      %v2435 = vcvt.s32.f32 %v2179
      %v2436 = vcvt.s32.f32 %v2180
      %v2437 = vcvt.s32.f32 %v2181
      %v2438 = vcvt.s32.f32 %v2182
      %v2439 = vcvt.s32.f32 %v2183
      %v2440 = vcvt.s32.f32 %v2184
      %v2441 = vcvt.s32.f32 %v2185
      %v2442 = vcvt.s32.f32 %v2186
      %v2443 = vcvt.s32.f32 %v2187
      %v2444 = vcvt.s32.f32 %v2188
      %v2445 = vcvt.s32.f32 %v2189
      %v2446 = vcvt.s32.f32 %v2190
      %v2447 = vcvt.s32.f32 %v2191
      %v2448 = vcvt.s32.f32 %v2192
      %v2449 = vcvt.s32.f32 %v2193
      %v2450 = vcvt.s32.f32 %v2194
      %v2451 = vcvt.s32.f32 %v2195
      %v2452 = vcvt.s32.f32 %v2196
      %v2453 = vcvt.s32.f32 %v2197
      %v2454 = vcvt.s32.f32 %v2198
      %v2455 = vcvt.s32.f32 %v2199
      %v2456 = vcvt.s32.f32 %v2200
      %v2457 = vcvt.s32.f32 %v2201
      %v2458 = vcvt.s32.f32 %v2202
      %v2459 = vcvt.s32.f32 %v2203
      %v2460 = vcvt.s32.f32 %v2204
      %v2461 = vcvt.s32.f32 %v2205
      %v2462 = vcvt.s32.f32 %v2206
      %v2463 = vcvt.s32.f32 %v2207
      %v2464 = vcvt.s32.f32 %v2208
      %v2465 = vcvt.s32.f32 %v2209
      %v2466 = vcvt.s32.f32 %v2210
      %v2467 = vcvt.s32.f32 %v2211
      %v2468 = vcvt.s32.f32 %v2212
      %v2469 = vcvt.s32.f32 %v2213
      %v2470 = vcvt.s32.f32 %v2214
      %v2471 = vcvt.s32.f32 %v2215
      %v2472 = vcvt.s32.f32 %v2216
      %v2473 = vcvt.s32.f32 %v2217
      %v2474 = vcvt.s32.f32 %v2218
      %v2475 = vcvt.s32.f32 %v2219
      %v2476 = vcvt.s32.f32 %v2220
      %v2477 = vcvt.s32.f32 %v2221
      %v2478 = vcvt.s32.f32 %v2222
      %v2479 = vcvt.s32.f32 %v2223
      %v2480 = vcvt.s32.f32 %v2224
      %v2481 = vcvt.s32.f32 %v2225
      %v2482 = vcvt.s32.f32 %v2226
      %v2483 = vcvt.s32.f32 %v2227
      %v2484 = vcvt.s32.f32 %v2228
      %v2485 = vcvt.s32.f32 %v2229
      %v2486 = vcvt.s32.f32 %v2230
      %v2487 = vcvt.s32.f32 %v2231
      %v2488 = vcvt.s32.f32 %v2232
      %v2489 = vcvt.s32.f32 %v2233
      %v2490 = vcvt.s32.f32 %v2234
      %v2491 = vcvt.s32.f32 %v2235
      %v2492 = vcvt.s32.f32 %v2236
      %v2493 = vcvt.s32.f32 %v2237
      %v2494 = vcvt.s32.f32 %v2238
      %v2495 = vcvt.s32.f32 %v2239
      %v2496 = vcvt.s32.f32 %v2240
      %v2497 = vcvt.s32.f32 %v2241
      %v2498 = vcvt.s32.f32 %v2242
      %v2499 = vcvt.s32.f32 %v2243
      %v2500 = vcvt.s32.f32 %v2244
      %v2501 = vcvt.s32.f32 %v2245
      %v2502 = vcvt.s32.f32 %v2246
      %v2503 = vcvt.s32.f32 %v2247
      %v2504 = vcvt.s32.f32 %v2248
      %v2505 = vcvt.s32.f32 %v2249
      %v2506 = vcvt.s32.f32 %v2250
      %v2507 = vcvt.s32.f32 %v2251
      %v2508 = vcvt.s32.f32 %v2252
      %v2509 = vcvt.s32.f32 %v2253
      %v2510 = vcvt.s32.f32 %v2254
      %v2511 = vcvt.s32.f32 %v2255
      %v2512 = vcvt.s32.f32 %v2256
      %v2513 = vcvt.s32.f32 %v2257
      %v2514 = vcvt.s32.f32 %v2258
      %v2515 = vcvt.s32.f32 %v2259
      %v2516 = vcvt.s32.f32 %v2260
      %v2517 = vcvt.s32.f32 %v2261
      %v2518 = vcvt.s32.f32 %v2262
      %v2519 = vcvt.s32.f32 %v2263
      %v2520 = vcvt.s32.f32 %v2264
      %v2521 = vcvt.s32.f32 %v2265
      %v2522 = vcvt.s32.f32 %v2266
      %v2523 = vcvt.s32.f32 %v2267
      %v2524 = vcvt.s32.f32 %v2268
      %v2525 = vcvt.s32.f32 %v2269
      %v2526 = vcvt.s32.f32 %v2270
      %v2527 = vcvt.s32.f32 %v2271
      %v2528 = vcvt.s32.f32 %v2272
      %v2529 = vcvt.s32.f32 %v2273
      %v2530 = vcvt.s32.f32 %v2274
      %v2531 = vcvt.s32.f32 %v2275
      %v2532 = vcvt.s32.f32 %v2276
      %v2533 = vcvt.s32.f32 %v2277
      %v2534 = vcvt.s32.f32 %v2278
      %v2535 = vcvt.s32.f32 %v2279
      %v2536 = vcvt.s32.f32 %v2280
      %v2537 = vcvt.s32.f32 %v2281
      %v2538 = vcvt.s32.f32 %v2282
      %v2539 = vcvt.s32.f32 %v2283
      %v2540 = vcvt.s32.f32 %v2284
      %v2541 = vcvt.s32.f32 %v2285
      %v2542 = vcvt.s32.f32 %v2286
      %v2543 = vcvt.s32.f32 %v2287
      %v2544 = vcvt.s32.f32 %v2288
      %v2545 = vcvt.s32.f32 %v2289
      %v2546 = vcvt.s32.f32 %v2290
      %v2547 = vcvt.s32.f32 %v2291
      %v2548 = vcvt.s32.f32 %v2292
      %v2549 = vcvt.s32.f32 %v2293
      %v2550 = vcvt.s32.f32 %v2294
      %v2551 = vcvt.s32.f32 %v2295
      %v2552 = vpack.c.bf16 %v2304, %v2296
      %v2553 = vpack.c.bf16 %v2305, %v2297
      %v2554 = vpack.c.bf16 %v2306, %v2298
      %v2555 = vpack.c.bf16 %v2307, %v2299
      %v2556 = vpack.c.bf16 %v2308, %v2300
      %v2557 = vpack.c.bf16 %v2309, %v2301
      %v2558 = vpack.c.bf16 %v2310, %v2302
      %v2559 = vpack.c.bf16 %v2311, %v2303
      %v2560 = vpack.c.bf16 %v2320, %v2312
      %v2561 = vpack.c.bf16 %v2321, %v2313
      %v2562 = vpack.c.bf16 %v2322, %v2314
      %v2563 = vpack.c.bf16 %v2323, %v2315
      %v2564 = vpack.c.bf16 %v2324, %v2316
      %v2565 = vpack.c.bf16 %v2325, %v2317
      %v2566 = vpack.c.bf16 %v2326, %v2318
      %v2567 = vpack.c.bf16 %v2327, %v2319
      %v2568 = vpack.c.bf16 %v2336, %v2328
      %v2569 = vpack.c.bf16 %v2337, %v2329
      %v2570 = vpack.c.bf16 %v2338, %v2330
      %v2571 = vpack.c.bf16 %v2339, %v2331
      %v2572 = vpack.c.bf16 %v2340, %v2332
      %v2573 = vpack.c.bf16 %v2341, %v2333
      %v2574 = vpack.c.bf16 %v2342, %v2334
      %v2575 = vpack.c.bf16 %v2343, %v2335
      %v2576 = vpack.c.bf16 %v2352, %v2344
      %v2577 = vpack.c.bf16 %v2353, %v2345
      %v2578 = vpack.c.bf16 %v2354, %v2346
      %v2579 = vpack.c.bf16 %v2355, %v2347
      %v2580 = vpack.c.bf16 %v2356, %v2348
      %v2581 = vpack.c.bf16 %v2357, %v2349
      %v2582 = vpack.c.bf16 %v2358, %v2350
      %v2583 = vpack.c.bf16 %v2359, %v2351
      %v2584 = vpack.c.bf16 %v2368, %v2360
      %v2585 = vpack.c.bf16 %v2369, %v2361
      %v2586 = vpack.c.bf16 %v2370, %v2362
      %v2587 = vpack.c.bf16 %v2371, %v2363
      %v2588 = vpack.c.bf16 %v2372, %v2364
      %v2589 = vpack.c.bf16 %v2373, %v2365
      %v2590 = vpack.c.bf16 %v2374, %v2366
      %v2591 = vpack.c.bf16 %v2375, %v2367
      %v2592 = vpack.c.bf16 %v2384, %v2376
      %v2593 = vpack.c.bf16 %v2385, %v2377
      %v2594 = vpack.c.bf16 %v2386, %v2378
      %v2595 = vpack.c.bf16 %v2387, %v2379
      %v2596 = vpack.c.bf16 %v2388, %v2380
      %v2597 = vpack.c.bf16 %v2389, %v2381
      %v2598 = vpack.c.bf16 %v2390, %v2382
      %v2599 = vpack.c.bf16 %v2391, %v2383
      %v2600 = vpack.c.bf16 %v2400, %v2392
      %v2601 = vpack.c.bf16 %v2401, %v2393
      %v2602 = vpack.c.bf16 %v2402, %v2394
      %v2603 = vpack.c.bf16 %v2403, %v2395
      %v2604 = vpack.c.bf16 %v2404, %v2396
      %v2605 = vpack.c.bf16 %v2405, %v2397
      %v2606 = vpack.c.bf16 %v2406, %v2398
      %v2607 = vpack.c.bf16 %v2407, %v2399
      %v2608 = vpack.c.bf16 %v2416, %v2408
      %v2609 = vpack.c.bf16 %v2417, %v2409
      %v2610 = vpack.c.bf16 %v2418, %v2410
      %v2611 = vpack.c.bf16 %v2419, %v2411
      %v2612 = vpack.c.bf16 %v2420, %v2412
      %v2613 = vpack.c.bf16 %v2421, %v2413
      %v2614 = vpack.c.bf16 %v2422, %v2414
      %v2615 = vpack.c.bf16 %v2423, %v2415
      %v2616 = vpack.c.bf16 %v2432, %v2424
      %v2617 = vpack.c.bf16 %v2433, %v2425
      %v2618 = vpack.c.bf16 %v2434, %v2426
      %v2619 = vpack.c.bf16 %v2435, %v2427
      %v2620 = vpack.c.bf16 %v2436, %v2428
      %v2621 = vpack.c.bf16 %v2437, %v2429
      %v2622 = vpack.c.bf16 %v2438, %v2430
      %v2623 = vpack.c.bf16 %v2439, %v2431
      %v2624 = vpack.c.bf16 %v2448, %v2440
      %v2625 = vpack.c.bf16 %v2449, %v2441
      %v2626 = vpack.c.bf16 %v2450, %v2442
      %v2627 = vpack.c.bf16 %v2451, %v2443
      %v2628 = vpack.c.bf16 %v2452, %v2444
      %v2629 = vpack.c.bf16 %v2453, %v2445
      %v2630 = vpack.c.bf16 %v2454, %v2446
      %v2631 = vpack.c.bf16 %v2455, %v2447
      %v2632 = vpack.c.bf16 %v2464, %v2456
      %v2633 = vpack.c.bf16 %v2465, %v2457
      %v2634 = vpack.c.bf16 %v2466, %v2458
      %v2635 = vpack.c.bf16 %v2467, %v2459
      %v2636 = vpack.c.bf16 %v2468, %v2460
      %v2637 = vpack.c.bf16 %v2469, %v2461
      %v2638 = vpack.c.bf16 %v2470, %v2462
      %v2639 = vpack.c.bf16 %v2471, %v2463
      %v2640 = vpack.c.bf16 %v2480, %v2472
      %v2641 = vpack.c.bf16 %v2481, %v2473
      %v2642 = vpack.c.bf16 %v2482, %v2474
      %v2643 = vpack.c.bf16 %v2483, %v2475
      %v2644 = vpack.c.bf16 %v2484, %v2476
      %v2645 = vpack.c.bf16 %v2485, %v2477
      %v2646 = vpack.c.bf16 %v2486, %v2478
      %v2647 = vpack.c.bf16 %v2487, %v2479
      %v2648 = vpack.c.bf16 %v2496, %v2488
      %v2649 = vpack.c.bf16 %v2497, %v2489
      %v2650 = vpack.c.bf16 %v2498, %v2490
      %v2651 = vpack.c.bf16 %v2499, %v2491
      %v2652 = vpack.c.bf16 %v2500, %v2492
      %v2653 = vpack.c.bf16 %v2501, %v2493
      %v2654 = vpack.c.bf16 %v2502, %v2494
      %v2655 = vpack.c.bf16 %v2503, %v2495
      %v2656 = vpack.c.bf16 %v2512, %v2504
      %v2657 = vpack.c.bf16 %v2513, %v2505
      %v2658 = vpack.c.bf16 %v2514, %v2506
      %v2659 = vpack.c.bf16 %v2515, %v2507
      %v2660 = vpack.c.bf16 %v2516, %v2508
      %v2661 = vpack.c.bf16 %v2517, %v2509
      %v2662 = vpack.c.bf16 %v2518, %v2510
      %v2663 = vpack.c.bf16 %v2519, %v2511
      %v2664 = vpack.c.bf16 %v2528, %v2520
      %v2665 = vpack.c.bf16 %v2529, %v2521
      %v2666 = vpack.c.bf16 %v2530, %v2522
      %v2667 = vpack.c.bf16 %v2531, %v2523
      %v2668 = vpack.c.bf16 %v2532, %v2524
      %v2669 = vpack.c.bf16 %v2533, %v2525
      %v2670 = vpack.c.bf16 %v2534, %v2526
      %v2671 = vpack.c.bf16 %v2535, %v2527
      %v2672 = vpack.c.bf16 %v2544, %v2536
      %v2673 = vpack.c.bf16 %v2545, %v2537
      %v2674 = vpack.c.bf16 %v2546, %v2538
      %v2675 = vpack.c.bf16 %v2547, %v2539
      %v2676 = vpack.c.bf16 %v2548, %v2540
      %v2677 = vpack.c.bf16 %v2549, %v2541
      %v2678 = vpack.c.bf16 %v2550, %v2542
      %v2679 = vpack.c.bf16 %v2551, %v2543
      %2680 = vmatprep.subr.bf16.mxu0 %v1592
      %2681 = vmatpush1.bf16.msra.mxu0 %v1591
      %2682 = vmatprep.subr.bf16.mxu0 %v1594
      %2683 = vmatpush1.bf16.msra.mxu0 %v1593
      %2684 = vmatprep.subr.bf16.mxu0 %v1596
      %2685 = vmatpush1.bf16.msra.mxu0 %v1595
      %2686 = vmatprep.subr.bf16.mxu0 %v1598
      %2687 = vmatpush1.bf16.msra.mxu0 %v1597
      %2688 = vmatprep.subr.bf16.mxu0 %v1600
      %2689 = vmatpush1.bf16.msra.mxu0 %v1599
      %2690 = vmatprep.subr.bf16.mxu0 %v1602
      %2691 = vmatpush1.bf16.msra.mxu0 %v1601
      %2692 = vmatprep.subr.bf16.mxu0 %v1604
      %2693 = vmatpush1.bf16.msra.mxu0 %v1603
      %2694 = vmatprep.subr.bf16.mxu0 %v1606
      %2695 = vmatpush1.bf16.msra.mxu0 %v1605
      %2696 = vmatprep.subr.bf16.mxu0 %v1608
      %2697 = vmatpush1.bf16.msra.mxu0 %v1607
      %2698 = vmatprep.subr.bf16.mxu0 %v1610
      %2699 = vmatpush1.bf16.msra.mxu0 %v1609
      %2700 = vmatprep.subr.bf16.mxu0 %v1612
      %2701 = vmatpush1.bf16.msra.mxu0 %v1611
      %2702 = vmatprep.subr.bf16.mxu0 %v1614
      %2703 = vmatpush1.bf16.msra.mxu0 %v1613
      %2704 = vmatprep.subr.bf16.mxu0 %v1616
      %2705 = vmatpush1.bf16.msra.mxu0 %v1615
      %2706 = vmatprep.subr.bf16.mxu0 %v1618
      %2707 = vmatpush1.bf16.msra.mxu0 %v1617
      %2708 = vmatprep.subr.bf16.mxu0 %v1620
      %2709 = vmatpush1.bf16.msra.mxu0 %v1619
      %2710 = vmatprep.subr.bf16.mxu0 %v1622
      %2711 = vmatpush1.bf16.msra.mxu0 %v1621
      %2712 = vmatprep.mubr.bf16.mxu0 %v2553
      %2713 = vmatmul.mubr.bf16.gmra.mrb[0].mxu0 %v2552
      %v2714 = vpop.f32.mrb[0].mxu0
      %v2715 = vadd.f32 0.0, %v2714
      %v2716 = vpop.f32.mrb[0].mxu0
      %v2717 = vadd.f32 0.0, %v2716
      %v2718 = vpop.f32.mrb[0].mxu0
      %v2719 = vadd.f32 0.0, %v2718
      %v2720 = vpop.f32.mrb[0].mxu0
      %v2721 = vadd.f32 0.0, %v2720
      %2722 = vmatprep.mubr.bf16.mxu0 %v2561
      %2723 = vmatmul.mubr.bf16.gmra.mrb[0].mxu0 %v2560
      %v2724 = vpop.f32.mrb[0].mxu0
      %v2725 = vadd.f32 0.0, %v2724
      %v2726 = vpop.f32.mrb[0].mxu0
      %v2727 = vadd.f32 0.0, %v2726
      %v2728 = vpop.f32.mrb[0].mxu0
      %v2729 = vadd.f32 0.0, %v2728
      %v2730 = vpop.f32.mrb[0].mxu0
      %v2731 = vadd.f32 0.0, %v2730
      %2732 = vmatprep.mubr.bf16.mxu0 %v2569
      %2733 = vmatmul.mubr.bf16.gmra.mrb[0].mxu0 %v2568
      %v2734 = vpop.f32.mrb[0].mxu0
      %v2735 = vadd.f32 0.0, %v2734
      %v2736 = vpop.f32.mrb[0].mxu0
      %v2737 = vadd.f32 0.0, %v2736
      %v2738 = vpop.f32.mrb[0].mxu0
      %v2739 = vadd.f32 0.0, %v2738
      %v2740 = vpop.f32.mrb[0].mxu0
      %v2741 = vadd.f32 0.0, %v2740
      %2742 = vmatprep.mubr.bf16.mxu0 %v2577
      %2743 = vmatmul.mubr.bf16.gmra.mrb[0].mxu0 %v2576
      %v2744 = vpop.f32.mrb[0].mxu0
      %v2745 = vadd.f32 0.0, %v2744
      %v2746 = vpop.f32.mrb[0].mxu0
      %v2747 = vadd.f32 0.0, %v2746
      %v2748 = vpop.f32.mrb[0].mxu0
      %v2749 = vadd.f32 0.0, %v2748
      %v2750 = vpop.f32.mrb[0].mxu0
      %v2751 = vadd.f32 0.0, %v2750
      %2752 = vmatprep.mubr.bf16.mxu0 %v2585
      %2753 = vmatmul.mubr.bf16.gmra.mrb[0].mxu0 %v2584
      %v2754 = vpop.f32.mrb[0].mxu0
      %v2755 = vadd.f32 0.0, %v2754
      %v2756 = vpop.f32.mrb[0].mxu0
      %v2757 = vadd.f32 0.0, %v2756
      %v2758 = vpop.f32.mrb[0].mxu0
      %v2759 = vadd.f32 0.0, %v2758
      %v2760 = vpop.f32.mrb[0].mxu0
      %v2761 = vadd.f32 0.0, %v2760
      %2762 = vmatprep.mubr.bf16.mxu0 %v2593
      %2763 = vmatmul.mubr.bf16.gmra.mrb[0].mxu0 %v2592
      %v2764 = vpop.f32.mrb[0].mxu0
      %v2765 = vadd.f32 0.0, %v2764
      %v2766 = vpop.f32.mrb[0].mxu0
      %v2767 = vadd.f32 0.0, %v2766
      %v2768 = vpop.f32.mrb[0].mxu0
      %v2769 = vadd.f32 0.0, %v2768
      %v2770 = vpop.f32.mrb[0].mxu0
      %v2771 = vadd.f32 0.0, %v2770
      %2772 = vmatprep.mubr.bf16.mxu0 %v2601
      %2773 = vmatmul.mubr.bf16.gmra.mrb[0].mxu0 %v2600
      %v2774 = vpop.f32.mrb[0].mxu0
      %v2775 = vadd.f32 0.0, %v2774
      %v2776 = vpop.f32.mrb[0].mxu0
      %v2777 = vadd.f32 0.0, %v2776
      %v2778 = vpop.f32.mrb[0].mxu0
      %v2779 = vadd.f32 0.0, %v2778
      %v2780 = vpop.f32.mrb[0].mxu0
      %v2781 = vadd.f32 0.0, %v2780
      %2782 = vmatprep.mubr.bf16.mxu0 %v2609
      %2783 = vmatmul.mubr.bf16.gmra.mrb[0].mxu0 %v2608
      %v2784 = vpop.f32.mrb[0].mxu0
      %v2785 = vadd.f32 0.0, %v2784
      %v2786 = vpop.f32.mrb[0].mxu0
      %v2787 = vadd.f32 0.0, %v2786
      %v2788 = vpop.f32.mrb[0].mxu0
      %v2789 = vadd.f32 0.0, %v2788
      %v2790 = vpop.f32.mrb[0].mxu0
      %v2791 = vadd.f32 0.0, %v2790
      %2792 = vmatprep.mubr.bf16.mxu0 %v2617
      %2793 = vmatmul.mubr.bf16.gmra.mrb[0].mxu0 %v2616
      %v2794 = vpop.f32.mrb[0].mxu0
      %v2795 = vadd.f32 0.0, %v2794
      %v2796 = vpop.f32.mrb[0].mxu0
      %v2797 = vadd.f32 0.0, %v2796
      %v2798 = vpop.f32.mrb[0].mxu0
      %v2799 = vadd.f32 0.0, %v2798
      %v2800 = vpop.f32.mrb[0].mxu0
      %v2801 = vadd.f32 0.0, %v2800
      %2802 = vmatprep.mubr.bf16.mxu0 %v2625
      %2803 = vmatmul.mubr.bf16.gmra.mrb[0].mxu0 %v2624
      %v2804 = vpop.f32.mrb[0].mxu0
      %v2805 = vadd.f32 0.0, %v2804
      %v2806 = vpop.f32.mrb[0].mxu0
      %v2807 = vadd.f32 0.0, %v2806
      %v2808 = vpop.f32.mrb[0].mxu0
      %v2809 = vadd.f32 0.0, %v2808
      %v2810 = vpop.f32.mrb[0].mxu0
      %v2811 = vadd.f32 0.0, %v2810
      %2812 = vmatprep.mubr.bf16.mxu0 %v2633
      %2813 = vmatmul.mubr.bf16.gmra.mrb[0].mxu0 %v2632
      %v2814 = vpop.f32.mrb[0].mxu0
      %v2815 = vadd.f32 0.0, %v2814
      %v2816 = vpop.f32.mrb[0].mxu0
      %v2817 = vadd.f32 0.0, %v2816
      %v2818 = vpop.f32.mrb[0].mxu0
      %v2819 = vadd.f32 0.0, %v2818
      %v2820 = vpop.f32.mrb[0].mxu0
      %v2821 = vadd.f32 0.0, %v2820
      %2822 = vmatprep.mubr.bf16.mxu0 %v2641
      %2823 = vmatmul.mubr.bf16.gmra.mrb[0].mxu0 %v2640
      %v2824 = vpop.f32.mrb[0].mxu0
      %v2825 = vadd.f32 0.0, %v2824
      %v2826 = vpop.f32.mrb[0].mxu0
      %v2827 = vadd.f32 0.0, %v2826
      %v2828 = vpop.f32.mrb[0].mxu0
      %v2829 = vadd.f32 0.0, %v2828
      %v2830 = vpop.f32.mrb[0].mxu0
      %v2831 = vadd.f32 0.0, %v2830
      %2832 = vmatprep.mubr.bf16.mxu0 %v2649
      %2833 = vmatmul.mubr.bf16.gmra.mrb[0].mxu0 %v2648
      %v2834 = vpop.f32.mrb[0].mxu0
      %v2835 = vadd.f32 0.0, %v2834
      %v2836 = vpop.f32.mrb[0].mxu0
      %v2837 = vadd.f32 0.0, %v2836
      %v2838 = vpop.f32.mrb[0].mxu0
      %v2839 = vadd.f32 0.0, %v2838
      %v2840 = vpop.f32.mrb[0].mxu0
      %v2841 = vadd.f32 0.0, %v2840
      %2842 = vmatprep.mubr.bf16.mxu0 %v2657
      %2843 = vmatmul.mubr.bf16.gmra.mrb[0].mxu0 %v2656
      %v2844 = vpop.f32.mrb[0].mxu0
      %v2845 = vadd.f32 0.0, %v2844
      %v2846 = vpop.f32.mrb[0].mxu0
      %v2847 = vadd.f32 0.0, %v2846
      %v2848 = vpop.f32.mrb[0].mxu0
      %v2849 = vadd.f32 0.0, %v2848
      %v2850 = vpop.f32.mrb[0].mxu0
      %v2851 = vadd.f32 0.0, %v2850
      %2852 = vmatprep.mubr.bf16.mxu0 %v2665
      %2853 = vmatmul.mubr.bf16.gmra.mrb[0].mxu0 %v2664
      %v2854 = vpop.f32.mrb[0].mxu0
      %v2855 = vadd.f32 0.0, %v2854
      %v2856 = vpop.f32.mrb[0].mxu0
      %v2857 = vadd.f32 0.0, %v2856
      %v2858 = vpop.f32.mrb[0].mxu0
      %v2859 = vadd.f32 0.0, %v2858
      %v2860 = vpop.f32.mrb[0].mxu0
      %v2861 = vadd.f32 0.0, %v2860
      %2862 = vmatprep.mubr.bf16.mxu0 %v2673
      %2863 = vmatmul.mubr.bf16.gmra.mrb[0].mxu0 %v2672
      %v2864 = vpop.f32.mrb[0].mxu0
      %v2865 = vadd.f32 0.0, %v2864
      %v2866 = vpop.f32.mrb[0].mxu0
      %v2867 = vadd.f32 0.0, %v2866
      %v2868 = vpop.f32.mrb[0].mxu0
      %v2869 = vadd.f32 0.0, %v2868
      %v2870 = vpop.f32.mrb[0].mxu0
      %v2871 = vadd.f32 0.0, %v2870
      %2872 = vdwg.mxu0
      %2873 = vmatprep.subr.bf16.mxu0 %v1624
      %2874 = vmatpush1.bf16.msra.mxu0 %v1623
      %2875 = vmatprep.subr.bf16.mxu0 %v1626
      %2876 = vmatpush1.bf16.msra.mxu0 %v1625
      %2877 = vmatprep.subr.bf16.mxu0 %v1628
      %2878 = vmatpush1.bf16.msra.mxu0 %v1627
      %2879 = vmatprep.subr.bf16.mxu0 %v1630
      %2880 = vmatpush1.bf16.msra.mxu0 %v1629
      %2881 = vmatprep.subr.bf16.mxu0 %v1632
      %2882 = vmatpush1.bf16.msra.mxu0 %v1631
      %2883 = vmatprep.subr.bf16.mxu0 %v1634
      %2884 = vmatpush1.bf16.msra.mxu0 %v1633
      %2885 = vmatprep.subr.bf16.mxu0 %v1636
      %2886 = vmatpush1.bf16.msra.mxu0 %v1635
      %2887 = vmatprep.subr.bf16.mxu0 %v1638
      %2888 = vmatpush1.bf16.msra.mxu0 %v1637
      %2889 = vmatprep.subr.bf16.mxu0 %v1640
      %2890 = vmatpush1.bf16.msra.mxu0 %v1639
      %2891 = vmatprep.subr.bf16.mxu0 %v1642
      %2892 = vmatpush1.bf16.msra.mxu0 %v1641
      %2893 = vmatprep.subr.bf16.mxu0 %v1644
      %2894 = vmatpush1.bf16.msra.mxu0 %v1643
      %2895 = vmatprep.subr.bf16.mxu0 %v1646
      %2896 = vmatpush1.bf16.msra.mxu0 %v1645
      %2897 = vmatprep.subr.bf16.mxu0 %v1648
      %2898 = vmatpush1.bf16.msra.mxu0 %v1647
      %2899 = vmatprep.subr.bf16.mxu0 %v1650
      %2900 = vmatpush1.bf16.msra.mxu0 %v1649
      %2901 = vmatprep.subr.bf16.mxu0 %v1652
      %2902 = vmatpush1.bf16.msra.mxu0 %v1651
      %2903 = vmatprep.subr.bf16.mxu0 %v1654
      %2904 = vmatpush1.bf16.msra.mxu0 %v1653
      %2905 = vmatprep.mubr.bf16.mxu0 %v2555
      %2906 = vmatmul.mubr.bf16.gmra.mrb[0].mxu0 %v2554
      %v2907 = vpop.f32.mrb[0].mxu0
      %v2908 = vadd.f32 %v2715, %v2907
      %v2909 = vpop.f32.mrb[0].mxu0
      %v2910 = vadd.f32 %v2717, %v2909
      %v2911 = vpop.f32.mrb[0].mxu0
      %v2912 = vadd.f32 %v2719, %v2911
      %v2913 = vpop.f32.mrb[0].mxu0
      %v2914 = vadd.f32 %v2721, %v2913
      %2915 = vmatprep.mubr.bf16.mxu0 %v2563
      %2916 = vmatmul.mubr.bf16.gmra.mrb[0].mxu0 %v2562
      %v2917 = vpop.f32.mrb[0].mxu0
      %v2918 = vadd.f32 %v2725, %v2917
      %v2919 = vpop.f32.mrb[0].mxu0
      %v2920 = vadd.f32 %v2727, %v2919
      %v2921 = vpop.f32.mrb[0].mxu0
      %v2922 = vadd.f32 %v2729, %v2921
      %v2923 = vpop.f32.mrb[0].mxu0
      %v2924 = vadd.f32 %v2731, %v2923
      %2925 = vmatprep.mubr.bf16.mxu0 %v2571
      %2926 = vmatmul.mubr.bf16.gmra.mrb[0].mxu0 %v2570
      %v2927 = vpop.f32.mrb[0].mxu0
      %v2928 = vadd.f32 %v2735, %v2927
      %v2929 = vpop.f32.mrb[0].mxu0
      %v2930 = vadd.f32 %v2737, %v2929
      %v2931 = vpop.f32.mrb[0].mxu0
      %v2932 = vadd.f32 %v2739, %v2931
      %v2933 = vpop.f32.mrb[0].mxu0
      %v2934 = vadd.f32 %v2741, %v2933
      %2935 = vmatprep.mubr.bf16.mxu0 %v2579
      %2936 = vmatmul.mubr.bf16.gmra.mrb[0].mxu0 %v2578
      %v2937 = vpop.f32.mrb[0].mxu0
      %v2938 = vadd.f32 %v2745, %v2937
      %v2939 = vpop.f32.mrb[0].mxu0
      %v2940 = vadd.f32 %v2747, %v2939
      %v2941 = vpop.f32.mrb[0].mxu0
      %v2942 = vadd.f32 %v2749, %v2941
      %v2943 = vpop.f32.mrb[0].mxu0
      %v2944 = vadd.f32 %v2751, %v2943
      %2945 = vmatprep.mubr.bf16.mxu0 %v2587
      %2946 = vmatmul.mubr.bf16.gmra.mrb[0].mxu0 %v2586
      %v2947 = vpop.f32.mrb[0].mxu0
      %v2948 = vadd.f32 %v2755, %v2947
      %v2949 = vpop.f32.mrb[0].mxu0
      %v2950 = vadd.f32 %v2757, %v2949
      %v2951 = vpop.f32.mrb[0].mxu0
      %v2952 = vadd.f32 %v2759, %v2951
      %v2953 = vpop.f32.mrb[0].mxu0
      %v2954 = vadd.f32 %v2761, %v2953
      %2955 = vmatprep.mubr.bf16.mxu0 %v2595
      %2956 = vmatmul.mubr.bf16.gmra.mrb[0].mxu0 %v2594
      %v2957 = vpop.f32.mrb[0].mxu0
      %v2958 = vadd.f32 %v2765, %v2957
      %v2959 = vpop.f32.mrb[0].mxu0
      %v2960 = vadd.f32 %v2767, %v2959
      %v2961 = vpop.f32.mrb[0].mxu0
      %v2962 = vadd.f32 %v2769, %v2961
      %v2963 = vpop.f32.mrb[0].mxu0
      %v2964 = vadd.f32 %v2771, %v2963
      %2965 = vmatprep.mubr.bf16.mxu0 %v2603
      %2966 = vmatmul.mubr.bf16.gmra.mrb[0].mxu0 %v2602
      %v2967 = vpop.f32.mrb[0].mxu0
      %v2968 = vadd.f32 %v2775, %v2967
      %v2969 = vpop.f32.mrb[0].mxu0
      %v2970 = vadd.f32 %v2777, %v2969
      %v2971 = vpop.f32.mrb[0].mxu0
      %v2972 = vadd.f32 %v2779, %v2971
      %v2973 = vpop.f32.mrb[0].mxu0
      %v2974 = vadd.f32 %v2781, %v2973
      %2975 = vmatprep.mubr.bf16.mxu0 %v2611
      %2976 = vmatmul.mubr.bf16.gmra.mrb[0].mxu0 %v2610
      %v2977 = vpop.f32.mrb[0].mxu0
      %v2978 = vadd.f32 %v2785, %v2977
      %v2979 = vpop.f32.mrb[0].mxu0
      %v2980 = vadd.f32 %v2787, %v2979
      %v2981 = vpop.f32.mrb[0].mxu0
      %v2982 = vadd.f32 %v2789, %v2981
      %v2983 = vpop.f32.mrb[0].mxu0
      %v2984 = vadd.f32 %v2791, %v2983
      %2985 = vmatprep.mubr.bf16.mxu0 %v2619
      %2986 = vmatmul.mubr.bf16.gmra.mrb[0].mxu0 %v2618
      %v2987 = vpop.f32.mrb[0].mxu0
      %v2988 = vadd.f32 %v2795, %v2987
      %v2989 = vpop.f32.mrb[0].mxu0
      %v2990 = vadd.f32 %v2797, %v2989
      %v2991 = vpop.f32.mrb[0].mxu0
      %v2992 = vadd.f32 %v2799, %v2991
      %v2993 = vpop.f32.mrb[0].mxu0
      %v2994 = vadd.f32 %v2801, %v2993
      %2995 = vmatprep.mubr.bf16.mxu0 %v2627
      %2996 = vmatmul.mubr.bf16.gmra.mrb[0].mxu0 %v2626
      %v2997 = vpop.f32.mrb[0].mxu0
      %v2998 = vadd.f32 %v2805, %v2997
      %v2999 = vpop.f32.mrb[0].mxu0
      %v3000 = vadd.f32 %v2807, %v2999
      %v3001 = vpop.f32.mrb[0].mxu0
      %v3002 = vadd.f32 %v2809, %v3001
      %v3003 = vpop.f32.mrb[0].mxu0
      %v3004 = vadd.f32 %v2811, %v3003
      %3005 = vmatprep.mubr.bf16.mxu0 %v2635
      %3006 = vmatmul.mubr.bf16.gmra.mrb[0].mxu0 %v2634
      %v3007 = vpop.f32.mrb[0].mxu0
      %v3008 = vadd.f32 %v2815, %v3007
      %v3009 = vpop.f32.mrb[0].mxu0
      %v3010 = vadd.f32 %v2817, %v3009
      %v3011 = vpop.f32.mrb[0].mxu0
      %v3012 = vadd.f32 %v2819, %v3011
      %v3013 = vpop.f32.mrb[0].mxu0
      %v3014 = vadd.f32 %v2821, %v3013
      %3015 = vmatprep.mubr.bf16.mxu0 %v2643
      %3016 = vmatmul.mubr.bf16.gmra.mrb[0].mxu0 %v2642
      %v3017 = vpop.f32.mrb[0].mxu0
      %v3018 = vadd.f32 %v2825, %v3017
      %v3019 = vpop.f32.mrb[0].mxu0
      %v3020 = vadd.f32 %v2827, %v3019
      %v3021 = vpop.f32.mrb[0].mxu0
      %v3022 = vadd.f32 %v2829, %v3021
      %v3023 = vpop.f32.mrb[0].mxu0
      %v3024 = vadd.f32 %v2831, %v3023
      %3025 = vmatprep.mubr.bf16.mxu0 %v2651
      %3026 = vmatmul.mubr.bf16.gmra.mrb[0].mxu0 %v2650
      %v3027 = vpop.f32.mrb[0].mxu0
      %v3028 = vadd.f32 %v2835, %v3027
      %v3029 = vpop.f32.mrb[0].mxu0
      %v3030 = vadd.f32 %v2837, %v3029
      %v3031 = vpop.f32.mrb[0].mxu0
      %v3032 = vadd.f32 %v2839, %v3031
      %v3033 = vpop.f32.mrb[0].mxu0
      %v3034 = vadd.f32 %v2841, %v3033
      %3035 = vmatprep.mubr.bf16.mxu0 %v2659
      %3036 = vmatmul.mubr.bf16.gmra.mrb[0].mxu0 %v2658
      %v3037 = vpop.f32.mrb[0].mxu0
      %v3038 = vadd.f32 %v2845, %v3037
      %v3039 = vpop.f32.mrb[0].mxu0
      %v3040 = vadd.f32 %v2847, %v3039
      %v3041 = vpop.f32.mrb[0].mxu0
      %v3042 = vadd.f32 %v2849, %v3041
      %v3043 = vpop.f32.mrb[0].mxu0
      %v3044 = vadd.f32 %v2851, %v3043
      %3045 = vmatprep.mubr.bf16.mxu0 %v2667
      %3046 = vmatmul.mubr.bf16.gmra.mrb[0].mxu0 %v2666
      %v3047 = vpop.f32.mrb[0].mxu0
      %v3048 = vadd.f32 %v2855, %v3047
      %v3049 = vpop.f32.mrb[0].mxu0
      %v3050 = vadd.f32 %v2857, %v3049
      %v3051 = vpop.f32.mrb[0].mxu0
      %v3052 = vadd.f32 %v2859, %v3051
      %v3053 = vpop.f32.mrb[0].mxu0
      %v3054 = vadd.f32 %v2861, %v3053
      %3055 = vmatprep.mubr.bf16.mxu0 %v2675
      %3056 = vmatmul.mubr.bf16.gmra.mrb[0].mxu0 %v2674
      %v3057 = vpop.f32.mrb[0].mxu0
      %v3058 = vadd.f32 %v2865, %v3057
      %v3059 = vpop.f32.mrb[0].mxu0
      %v3060 = vadd.f32 %v2867, %v3059
      %v3061 = vpop.f32.mrb[0].mxu0
      %v3062 = vadd.f32 %v2869, %v3061
      %v3063 = vpop.f32.mrb[0].mxu0
      %v3064 = vadd.f32 %v2871, %v3063
      %3065 = vdwg.mxu0
      %3066 = vmatprep.subr.bf16.mxu0 %v1656
      %3067 = vmatpush1.bf16.msra.mxu0 %v1655
      %3068 = vmatprep.subr.bf16.mxu0 %v1658
      %3069 = vmatpush1.bf16.msra.mxu0 %v1657
      %3070 = vmatprep.subr.bf16.mxu0 %v1660
      %3071 = vmatpush1.bf16.msra.mxu0 %v1659
      %3072 = vmatprep.subr.bf16.mxu0 %v1662
      %3073 = vmatpush1.bf16.msra.mxu0 %v1661
      %3074 = vmatprep.subr.bf16.mxu0 %v1664
      %3075 = vmatpush1.bf16.msra.mxu0 %v1663
      %3076 = vmatprep.subr.bf16.mxu0 %v1666
      %3077 = vmatpush1.bf16.msra.mxu0 %v1665
      %3078 = vmatprep.subr.bf16.mxu0 %v1668
      %3079 = vmatpush1.bf16.msra.mxu0 %v1667
      %3080 = vmatprep.subr.bf16.mxu0 %v1670
      %3081 = vmatpush1.bf16.msra.mxu0 %v1669
      %3082 = vmatprep.subr.bf16.mxu0 %v1672
      %3083 = vmatpush1.bf16.msra.mxu0 %v1671
      %3084 = vmatprep.subr.bf16.mxu0 %v1674
      %3085 = vmatpush1.bf16.msra.mxu0 %v1673
      %3086 = vmatprep.subr.bf16.mxu0 %v1676
      %3087 = vmatpush1.bf16.msra.mxu0 %v1675
      %3088 = vmatprep.subr.bf16.mxu0 %v1678
      %3089 = vmatpush1.bf16.msra.mxu0 %v1677
      %3090 = vmatprep.subr.bf16.mxu0 %v1680
      %3091 = vmatpush1.bf16.msra.mxu0 %v1679
      %3092 = vmatprep.subr.bf16.mxu0 %v1682
      %3093 = vmatpush1.bf16.msra.mxu0 %v1681
      %3094 = vmatprep.subr.bf16.mxu0 %v1684
      %3095 = vmatpush1.bf16.msra.mxu0 %v1683
      %3096 = vmatprep.subr.bf16.mxu0 %v1686
      %3097 = vmatpush1.bf16.msra.mxu0 %v1685
      %3098 = vmatprep.mubr.bf16.mxu0 %v2557
      %3099 = vmatmul.mubr.bf16.gmra.mrb[0].mxu0 %v2556
      %v3100 = vpop.f32.mrb[0].mxu0
      %v3101 = vadd.f32 %v2908, %v3100
      %v3102 = vpop.f32.mrb[0].mxu0
      %v3103 = vadd.f32 %v2910, %v3102
      %v3104 = vpop.f32.mrb[0].mxu0
      %v3105 = vadd.f32 %v2912, %v3104
      %v3106 = vpop.f32.mrb[0].mxu0
      %v3107 = vadd.f32 %v2914, %v3106
      %3108 = vmatprep.mubr.bf16.mxu0 %v2565
      %3109 = vmatmul.mubr.bf16.gmra.mrb[0].mxu0 %v2564
      %v3110 = vpop.f32.mrb[0].mxu0
      %v3111 = vadd.f32 %v2918, %v3110
      %v3112 = vpop.f32.mrb[0].mxu0
      %v3113 = vadd.f32 %v2920, %v3112
      %v3114 = vpop.f32.mrb[0].mxu0
      %v3115 = vadd.f32 %v2922, %v3114
      %v3116 = vpop.f32.mrb[0].mxu0
      %v3117 = vadd.f32 %v2924, %v3116
      %3118 = vmatprep.mubr.bf16.mxu0 %v2573
      %3119 = vmatmul.mubr.bf16.gmra.mrb[0].mxu0 %v2572
      %v3120 = vpop.f32.mrb[0].mxu0
      %v3121 = vadd.f32 %v2928, %v3120
      %v3122 = vpop.f32.mrb[0].mxu0
      %v3123 = vadd.f32 %v2930, %v3122
      %v3124 = vpop.f32.mrb[0].mxu0
      %v3125 = vadd.f32 %v2932, %v3124
      %v3126 = vpop.f32.mrb[0].mxu0
      %v3127 = vadd.f32 %v2934, %v3126
      %3128 = vmatprep.mubr.bf16.mxu0 %v2581
      %3129 = vmatmul.mubr.bf16.gmra.mrb[0].mxu0 %v2580
      %v3130 = vpop.f32.mrb[0].mxu0
      %v3131 = vadd.f32 %v2938, %v3130
      %v3132 = vpop.f32.mrb[0].mxu0
      %v3133 = vadd.f32 %v2940, %v3132
      %v3134 = vpop.f32.mrb[0].mxu0
      %v3135 = vadd.f32 %v2942, %v3134
      %v3136 = vpop.f32.mrb[0].mxu0
      %v3137 = vadd.f32 %v2944, %v3136
      %3138 = vmatprep.mubr.bf16.mxu0 %v2589
      %3139 = vmatmul.mubr.bf16.gmra.mrb[0].mxu0 %v2588
      %v3140 = vpop.f32.mrb[0].mxu0
      %v3141 = vadd.f32 %v2948, %v3140
      %v3142 = vpop.f32.mrb[0].mxu0
      %v3143 = vadd.f32 %v2950, %v3142
      %v3144 = vpop.f32.mrb[0].mxu0
      %v3145 = vadd.f32 %v2952, %v3144
      %v3146 = vpop.f32.mrb[0].mxu0
      %v3147 = vadd.f32 %v2954, %v3146
      %3148 = vmatprep.mubr.bf16.mxu0 %v2597
      %3149 = vmatmul.mubr.bf16.gmra.mrb[0].mxu0 %v2596
      %v3150 = vpop.f32.mrb[0].mxu0
      %v3151 = vadd.f32 %v2958, %v3150
      %v3152 = vpop.f32.mrb[0].mxu0
      %v3153 = vadd.f32 %v2960, %v3152
      %v3154 = vpop.f32.mrb[0].mxu0
      %v3155 = vadd.f32 %v2962, %v3154
      %v3156 = vpop.f32.mrb[0].mxu0
      %v3157 = vadd.f32 %v2964, %v3156
      %3158 = vmatprep.mubr.bf16.mxu0 %v2605
      %3159 = vmatmul.mubr.bf16.gmra.mrb[0].mxu0 %v2604
      %v3160 = vpop.f32.mrb[0].mxu0
      %v3161 = vadd.f32 %v2968, %v3160
      %v3162 = vpop.f32.mrb[0].mxu0
      %v3163 = vadd.f32 %v2970, %v3162
      %v3164 = vpop.f32.mrb[0].mxu0
      %v3165 = vadd.f32 %v2972, %v3164
      %v3166 = vpop.f32.mrb[0].mxu0
      %v3167 = vadd.f32 %v2974, %v3166
      %3168 = vmatprep.mubr.bf16.mxu0 %v2613
      %3169 = vmatmul.mubr.bf16.gmra.mrb[0].mxu0 %v2612
      %v3170 = vpop.f32.mrb[0].mxu0
      %v3171 = vadd.f32 %v2978, %v3170
      %v3172 = vpop.f32.mrb[0].mxu0
      %v3173 = vadd.f32 %v2980, %v3172
      %v3174 = vpop.f32.mrb[0].mxu0
      %v3175 = vadd.f32 %v2982, %v3174
      %v3176 = vpop.f32.mrb[0].mxu0
      %v3177 = vadd.f32 %v2984, %v3176
      %3178 = vmatprep.mubr.bf16.mxu0 %v2621
      %3179 = vmatmul.mubr.bf16.gmra.mrb[0].mxu0 %v2620
      %v3180 = vpop.f32.mrb[0].mxu0
      %v3181 = vadd.f32 %v2988, %v3180
      %v3182 = vpop.f32.mrb[0].mxu0
      %v3183 = vadd.f32 %v2990, %v3182
      %v3184 = vpop.f32.mrb[0].mxu0
      %v3185 = vadd.f32 %v2992, %v3184
      %v3186 = vpop.f32.mrb[0].mxu0
      %v3187 = vadd.f32 %v2994, %v3186
      %3188 = vmatprep.mubr.bf16.mxu0 %v2629
      %3189 = vmatmul.mubr.bf16.gmra.mrb[0].mxu0 %v2628
      %v3190 = vpop.f32.mrb[0].mxu0
      %v3191 = vadd.f32 %v2998, %v3190
      %v3192 = vpop.f32.mrb[0].mxu0
      %v3193 = vadd.f32 %v3000, %v3192
      %v3194 = vpop.f32.mrb[0].mxu0
      %v3195 = vadd.f32 %v3002, %v3194
      %v3196 = vpop.f32.mrb[0].mxu0
      %v3197 = vadd.f32 %v3004, %v3196
      %3198 = vmatprep.mubr.bf16.mxu0 %v2637
      %3199 = vmatmul.mubr.bf16.gmra.mrb[0].mxu0 %v2636
      %v3200 = vpop.f32.mrb[0].mxu0
      %v3201 = vadd.f32 %v3008, %v3200
      %v3202 = vpop.f32.mrb[0].mxu0
      %v3203 = vadd.f32 %v3010, %v3202
      %v3204 = vpop.f32.mrb[0].mxu0
      %v3205 = vadd.f32 %v3012, %v3204
      %v3206 = vpop.f32.mrb[0].mxu0
      %v3207 = vadd.f32 %v3014, %v3206
      %3208 = vmatprep.mubr.bf16.mxu0 %v2645
      %3209 = vmatmul.mubr.bf16.gmra.mrb[0].mxu0 %v2644
      %v3210 = vpop.f32.mrb[0].mxu0
      %v3211 = vadd.f32 %v3018, %v3210
      %v3212 = vpop.f32.mrb[0].mxu0
      %v3213 = vadd.f32 %v3020, %v3212
      %v3214 = vpop.f32.mrb[0].mxu0
      %v3215 = vadd.f32 %v3022, %v3214
      %v3216 = vpop.f32.mrb[0].mxu0
      %v3217 = vadd.f32 %v3024, %v3216
      %3218 = vmatprep.mubr.bf16.mxu0 %v2653
      %3219 = vmatmul.mubr.bf16.gmra.mrb[0].mxu0 %v2652
      %v3220 = vpop.f32.mrb[0].mxu0
      %v3221 = vadd.f32 %v3028, %v3220
      %v3222 = vpop.f32.mrb[0].mxu0
      %v3223 = vadd.f32 %v3030, %v3222
      %v3224 = vpop.f32.mrb[0].mxu0
      %v3225 = vadd.f32 %v3032, %v3224
      %v3226 = vpop.f32.mrb[0].mxu0
      %v3227 = vadd.f32 %v3034, %v3226
      %3228 = vmatprep.mubr.bf16.mxu0 %v2661
      %3229 = vmatmul.mubr.bf16.gmra.mrb[0].mxu0 %v2660
      %v3230 = vpop.f32.mrb[0].mxu0
      %v3231 = vadd.f32 %v3038, %v3230
      %v3232 = vpop.f32.mrb[0].mxu0
      %v3233 = vadd.f32 %v3040, %v3232
      %v3234 = vpop.f32.mrb[0].mxu0
      %v3235 = vadd.f32 %v3042, %v3234
      %v3236 = vpop.f32.mrb[0].mxu0
      %v3237 = vadd.f32 %v3044, %v3236
      %3238 = vmatprep.mubr.bf16.mxu0 %v2669
      %3239 = vmatmul.mubr.bf16.gmra.mrb[0].mxu0 %v2668
      %v3240 = vpop.f32.mrb[0].mxu0
      %v3241 = vadd.f32 %v3048, %v3240
      %v3242 = vpop.f32.mrb[0].mxu0
      %v3243 = vadd.f32 %v3050, %v3242
      %v3244 = vpop.f32.mrb[0].mxu0
      %v3245 = vadd.f32 %v3052, %v3244
      %v3246 = vpop.f32.mrb[0].mxu0
      %v3247 = vadd.f32 %v3054, %v3246
      %3248 = vmatprep.mubr.bf16.mxu0 %v2677
      %3249 = vmatmul.mubr.bf16.gmra.mrb[0].mxu0 %v2676
      %v3250 = vpop.f32.mrb[0].mxu0
      %v3251 = vadd.f32 %v3058, %v3250
      %v3252 = vpop.f32.mrb[0].mxu0
      %v3253 = vadd.f32 %v3060, %v3252
      %v3254 = vpop.f32.mrb[0].mxu0
      %v3255 = vadd.f32 %v3062, %v3254
      %v3256 = vpop.f32.mrb[0].mxu0
      %v3257 = vadd.f32 %v3064, %v3256
      %3258 = vdwg.mxu0
      %3259 = vmatprep.subr.bf16.mxu0 %v1688
      %3260 = vmatpush1.bf16.msra.mxu0 %v1687
      %3261 = vmatprep.subr.bf16.mxu0 %v1690
      %3262 = vmatpush1.bf16.msra.mxu0 %v1689
      %3263 = vmatprep.subr.bf16.mxu0 %v1692
      %3264 = vmatpush1.bf16.msra.mxu0 %v1691
      %3265 = vmatprep.subr.bf16.mxu0 %v1694
      %3266 = vmatpush1.bf16.msra.mxu0 %v1693
      %3267 = vmatprep.subr.bf16.mxu0 %v1696
      %3268 = vmatpush1.bf16.msra.mxu0 %v1695
      %3269 = vmatprep.subr.bf16.mxu0 %v1698
      %3270 = vmatpush1.bf16.msra.mxu0 %v1697
      %3271 = vmatprep.subr.bf16.mxu0 %v1700
      %3272 = vmatpush1.bf16.msra.mxu0 %v1699
      %3273 = vmatprep.subr.bf16.mxu0 %v1702
      %3274 = vmatpush1.bf16.msra.mxu0 %v1701
      %3275 = vmatprep.subr.bf16.mxu0 %v1704
      %3276 = vmatpush1.bf16.msra.mxu0 %v1703
      %3277 = vmatprep.subr.bf16.mxu0 %v1706
      %3278 = vmatpush1.bf16.msra.mxu0 %v1705
      %3279 = vmatprep.subr.bf16.mxu0 %v1708
      %3280 = vmatpush1.bf16.msra.mxu0 %v1707
      %3281 = vmatprep.subr.bf16.mxu0 %v1710
      %3282 = vmatpush1.bf16.msra.mxu0 %v1709
      %3283 = vmatprep.subr.bf16.mxu0 %v1712
      %3284 = vmatpush1.bf16.msra.mxu0 %v1711
      %3285 = vmatprep.subr.bf16.mxu0 %v1714
      %3286 = vmatpush1.bf16.msra.mxu0 %v1713
      %3287 = vmatprep.subr.bf16.mxu0 %v1716
      %3288 = vmatpush1.bf16.msra.mxu0 %v1715
      %3289 = vmatprep.subr.bf16.mxu0 %v1718
      %3290 = vmatpush1.bf16.msra.mxu0 %v1717
      %3291 = vmatprep.mubr.bf16.mxu0 %v2559
      %3292 = vmatmul.mubr.bf16.gmra.mrb[0].mxu0 %v2558
      %v3293 = vpop.f32.mrb[0].mxu0
      %v3294 = vadd.f32 %v3101, %v3293
      %v3295 = vpop.f32.mrb[0].mxu0
      %v3296 = vadd.f32 %v3103, %v3295
      %v3297 = vpop.f32.mrb[0].mxu0
      %v3298 = vadd.f32 %v3105, %v3297
      %v3299 = vpop.f32.mrb[0].mxu0
      %v3300 = vadd.f32 %v3107, %v3299
      %3301 = vmatprep.mubr.bf16.mxu0 %v2567
      %3302 = vmatmul.mubr.bf16.gmra.mrb[0].mxu0 %v2566
      %v3303 = vpop.f32.mrb[0].mxu0
      %v3304 = vadd.f32 %v3111, %v3303
      %v3305 = vpop.f32.mrb[0].mxu0
      %v3306 = vadd.f32 %v3113, %v3305
      %v3307 = vpop.f32.mrb[0].mxu0
      %v3308 = vadd.f32 %v3115, %v3307
      %v3309 = vpop.f32.mrb[0].mxu0
      %v3310 = vadd.f32 %v3117, %v3309
      %3311 = vmatprep.mubr.bf16.mxu0 %v2575
      %3312 = vmatmul.mubr.bf16.gmra.mrb[0].mxu0 %v2574
      %v3313 = vpop.f32.mrb[0].mxu0
      %v3314 = vadd.f32 %v3121, %v3313
      %v3315 = vpop.f32.mrb[0].mxu0
      %v3316 = vadd.f32 %v3123, %v3315
      %v3317 = vpop.f32.mrb[0].mxu0
      %v3318 = vadd.f32 %v3125, %v3317
      %v3319 = vpop.f32.mrb[0].mxu0
      %v3320 = vadd.f32 %v3127, %v3319
      %3321 = vmatprep.mubr.bf16.mxu0 %v2583
      %3322 = vmatmul.mubr.bf16.gmra.mrb[0].mxu0 %v2582
      %v3323 = vpop.f32.mrb[0].mxu0
      %v3324 = vadd.f32 %v3131, %v3323
      %v3325 = vpop.f32.mrb[0].mxu0
      %v3326 = vadd.f32 %v3133, %v3325
      %v3327 = vpop.f32.mrb[0].mxu0
      %v3328 = vadd.f32 %v3135, %v3327
      %v3329 = vpop.f32.mrb[0].mxu0
      %v3330 = vadd.f32 %v3137, %v3329
      %3331 = vmatprep.mubr.bf16.mxu0 %v2591
      %3332 = vmatmul.mubr.bf16.gmra.mrb[0].mxu0 %v2590
      %v3333 = vpop.f32.mrb[0].mxu0
      %v3334 = vadd.f32 %v3141, %v3333
      %v3335 = vpop.f32.mrb[0].mxu0
      %v3336 = vadd.f32 %v3143, %v3335
      %v3337 = vpop.f32.mrb[0].mxu0
      %v3338 = vadd.f32 %v3145, %v3337
      %v3339 = vpop.f32.mrb[0].mxu0
      %v3340 = vadd.f32 %v3147, %v3339
      %3341 = vmatprep.mubr.bf16.mxu0 %v2599
      %3342 = vmatmul.mubr.bf16.gmra.mrb[0].mxu0 %v2598
      %v3343 = vpop.f32.mrb[0].mxu0
      %v3344 = vadd.f32 %v3151, %v3343
      %v3345 = vpop.f32.mrb[0].mxu0
      %v3346 = vadd.f32 %v3153, %v3345
      %v3347 = vpop.f32.mrb[0].mxu0
      %v3348 = vadd.f32 %v3155, %v3347
      %v3349 = vpop.f32.mrb[0].mxu0
      %v3350 = vadd.f32 %v3157, %v3349
      %3351 = vmatprep.mubr.bf16.mxu0 %v2607
      %3352 = vmatmul.mubr.bf16.gmra.mrb[0].mxu0 %v2606
      %v3353 = vpop.f32.mrb[0].mxu0
      %v3354 = vadd.f32 %v3161, %v3353
      %v3355 = vpop.f32.mrb[0].mxu0
      %v3356 = vadd.f32 %v3163, %v3355
      %v3357 = vpop.f32.mrb[0].mxu0
      %v3358 = vadd.f32 %v3165, %v3357
      %v3359 = vpop.f32.mrb[0].mxu0
      %v3360 = vadd.f32 %v3167, %v3359
      %3361 = vmatprep.mubr.bf16.mxu0 %v2615
      %3362 = vmatmul.mubr.bf16.gmra.mrb[0].mxu0 %v2614
      %v3363 = vpop.f32.mrb[0].mxu0
      %v3364 = vadd.f32 %v3171, %v3363
      %v3365 = vpop.f32.mrb[0].mxu0
      %v3366 = vadd.f32 %v3173, %v3365
      %v3367 = vpop.f32.mrb[0].mxu0
      %v3368 = vadd.f32 %v3175, %v3367
      %v3369 = vpop.f32.mrb[0].mxu0
      %v3370 = vadd.f32 %v3177, %v3369
      %3371 = vmatprep.mubr.bf16.mxu0 %v2623
      %3372 = vmatmul.mubr.bf16.gmra.mrb[0].mxu0 %v2622
      %v3373 = vpop.f32.mrb[0].mxu0
      %v3374 = vadd.f32 %v3181, %v3373
      %v3375 = vpop.f32.mrb[0].mxu0
      %v3376 = vadd.f32 %v3183, %v3375
      %v3377 = vpop.f32.mrb[0].mxu0
      %v3378 = vadd.f32 %v3185, %v3377
      %v3379 = vpop.f32.mrb[0].mxu0
      %v3380 = vadd.f32 %v3187, %v3379
      %3381 = vmatprep.mubr.bf16.mxu0 %v2631
      %3382 = vmatmul.mubr.bf16.gmra.mrb[0].mxu0 %v2630
      %v3383 = vpop.f32.mrb[0].mxu0
      %v3384 = vadd.f32 %v3191, %v3383
      %v3385 = vpop.f32.mrb[0].mxu0
      %v3386 = vadd.f32 %v3193, %v3385
      %v3387 = vpop.f32.mrb[0].mxu0
      %v3388 = vadd.f32 %v3195, %v3387
      %v3389 = vpop.f32.mrb[0].mxu0
      %v3390 = vadd.f32 %v3197, %v3389
      %3391 = vmatprep.mubr.bf16.mxu0 %v2639
      %3392 = vmatmul.mubr.bf16.gmra.mrb[0].mxu0 %v2638
      %v3393 = vpop.f32.mrb[0].mxu0
      %v3394 = vadd.f32 %v3201, %v3393
      %v3395 = vpop.f32.mrb[0].mxu0
      %v3396 = vadd.f32 %v3203, %v3395
      %v3397 = vpop.f32.mrb[0].mxu0
      %v3398 = vadd.f32 %v3205, %v3397
      %v3399 = vpop.f32.mrb[0].mxu0
      %v3400 = vadd.f32 %v3207, %v3399
      %3401 = vmatprep.mubr.bf16.mxu0 %v2647
      %3402 = vmatmul.mubr.bf16.gmra.mrb[0].mxu0 %v2646
      %v3403 = vpop.f32.mrb[0].mxu0
      %v3404 = vadd.f32 %v3211, %v3403
      %v3405 = vpop.f32.mrb[0].mxu0
      %v3406 = vadd.f32 %v3213, %v3405
      %v3407 = vpop.f32.mrb[0].mxu0
      %v3408 = vadd.f32 %v3215, %v3407
      %v3409 = vpop.f32.mrb[0].mxu0
      %v3410 = vadd.f32 %v3217, %v3409
      %3411 = vmatprep.mubr.bf16.mxu0 %v2655
      %3412 = vmatmul.mubr.bf16.gmra.mrb[0].mxu0 %v2654
      %v3413 = vpop.f32.mrb[0].mxu0
      %v3414 = vadd.f32 %v3221, %v3413
      %v3415 = vpop.f32.mrb[0].mxu0
      %v3416 = vadd.f32 %v3223, %v3415
      %v3417 = vpop.f32.mrb[0].mxu0
      %v3418 = vadd.f32 %v3225, %v3417
      %v3419 = vpop.f32.mrb[0].mxu0
      %v3420 = vadd.f32 %v3227, %v3419
      %3421 = vmatprep.mubr.bf16.mxu0 %v2663
      %3422 = vmatmul.mubr.bf16.gmra.mrb[0].mxu0 %v2662
      %v3423 = vpop.f32.mrb[0].mxu0
      %v3424 = vadd.f32 %v3231, %v3423
      %v3425 = vpop.f32.mrb[0].mxu0
      %v3426 = vadd.f32 %v3233, %v3425
      %v3427 = vpop.f32.mrb[0].mxu0
      %v3428 = vadd.f32 %v3235, %v3427
      %v3429 = vpop.f32.mrb[0].mxu0
      %v3430 = vadd.f32 %v3237, %v3429
      %3431 = vmatprep.mubr.bf16.mxu0 %v2671
      %3432 = vmatmul.mubr.bf16.gmra.mrb[0].mxu0 %v2670
      %v3433 = vpop.f32.mrb[0].mxu0
      %v3434 = vadd.f32 %v3241, %v3433
      %v3435 = vpop.f32.mrb[0].mxu0
      %v3436 = vadd.f32 %v3243, %v3435
      %v3437 = vpop.f32.mrb[0].mxu0
      %v3438 = vadd.f32 %v3245, %v3437
      %v3439 = vpop.f32.mrb[0].mxu0
      %v3440 = vadd.f32 %v3247, %v3439
      %3441 = vmatprep.mubr.bf16.mxu0 %v2679
      %3442 = vmatmul.mubr.bf16.gmra.mrb[0].mxu0 %v2678
      %v3443 = vpop.f32.mrb[0].mxu0
      %v3444 = vadd.f32 %v3251, %v3443
      %v3445 = vpop.f32.mrb[0].mxu0
      %v3446 = vadd.f32 %v3253, %v3445
      %v3447 = vpop.f32.mrb[0].mxu0
      %v3448 = vadd.f32 %v3255, %v3447
      %v3449 = vpop.f32.mrb[0].mxu0
      %v3450 = vadd.f32 %v3257, %v3449
      %3451 = vdwg.mxu0
      %v3452 = vpack.c.bf16 %v3298, %v3294
      %v3453 = vpack.c.bf16 %v3300, %v3296
      %v3454 = vpack.c.bf16 %v3308, %v3304
      %v3455 = vpack.c.bf16 %v3310, %v3306
      %v3456 = vpack.c.bf16 %v3318, %v3314
      %v3457 = vpack.c.bf16 %v3320, %v3316
      %v3458 = vpack.c.bf16 %v3328, %v3324
      %v3459 = vpack.c.bf16 %v3330, %v3326
      %v3460 = vpack.c.bf16 %v3338, %v3334
      %v3461 = vpack.c.bf16 %v3340, %v3336
      %v3462 = vpack.c.bf16 %v3348, %v3344
      %v3463 = vpack.c.bf16 %v3350, %v3346
      %v3464 = vpack.c.bf16 %v3358, %v3354
      %v3465 = vpack.c.bf16 %v3360, %v3356
      %v3466 = vpack.c.bf16 %v3368, %v3364
      %v3467 = vpack.c.bf16 %v3370, %v3366
      %v3468 = vpack.c.bf16 %v3378, %v3374
      %v3469 = vpack.c.bf16 %v3380, %v3376
      %v3470 = vpack.c.bf16 %v3388, %v3384
      %v3471 = vpack.c.bf16 %v3390, %v3386
      %v3472 = vpack.c.bf16 %v3398, %v3394
      %v3473 = vpack.c.bf16 %v3400, %v3396
      %v3474 = vpack.c.bf16 %v3408, %v3404
      %v3475 = vpack.c.bf16 %v3410, %v3406
      %v3476 = vpack.c.bf16 %v3418, %v3414
      %v3477 = vpack.c.bf16 %v3420, %v3416
      %v3478 = vpack.c.bf16 %v3428, %v3424
      %v3479 = vpack.c.bf16 %v3430, %v3426
      %v3480 = vpack.c.bf16 %v3438, %v3434
      %v3481 = vpack.c.bf16 %v3440, %v3436
      %v3482 = vpack.c.bf16 %v3448, %v3444
      %v3483 = vpack.c.bf16 %v3450, %v3446
      %v3484 = vld [vmem:[%s283] sm:$0xff]
      %v3485 = vld [vmem:[%s283 + $0x8] sm:$0xff]
      %v3486 = vld [vmem:[%s283 + $0x10] sm:$0xff]
      %v3487 = vld [vmem:[%s283 + $0x18] sm:$0xff]
      %v3488 = vld [vmem:[%s283 + $0x20] sm:$0xff]
      %v3489 = vld [vmem:[%s283 + $0x28] sm:$0xff]
      %v3490 = vld [vmem:[%s283 + $0x30] sm:$0xff]
      %v3491 = vld [vmem:[%s283 + $0x38] sm:$0xff]
      %v3492 = vld [vmem:[%s283 + $0x40] sm:$0xff]
      %v3493 = vld [vmem:[%s283 + $0x48] sm:$0xff]
      %v3494 = vld [vmem:[%s283 + $0x50] sm:$0xff]
      %v3495 = vld [vmem:[%s283 + $0x58] sm:$0xff]
      %v3496 = vld [vmem:[%s283 + $0x60] sm:$0xff]
      %v3497 = vld [vmem:[%s283 + $0x68] sm:$0xff]
      %v3498 = vld [vmem:[%s283 + $0x70] sm:$0xff]
      %v3499 = vld [vmem:[%s283 + $0x78] sm:$0xff]
      %v3500 = vld [vmem:[%s283 + $0x80] sm:$0xff]
      %v3501 = vld [vmem:[%s283 + $0x88] sm:$0xff]
      %v3502 = vld [vmem:[%s283 + $0x90] sm:$0xff]
      %v3503 = vld [vmem:[%s283 + $0x98] sm:$0xff]
      %v3504 = vld [vmem:[%s283 + $0xa0] sm:$0xff]
      %v3505 = vld [vmem:[%s283 + $0xa8] sm:$0xff]
      %v3506 = vld [vmem:[%s283 + $0xb0] sm:$0xff]
      %v3507 = vld [vmem:[%s283 + $0xb8] sm:$0xff]
      %v3508 = vld [vmem:[%s283 + $0xc0] sm:$0xff]
      %v3509 = vld [vmem:[%s283 + $0xc8] sm:$0xff]
      %v3510 = vld [vmem:[%s283 + $0xd0] sm:$0xff]
      %v3511 = vld [vmem:[%s283 + $0xd8] sm:$0xff]
      %v3512 = vld [vmem:[%s283 + $0xe0] sm:$0xff]
      %v3513 = vld [vmem:[%s283 + $0xe8] sm:$0xff]
      %v3514 = vld [vmem:[%s283 + $0xf0] sm:$0xff]
      %v3515 = vld [vmem:[%s283 + $0xf8] sm:$0xff]
      %v3516 = vpack.c.bf16 %v3485, %v3484
      %v3517 = vpack.c.bf16 %v3487, %v3486
      %v3518 = vpack.c.bf16 %v3489, %v3488
      %v3519 = vpack.c.bf16 %v3491, %v3490
      %v3520 = vpack.c.bf16 %v3493, %v3492
      %v3521 = vpack.c.bf16 %v3495, %v3494
      %v3522 = vpack.c.bf16 %v3497, %v3496
      %v3523 = vpack.c.bf16 %v3499, %v3498
      %v3524 = vpack.c.bf16 %v3501, %v3500
      %v3525 = vpack.c.bf16 %v3503, %v3502
      %v3526 = vpack.c.bf16 %v3505, %v3504
      %v3527 = vpack.c.bf16 %v3507, %v3506
      %v3528 = vpack.c.bf16 %v3509, %v3508
      %v3529 = vpack.c.bf16 %v3511, %v3510
      %v3530 = vpack.c.bf16 %v3513, %v3512
      %v3531 = vpack.c.bf16 %v3515, %v3514
      %v3532 = vld [vmem:[%s4] sm:$0x1]
      %v3533 = vld [vmem:[%s3] sm:$0xf]
      %v3534 = vld [vmem:[%s3 + $0x4] sm:$0xf]
      %v3535 = vld [vmem:[%s3 + $0x8] sm:$0xf]
      %v3536 = vld [vmem:[%s3 + $0xc] sm:$0xf]
      %v3537 = vld [vmem:[%s3 + $0x10] sm:$0xf]
      %v3538 = vld [vmem:[%s3 + $0x14] sm:$0xf]
      %v3539 = vld [vmem:[%s3 + $0x18] sm:$0xf]
      %v3540 = vld [vmem:[%s3 + $0x1c] sm:$0xf]
      %v3541 = vld [vmem:[%s3 + $0x20] sm:$0xf]
      %v3542 = vld [vmem:[%s3 + $0x24] sm:$0xf]
      %v3543 = vld [vmem:[%s3 + $0x28] sm:$0xf]
      %v3544 = vld [vmem:[%s3 + $0x2c] sm:$0xf]
      %v3545 = vld [vmem:[%s3 + $0x30] sm:$0xf]
      %v3546 = vld [vmem:[%s3 + $0x34] sm:$0xf]
      %v3547 = vld [vmem:[%s3 + $0x38] sm:$0xf]
      %v3548 = vld [vmem:[%s3 + $0x3c] sm:$0xf]
      %v3549 = vlaneseq
      %v3550 = vshrl.u32 %v3549, 7
      %v3551 = vsub.s32 0, %v3550
      %v3552 = vrot.slane %v3532, %v3551
      %v3569 = vunpack.c.l.b16 %v3533
      %v3570 = vunpack.c.l.b16 %v3534
      %v3571 = vunpack.c.l.b16 %v3535
      %v3572 = vunpack.c.l.b16 %v3536
      %v3573 = vunpack.c.l.b16 %v3537
      %v3574 = vunpack.c.l.b16 %v3538
      %v3575 = vunpack.c.l.b16 %v3539
      %v3576 = vunpack.c.l.b16 %v3540
      %v3577 = vunpack.c.l.b16 %v3541
      %v3578 = vunpack.c.l.b16 %v3542
      %v3579 = vunpack.c.l.b16 %v3543
      %v3580 = vunpack.c.l.b16 %v3544
      %v3581 = vunpack.c.l.b16 %v3545
      %v3582 = vunpack.c.l.b16 %v3546
      %v3583 = vunpack.c.l.b16 %v3547
      %v3584 = vunpack.c.l.b16 %v3548
      %v3585 = vpack.c.b16 %v3570, %v3569
      %v3586 = vpack.c.b16 %v3572, %v3571
      %v3587 = vpack.c.b16 %v3574, %v3573
      %v3588 = vpack.c.b16 %v3576, %v3575
      %v3589 = vpack.c.b16 %v3578, %v3577
      %v3590 = vpack.c.b16 %v3580, %v3579
      %v3591 = vpack.c.b16 %v3582, %v3581
      %v3592 = vpack.c.b16 %v3584, %v3583
      %3601 = vmatprep.subr.bf16.mxu0 0
      %3602 = vmatpush1.bf16.msra.mxu0 %v3585
      %3603 = vmatprep.subr.bf16.mxu0 0
      %3604 = vmatpush1.bf16.msra.mxu0 %v3586
      %3605 = vmatprep.subr.bf16.mxu0 0
      %3606 = vmatpush1.bf16.msra.mxu0 %v3587
      %3607 = vmatprep.subr.bf16.mxu0 0
      %3608 = vmatpush1.bf16.msra.mxu0 %v3588
      %3609 = vmatprep.subr.bf16.mxu0 0
      %3610 = vmatpush1.bf16.msra.mxu0 %v3589
      %3611 = vmatprep.subr.bf16.mxu0 0
      %3612 = vmatpush1.bf16.msra.mxu0 %v3590
      %3613 = vmatprep.subr.bf16.mxu0 0
      %3614 = vmatpush1.bf16.msra.mxu0 %v3591
      %3615 = vmatprep.subr.bf16.mxu0 0
      %3616 = vmatpush1.bf16.msra.mxu0 %v3592
      %3617 = vmatprep.subr.bf16.mxu0 0
      %3618 = vmatpush1.bf16.msra.mxu0 0
      %3619 = vmatprep.subr.bf16.mxu0 0
      %3620 = vmatpush1.bf16.msra.mxu0 0
      %3621 = vmatprep.subr.bf16.mxu0 0
      %3622 = vmatpush1.bf16.msra.mxu0 0
      %3623 = vmatprep.subr.bf16.mxu0 0
      %3624 = vmatpush1.bf16.msra.mxu0 0
      %3625 = vmatprep.subr.bf16.mxu0 0
      %3626 = vmatpush1.bf16.msra.mxu0 0
      %3627 = vmatprep.subr.bf16.mxu0 0
      %3628 = vmatpush1.bf16.msra.mxu0 0
      %3629 = vmatprep.subr.bf16.mxu0 0
      %3630 = vmatpush1.bf16.msra.mxu0 0
      %3631 = vmatprep.subr.bf16.mxu0 0
      %3632 = vmatpush1.bf16.msra.mxu0 0
      %3633 = vmatprep.mubr.bf16.mxu0 0
      %3634 = vmatmul.mubr.bf16.gmra.mrb[0].mxu0 %v3516
      %v3635 = vpop.f32.mrb[0].mxu0
      %v3636 = vadd.f32 %v3552, %v3635
      %v3637 = vpop.f32.mrb[0].mxu0
      %v3638 = vpop.f32.mrb[0].mxu0
      %v3639 = vadd.f32 %v3552, %v3638
      %v3640 = vpop.f32.mrb[0].mxu0
      %3641 = vmatprep.mubr.bf16.mxu0 0
      %3642 = vmatmul.mubr.bf16.gmra.mrb[0].mxu0 %v3517
      %v3643 = vpop.f32.mrb[0].mxu0
      %v3644 = vadd.f32 %v3552, %v3643
      %v3645 = vpop.f32.mrb[0].mxu0
      %v3646 = vpop.f32.mrb[0].mxu0
      %v3647 = vadd.f32 %v3552, %v3646
      %v3648 = vpop.f32.mrb[0].mxu0
      %3649 = vmatprep.mubr.bf16.mxu0 0
      %3650 = vmatmul.mubr.bf16.gmra.mrb[0].mxu0 %v3518
      %v3651 = vpop.f32.mrb[0].mxu0
      %v3652 = vadd.f32 %v3552, %v3651
      %v3653 = vpop.f32.mrb[0].mxu0
      %v3654 = vpop.f32.mrb[0].mxu0
      %v3655 = vadd.f32 %v3552, %v3654
      %v3656 = vpop.f32.mrb[0].mxu0
      %3657 = vmatprep.mubr.bf16.mxu0 0
      %3658 = vmatmul.mubr.bf16.gmra.mrb[0].mxu0 %v3519
      %v3659 = vpop.f32.mrb[0].mxu0
      %v3660 = vadd.f32 %v3552, %v3659
      %v3661 = vpop.f32.mrb[0].mxu0
      %v3662 = vpop.f32.mrb[0].mxu0
      %v3663 = vadd.f32 %v3552, %v3662
      %v3664 = vpop.f32.mrb[0].mxu0
      %3665 = vmatprep.mubr.bf16.mxu0 0
      %3666 = vmatmul.mubr.bf16.gmra.mrb[0].mxu0 %v3520
      %v3667 = vpop.f32.mrb[0].mxu0
      %v3668 = vadd.f32 %v3552, %v3667
      %v3669 = vpop.f32.mrb[0].mxu0
      %v3670 = vpop.f32.mrb[0].mxu0
      %v3671 = vadd.f32 %v3552, %v3670
      %v3672 = vpop.f32.mrb[0].mxu0
      %3673 = vmatprep.mubr.bf16.mxu0 0
      %3674 = vmatmul.mubr.bf16.gmra.mrb[0].mxu0 %v3521
      %v3675 = vpop.f32.mrb[0].mxu0
      %v3676 = vadd.f32 %v3552, %v3675
      %v3677 = vpop.f32.mrb[0].mxu0
      %v3678 = vpop.f32.mrb[0].mxu0
      %v3679 = vadd.f32 %v3552, %v3678
      %v3680 = vpop.f32.mrb[0].mxu0
      %3681 = vmatprep.mubr.bf16.mxu0 0
      %3682 = vmatmul.mubr.bf16.gmra.mrb[0].mxu0 %v3522
      %v3683 = vpop.f32.mrb[0].mxu0
      %v3684 = vadd.f32 %v3552, %v3683
      %v3685 = vpop.f32.mrb[0].mxu0
      %v3686 = vpop.f32.mrb[0].mxu0
      %v3687 = vadd.f32 %v3552, %v3686
      %v3688 = vpop.f32.mrb[0].mxu0
      %3689 = vmatprep.mubr.bf16.mxu0 0
      %3690 = vmatmul.mubr.bf16.gmra.mrb[0].mxu0 %v3523
      %v3691 = vpop.f32.mrb[0].mxu0
      %v3692 = vadd.f32 %v3552, %v3691
      %v3693 = vpop.f32.mrb[0].mxu0
      %v3694 = vpop.f32.mrb[0].mxu0
      %v3695 = vadd.f32 %v3552, %v3694
      %v3696 = vpop.f32.mrb[0].mxu0
      %3697 = vmatprep.mubr.bf16.mxu0 0
      %3698 = vmatmul.mubr.bf16.gmra.mrb[0].mxu0 %v3524
      %v3699 = vpop.f32.mrb[0].mxu0
      %v3700 = vadd.f32 %v3552, %v3699
      %v3701 = vpop.f32.mrb[0].mxu0
      %v3702 = vpop.f32.mrb[0].mxu0
      %v3703 = vadd.f32 %v3552, %v3702
      %v3704 = vpop.f32.mrb[0].mxu0
      %3705 = vmatprep.mubr.bf16.mxu0 0
      %3706 = vmatmul.mubr.bf16.gmra.mrb[0].mxu0 %v3525
      %v3707 = vpop.f32.mrb[0].mxu0
      %v3708 = vadd.f32 %v3552, %v3707
      %v3709 = vpop.f32.mrb[0].mxu0
      %v3710 = vpop.f32.mrb[0].mxu0
      %v3711 = vadd.f32 %v3552, %v3710
      %v3712 = vpop.f32.mrb[0].mxu0
      %3713 = vmatprep.mubr.bf16.mxu0 0
      %3714 = vmatmul.mubr.bf16.gmra.mrb[0].mxu0 %v3526
      %v3715 = vpop.f32.mrb[0].mxu0
      %v3716 = vadd.f32 %v3552, %v3715
      %v3717 = vpop.f32.mrb[0].mxu0
      %v3718 = vpop.f32.mrb[0].mxu0
      %v3719 = vadd.f32 %v3552, %v3718
      %v3720 = vpop.f32.mrb[0].mxu0
      %3721 = vmatprep.mubr.bf16.mxu0 0
      %3722 = vmatmul.mubr.bf16.gmra.mrb[0].mxu0 %v3527
      %v3723 = vpop.f32.mrb[0].mxu0
      %v3724 = vadd.f32 %v3552, %v3723
      %v3725 = vpop.f32.mrb[0].mxu0
      %v3726 = vpop.f32.mrb[0].mxu0
      %v3727 = vadd.f32 %v3552, %v3726
      %v3728 = vpop.f32.mrb[0].mxu0
      %3729 = vmatprep.mubr.bf16.mxu0 0
      %3730 = vmatmul.mubr.bf16.gmra.mrb[0].mxu0 %v3528
      %v3731 = vpop.f32.mrb[0].mxu0
      %v3732 = vadd.f32 %v3552, %v3731
      %v3733 = vpop.f32.mrb[0].mxu0
      %v3734 = vpop.f32.mrb[0].mxu0
      %v3735 = vadd.f32 %v3552, %v3734
      %v3736 = vpop.f32.mrb[0].mxu0
      %3737 = vmatprep.mubr.bf16.mxu0 0
      %3738 = vmatmul.mubr.bf16.gmra.mrb[0].mxu0 %v3529
      %v3739 = vpop.f32.mrb[0].mxu0
      %v3740 = vadd.f32 %v3552, %v3739
      %v3741 = vpop.f32.mrb[0].mxu0
      %v3742 = vpop.f32.mrb[0].mxu0
      %v3743 = vadd.f32 %v3552, %v3742
      %v3744 = vpop.f32.mrb[0].mxu0
      %3745 = vmatprep.mubr.bf16.mxu0 0
      %3746 = vmatmul.mubr.bf16.gmra.mrb[0].mxu0 %v3530
      %v3747 = vpop.f32.mrb[0].mxu0
      %v3748 = vadd.f32 %v3552, %v3747
      %v3749 = vpop.f32.mrb[0].mxu0
      %v3750 = vpop.f32.mrb[0].mxu0
      %v3751 = vadd.f32 %v3552, %v3750
      %v3752 = vpop.f32.mrb[0].mxu0
      %3753 = vmatprep.mubr.bf16.mxu0 0
      %3754 = vmatmul.mubr.bf16.gmra.mrb[0].mxu0 %v3531
      %v3755 = vpop.f32.mrb[0].mxu0
      %v3756 = vadd.f32 %v3552, %v3755
      %v3757 = vpop.f32.mrb[0].mxu0
      %v3758 = vpop.f32.mrb[0].mxu0
      %v3759 = vadd.f32 %v3552, %v3758
      %v3760 = vpop.f32.mrb[0].mxu0
      %3761 = vdwg.mxu0
      %v3762 = vpack.c.bf16 %v3639, %v3636
      %v3763 = vpack.c.bf16 %v3647, %v3644
      %v3764 = vpack.c.bf16 %v3655, %v3652
      %v3765 = vpack.c.bf16 %v3663, %v3660
      %v3766 = vpack.c.bf16 %v3671, %v3668
      %v3767 = vpack.c.bf16 %v3679, %v3676
      %v3768 = vpack.c.bf16 %v3687, %v3684
      %v3769 = vpack.c.bf16 %v3695, %v3692
      %v3770 = vpack.c.bf16 %v3703, %v3700
      %v3771 = vpack.c.bf16 %v3711, %v3708
      %v3772 = vpack.c.bf16 %v3719, %v3716
      %v3773 = vpack.c.bf16 %v3727, %v3724
      %v3774 = vpack.c.bf16 %v3735, %v3732
      %v3775 = vpack.c.bf16 %v3743, %v3740
      %v3776 = vpack.c.bf16 %v3751, %v3748
      %v3777 = vpack.c.bf16 %v3759, %v3756
      %v3778 = vld [vmem:[%s4 + $0x1] sm:$0x1]
      %v3779 = vlaneseq
      %v3780 = vshrl.u32 %v3779, 7
      %v3781 = vsub.s32 0, %v3780
      %v3782 = vrot.slane %v3778, %v3781
      %3783 = vmatprep.subr.bf16.mxu0 0
      %3784 = vmatpush1.bf16.msra.mxu0 %v3762
      %3785 = vmatprep.subr.bf16.mxu0 0
      %3786 = vmatpush1.bf16.msra.mxu0 %v3763
      %3787 = vmatprep.subr.bf16.mxu0 0
      %3788 = vmatpush1.bf16.msra.mxu0 %v3764
      %3789 = vmatprep.subr.bf16.mxu0 0
      %3790 = vmatpush1.bf16.msra.mxu0 %v3765
      %3791 = vmatprep.subr.bf16.mxu0 0
      %3792 = vmatpush1.bf16.msra.mxu0 %v3766
      %3793 = vmatprep.subr.bf16.mxu0 0
      %3794 = vmatpush1.bf16.msra.mxu0 %v3767
      %3795 = vmatprep.subr.bf16.mxu0 0
      %3796 = vmatpush1.bf16.msra.mxu0 %v3768
      %3797 = vmatprep.subr.bf16.mxu0 0
      %3798 = vmatpush1.bf16.msra.mxu0 %v3769
      %3799 = vmatprep.subr.bf16.mxu0 0
      %3800 = vmatpush1.bf16.msra.mxu0 %v3770
      %3801 = vmatprep.subr.bf16.mxu0 0
      %3802 = vmatpush1.bf16.msra.mxu0 %v3771
      %3803 = vmatprep.subr.bf16.mxu0 0
      %3804 = vmatpush1.bf16.msra.mxu0 %v3772
      %3805 = vmatprep.subr.bf16.mxu0 0
      %3806 = vmatpush1.bf16.msra.mxu0 %v3773
      %3807 = vmatprep.subr.bf16.mxu0 0
      %3808 = vmatpush1.bf16.msra.mxu0 %v3774
      %3809 = vmatprep.subr.bf16.mxu0 0
      %3810 = vmatpush1.bf16.msra.mxu0 %v3775
      %3811 = vmatprep.subr.bf16.mxu0 0
      %3812 = vmatpush1.bf16.msra.mxu0 %v3776
      %3813 = vmatprep.subr.bf16.mxu0 0
      %3814 = vmatpush1.bf16.msra.mxu0 %v3777
      %3815 = vmatprep.mubr.bf16.mxu0 %v3453
      %3816 = vmatmul.mubr.bf16.gmra.mrb[0].mxu0 %v3452
      %v3817 = vpop.f32.mrb[0].mxu0
      %v3818 = vadd.f32 %v3782, %v3817
      %v3819 = vpop.f32.mrb[0].mxu0
      %v3820 = vpop.f32.mrb[0].mxu0
      %v3821 = vadd.f32 %v3782, %v3820
      %v3822 = vpop.f32.mrb[0].mxu0
      %3823 = vmatprep.mubr.bf16.mxu0 %v3455
      %3824 = vmatmul.mubr.bf16.gmra.mrb[0].mxu0 %v3454
      %v3825 = vpop.f32.mrb[0].mxu0
      %v3826 = vadd.f32 %v3782, %v3825
      %v3827 = vpop.f32.mrb[0].mxu0
      %v3828 = vpop.f32.mrb[0].mxu0
      %v3829 = vadd.f32 %v3782, %v3828
      %v3830 = vpop.f32.mrb[0].mxu0
      %3831 = vmatprep.mubr.bf16.mxu0 %v3457
      %3832 = vmatmul.mubr.bf16.gmra.mrb[0].mxu0 %v3456
      %v3833 = vpop.f32.mrb[0].mxu0
      %v3834 = vadd.f32 %v3782, %v3833
      %v3835 = vpop.f32.mrb[0].mxu0
      %v3836 = vpop.f32.mrb[0].mxu0
      %v3837 = vadd.f32 %v3782, %v3836
      %v3838 = vpop.f32.mrb[0].mxu0
      %3839 = vmatprep.mubr.bf16.mxu0 %v3459
      %3840 = vmatmul.mubr.bf16.gmra.mrb[0].mxu0 %v3458
      %v3841 = vpop.f32.mrb[0].mxu0
      %v3842 = vadd.f32 %v3782, %v3841
      %v3843 = vpop.f32.mrb[0].mxu0
      %v3844 = vpop.f32.mrb[0].mxu0
      %v3845 = vadd.f32 %v3782, %v3844
      %v3846 = vpop.f32.mrb[0].mxu0
      %3847 = vmatprep.mubr.bf16.mxu0 %v3461
      %3848 = vmatmul.mubr.bf16.gmra.mrb[0].mxu0 %v3460
      %v3849 = vpop.f32.mrb[0].mxu0
      %v3850 = vadd.f32 %v3782, %v3849
      %v3851 = vpop.f32.mrb[0].mxu0
      %v3852 = vpop.f32.mrb[0].mxu0
      %v3853 = vadd.f32 %v3782, %v3852
      %v3854 = vpop.f32.mrb[0].mxu0
      %3855 = vmatprep.mubr.bf16.mxu0 %v3463
      %3856 = vmatmul.mubr.bf16.gmra.mrb[0].mxu0 %v3462
      %v3857 = vpop.f32.mrb[0].mxu0
      %v3858 = vadd.f32 %v3782, %v3857
      %v3859 = vpop.f32.mrb[0].mxu0
      %v3860 = vpop.f32.mrb[0].mxu0
      %v3861 = vadd.f32 %v3782, %v3860
      %v3862 = vpop.f32.mrb[0].mxu0
      %3863 = vmatprep.mubr.bf16.mxu0 %v3465
      %3864 = vmatmul.mubr.bf16.gmra.mrb[0].mxu0 %v3464
      %v3865 = vpop.f32.mrb[0].mxu0
      %v3866 = vadd.f32 %v3782, %v3865
      %v3867 = vpop.f32.mrb[0].mxu0
      %v3868 = vpop.f32.mrb[0].mxu0
      %v3869 = vadd.f32 %v3782, %v3868
      %v3870 = vpop.f32.mrb[0].mxu0
      %3871 = vmatprep.mubr.bf16.mxu0 %v3467
      %3872 = vmatmul.mubr.bf16.gmra.mrb[0].mxu0 %v3466
      %v3873 = vpop.f32.mrb[0].mxu0
      %v3874 = vadd.f32 %v3782, %v3873
      %v3875 = vpop.f32.mrb[0].mxu0
      %v3876 = vpop.f32.mrb[0].mxu0
      %v3877 = vadd.f32 %v3782, %v3876
      %v3878 = vpop.f32.mrb[0].mxu0
      %3879 = vmatprep.mubr.bf16.mxu0 %v3469
      %3880 = vmatmul.mubr.bf16.gmra.mrb[0].mxu0 %v3468
      %v3881 = vpop.f32.mrb[0].mxu0
      %v3882 = vadd.f32 %v3782, %v3881
      %v3883 = vpop.f32.mrb[0].mxu0
      %v3884 = vpop.f32.mrb[0].mxu0
      %v3885 = vadd.f32 %v3782, %v3884
      %v3886 = vpop.f32.mrb[0].mxu0
      %3887 = vmatprep.mubr.bf16.mxu0 %v3471
      %3888 = vmatmul.mubr.bf16.gmra.mrb[0].mxu0 %v3470
      %v3889 = vpop.f32.mrb[0].mxu0
      %v3890 = vadd.f32 %v3782, %v3889
      %v3891 = vpop.f32.mrb[0].mxu0
      %v3892 = vpop.f32.mrb[0].mxu0
      %v3893 = vadd.f32 %v3782, %v3892
      %v3894 = vpop.f32.mrb[0].mxu0
      %3895 = vmatprep.mubr.bf16.mxu0 %v3473
      %3896 = vmatmul.mubr.bf16.gmra.mrb[0].mxu0 %v3472
      %v3897 = vpop.f32.mrb[0].mxu0
      %v3898 = vadd.f32 %v3782, %v3897
      %v3899 = vpop.f32.mrb[0].mxu0
      %v3900 = vpop.f32.mrb[0].mxu0
      %v3901 = vadd.f32 %v3782, %v3900
      %v3902 = vpop.f32.mrb[0].mxu0
      %3903 = vmatprep.mubr.bf16.mxu0 %v3475
      %3904 = vmatmul.mubr.bf16.gmra.mrb[0].mxu0 %v3474
      %v3905 = vpop.f32.mrb[0].mxu0
      %v3906 = vadd.f32 %v3782, %v3905
      %v3907 = vpop.f32.mrb[0].mxu0
      %v3908 = vpop.f32.mrb[0].mxu0
      %v3909 = vadd.f32 %v3782, %v3908
      %v3910 = vpop.f32.mrb[0].mxu0
      %3911 = vmatprep.mubr.bf16.mxu0 %v3477
      %3912 = vmatmul.mubr.bf16.gmra.mrb[0].mxu0 %v3476
      %v3913 = vpop.f32.mrb[0].mxu0
      %v3914 = vadd.f32 %v3782, %v3913
      %v3915 = vpop.f32.mrb[0].mxu0
      %v3916 = vpop.f32.mrb[0].mxu0
      %v3917 = vadd.f32 %v3782, %v3916
      %v3918 = vpop.f32.mrb[0].mxu0
      %3919 = vmatprep.mubr.bf16.mxu0 %v3479
      %3920 = vmatmul.mubr.bf16.gmra.mrb[0].mxu0 %v3478
      %v3921 = vpop.f32.mrb[0].mxu0
      %v3922 = vadd.f32 %v3782, %v3921
      %v3923 = vpop.f32.mrb[0].mxu0
      %v3924 = vpop.f32.mrb[0].mxu0
      %v3925 = vadd.f32 %v3782, %v3924
      %v3926 = vpop.f32.mrb[0].mxu0
      %3927 = vmatprep.mubr.bf16.mxu0 %v3481
      %3928 = vmatmul.mubr.bf16.gmra.mrb[0].mxu0 %v3480
      %v3929 = vpop.f32.mrb[0].mxu0
      %v3930 = vadd.f32 %v3782, %v3929
      %v3931 = vpop.f32.mrb[0].mxu0
      %v3932 = vpop.f32.mrb[0].mxu0
      %v3933 = vadd.f32 %v3782, %v3932
      %v3934 = vpop.f32.mrb[0].mxu0
      %3935 = vmatprep.mubr.bf16.mxu0 %v3483
      %3936 = vmatmul.mubr.bf16.gmra.mrb[0].mxu0 %v3482
      %v3937 = vpop.f32.mrb[0].mxu0
      %v3938 = vadd.f32 %v3782, %v3937
      %v3939 = vpop.f32.mrb[0].mxu0
      %v3940 = vpop.f32.mrb[0].mxu0
      %v3941 = vadd.f32 %v3782, %v3940
      %v3942 = vpop.f32.mrb[0].mxu0
      %3943 = vdwg.mxu0
      %v3944 = vmax.f32 %v3818, 0.0
      %v3945 = vmax.f32 %v3821, 0.0
      %v3946 = vmax.f32 %v3826, 0.0
      %v3947 = vmax.f32 %v3829, 0.0
      %v3948 = vmax.f32 %v3834, 0.0
      %v3949 = vmax.f32 %v3837, 0.0
      %v3950 = vmax.f32 %v3842, 0.0
      %v3951 = vmax.f32 %v3845, 0.0
      %v3952 = vmax.f32 %v3850, 0.0
      %v3953 = vmax.f32 %v3853, 0.0
      %v3954 = vmax.f32 %v3858, 0.0
      %v3955 = vmax.f32 %v3861, 0.0
      %v3956 = vmax.f32 %v3866, 0.0
      %v3957 = vmax.f32 %v3869, 0.0
      %v3958 = vmax.f32 %v3874, 0.0
      %v3959 = vmax.f32 %v3877, 0.0
      %v3960 = vmax.f32 %v3882, 0.0
      %v3961 = vmax.f32 %v3885, 0.0
      %v3962 = vmax.f32 %v3890, 0.0
      %v3963 = vmax.f32 %v3893, 0.0
      %v3964 = vmax.f32 %v3898, 0.0
      %v3965 = vmax.f32 %v3901, 0.0
      %v3966 = vmax.f32 %v3906, 0.0
      %v3967 = vmax.f32 %v3909, 0.0
      %v3968 = vmax.f32 %v3914, 0.0
      %v3969 = vmax.f32 %v3917, 0.0
      %v3970 = vmax.f32 %v3922, 0.0
      %v3971 = vmax.f32 %v3925, 0.0
      %v3972 = vmax.f32 %v3930, 0.0
      %v3973 = vmax.f32 %v3933, 0.0
      %v3974 = vmax.f32 %v3938, 0.0
      %v3975 = vmax.f32 %v3941, 0.0
      %v3976 = vld [vmem:[%s4 + $0x4] sm:$0x1]
      %v3977 = vlaneseq
      %v3978 = vshrl.u32 %v3977, 7
      %v3979 = vsub.s32 0, %v3978
      %v3980 = vrot.slane %v3976, %v3979
      %v3981 = vmul.f32 %v3944, %v3980
      %v3982 = vmul.f32 %v3945, %v3980
      %v3983 = vmul.f32 %v3946, %v3980
      %v3984 = vmul.f32 %v3947, %v3980
      %v3985 = vmul.f32 %v3948, %v3980
      %v3986 = vmul.f32 %v3949, %v3980
      %v3987 = vmul.f32 %v3950, %v3980
      %v3988 = vmul.f32 %v3951, %v3980
      %v3989 = vmul.f32 %v3952, %v3980
      %v3990 = vmul.f32 %v3953, %v3980
      %v3991 = vmul.f32 %v3954, %v3980
      %v3992 = vmul.f32 %v3955, %v3980
      %v3993 = vmul.f32 %v3956, %v3980
      %v3994 = vmul.f32 %v3957, %v3980
      %v3995 = vmul.f32 %v3958, %v3980
      %v3996 = vmul.f32 %v3959, %v3980
      %v3997 = vmul.f32 %v3960, %v3980
      %v3998 = vmul.f32 %v3961, %v3980
      %v3999 = vmul.f32 %v3962, %v3980
      %v4000 = vmul.f32 %v3963, %v3980
      %v4001 = vmul.f32 %v3964, %v3980
      %v4002 = vmul.f32 %v3965, %v3980
      %v4003 = vmul.f32 %v3966, %v3980
      %v4004 = vmul.f32 %v3967, %v3980
      %v4005 = vmul.f32 %v3968, %v3980
      %v4006 = vmul.f32 %v3969, %v3980
      %v4007 = vmul.f32 %v3970, %v3980
      %v4008 = vmul.f32 %v3971, %v3980
      %v4009 = vmul.f32 %v3972, %v3980
      %v4010 = vmul.f32 %v3973, %v3980
      %v4011 = vmul.f32 %v3974, %v3980
      %v4012 = vmul.f32 %v3975, %v3980
      %v4013 = vpack.c.bf16 %v3945, %v3944
      %v4014 = vpack.c.bf16 %v3947, %v3946
      %v4015 = vpack.c.bf16 %v3949, %v3948
      %v4016 = vpack.c.bf16 %v3951, %v3950
      %v4017 = vpack.c.bf16 %v3953, %v3952
      %v4018 = vpack.c.bf16 %v3955, %v3954
      %v4019 = vpack.c.bf16 %v3957, %v3956
      %v4020 = vpack.c.bf16 %v3959, %v3958
      %v4021 = vpack.c.bf16 %v3961, %v3960
      %v4022 = vpack.c.bf16 %v3963, %v3962
      %v4023 = vpack.c.bf16 %v3965, %v3964
      %v4024 = vpack.c.bf16 %v3967, %v3966
      %v4025 = vpack.c.bf16 %v3969, %v3968
      %v4026 = vpack.c.bf16 %v3971, %v3970
      %v4027 = vpack.c.bf16 %v3973, %v3972
      %v4028 = vpack.c.bf16 %v3975, %v3974
      %s4029 = scalar_lea.vmem %s3, 64
      %v4030 = vld [vmem:[%s4029] sm:$0xf]
      %v4031 = vld [vmem:[%s4029 + $0x4] sm:$0xf]
      %v4032 = vld [vmem:[%s4029 + $0x8] sm:$0xf]
      %v4033 = vld [vmem:[%s4029 + $0xc] sm:$0xf]
      %v4034 = vld [vmem:[%s4029 + $0x10] sm:$0xf]
      %v4035 = vld [vmem:[%s4029 + $0x14] sm:$0xf]
      %v4036 = vld [vmem:[%s4029 + $0x18] sm:$0xf]
      %v4037 = vld [vmem:[%s4029 + $0x1c] sm:$0xf]
      %v4038 = vld [vmem:[%s4029 + $0x20] sm:$0xf]
      %v4039 = vld [vmem:[%s4029 + $0x24] sm:$0xf]
      %v4040 = vld [vmem:[%s4029 + $0x28] sm:$0xf]
      %v4041 = vld [vmem:[%s4029 + $0x2c] sm:$0xf]
      %v4042 = vld [vmem:[%s4029 + $0x30] sm:$0xf]
      %v4043 = vld [vmem:[%s4029 + $0x34] sm:$0xf]
      %v4044 = vld [vmem:[%s4029 + $0x38] sm:$0xf]
      %v4045 = vld [vmem:[%s4029 + $0x3c] sm:$0xf]
      %v4062 = vunpack.c.l.b16 %v4030
      %v4063 = vunpack.c.l.b16 %v4031
      %v4064 = vunpack.c.l.b16 %v4032
      %v4065 = vunpack.c.l.b16 %v4033
      %v4066 = vunpack.c.l.b16 %v4034
      %v4067 = vunpack.c.l.b16 %v4035
      %v4068 = vunpack.c.l.b16 %v4036
      %v4069 = vunpack.c.l.b16 %v4037
      %v4070 = vunpack.c.l.b16 %v4038
      %v4071 = vunpack.c.l.b16 %v4039
      %v4072 = vunpack.c.l.b16 %v4040
      %v4073 = vunpack.c.l.b16 %v4041
      %v4074 = vunpack.c.l.b16 %v4042
      %v4075 = vunpack.c.l.b16 %v4043
      %v4076 = vunpack.c.l.b16 %v4044
      %v4077 = vunpack.c.l.b16 %v4045
      %v4078 = vpack.c.b16 %v4063, %v4062
      %v4079 = vpack.c.b16 %v4065, %v4064
      %v4080 = vpack.c.b16 %v4067, %v4066
      %v4081 = vpack.c.b16 %v4069, %v4068
      %v4082 = vpack.c.b16 %v4071, %v4070
      %v4083 = vpack.c.b16 %v4073, %v4072
      %v4084 = vpack.c.b16 %v4075, %v4074
      %v4085 = vpack.c.b16 %v4077, %v4076
      %4094 = vmatprep.subr.bf16.mxu0 0
      %4095 = vmatpush1.bf16.msra.mxu0 %v4078
      %4096 = vmatprep.subr.bf16.mxu0 0
      %4097 = vmatpush1.bf16.msra.mxu0 %v4079
      %4098 = vmatprep.subr.bf16.mxu0 0
      %4099 = vmatpush1.bf16.msra.mxu0 %v4080
      %4100 = vmatprep.subr.bf16.mxu0 0
      %4101 = vmatpush1.bf16.msra.mxu0 %v4081
      %4102 = vmatprep.subr.bf16.mxu0 0
      %4103 = vmatpush1.bf16.msra.mxu0 %v4082
      %4104 = vmatprep.subr.bf16.mxu0 0
      %4105 = vmatpush1.bf16.msra.mxu0 %v4083
      %4106 = vmatprep.subr.bf16.mxu0 0
      %4107 = vmatpush1.bf16.msra.mxu0 %v4084
      %4108 = vmatprep.subr.bf16.mxu0 0
      %4109 = vmatpush1.bf16.msra.mxu0 %v4085
      %4110 = vmatprep.subr.bf16.mxu0 0
      %4111 = vmatpush1.bf16.msra.mxu0 0
      %4112 = vmatprep.subr.bf16.mxu0 0
      %4113 = vmatpush1.bf16.msra.mxu0 0
      %4114 = vmatprep.subr.bf16.mxu0 0
      %4115 = vmatpush1.bf16.msra.mxu0 0
      %4116 = vmatprep.subr.bf16.mxu0 0
      %4117 = vmatpush1.bf16.msra.mxu0 0
      %4118 = vmatprep.subr.bf16.mxu0 0
      %4119 = vmatpush1.bf16.msra.mxu0 0
      %4120 = vmatprep.subr.bf16.mxu0 0
      %4121 = vmatpush1.bf16.msra.mxu0 0
      %4122 = vmatprep.subr.bf16.mxu0 0
      %4123 = vmatpush1.bf16.msra.mxu0 0
      %4124 = vmatprep.subr.bf16.mxu0 0
      %4125 = vmatpush1.bf16.msra.mxu0 0
      %4126 = vmatprep.mubr.bf16.mxu0 0
      %4127 = vmatmul.mubr.bf16.gmra.mrb[0].mxu0 %v4013
      %v4128 = vpop.f32.mrb[0].mxu0
      %v4129 = vadd.f32 0.0, %v4128
      %v4130 = vpop.f32.mrb[0].mxu0
      %v4131 = vpop.f32.mrb[0].mxu0
      %v4132 = vadd.f32 0.0, %v4131
      %v4133 = vpop.f32.mrb[0].mxu0
      %4134 = vmatprep.mubr.bf16.mxu0 0
      %4135 = vmatmul.mubr.bf16.gmra.mrb[0].mxu0 %v4014
      %v4136 = vpop.f32.mrb[0].mxu0
      %v4137 = vadd.f32 0.0, %v4136
      %v4138 = vpop.f32.mrb[0].mxu0
      %v4139 = vpop.f32.mrb[0].mxu0
      %v4140 = vadd.f32 0.0, %v4139
      %v4141 = vpop.f32.mrb[0].mxu0
      %4142 = vmatprep.mubr.bf16.mxu0 0
      %4143 = vmatmul.mubr.bf16.gmra.mrb[0].mxu0 %v4015
      %v4144 = vpop.f32.mrb[0].mxu0
      %v4145 = vadd.f32 0.0, %v4144
      %v4146 = vpop.f32.mrb[0].mxu0
      %v4147 = vpop.f32.mrb[0].mxu0
      %v4148 = vadd.f32 0.0, %v4147
      %v4149 = vpop.f32.mrb[0].mxu0
      %4150 = vmatprep.mubr.bf16.mxu0 0
      %4151 = vmatmul.mubr.bf16.gmra.mrb[0].mxu0 %v4016
      %v4152 = vpop.f32.mrb[0].mxu0
      %v4153 = vadd.f32 0.0, %v4152
      %v4154 = vpop.f32.mrb[0].mxu0
      %v4155 = vpop.f32.mrb[0].mxu0
      %v4156 = vadd.f32 0.0, %v4155
      %v4157 = vpop.f32.mrb[0].mxu0
      %4158 = vmatprep.mubr.bf16.mxu0 0
      %4159 = vmatmul.mubr.bf16.gmra.mrb[0].mxu0 %v4017
      %v4160 = vpop.f32.mrb[0].mxu0
      %v4161 = vadd.f32 0.0, %v4160
      %v4162 = vpop.f32.mrb[0].mxu0
      %v4163 = vpop.f32.mrb[0].mxu0
      %v4164 = vadd.f32 0.0, %v4163
      %v4165 = vpop.f32.mrb[0].mxu0
      %4166 = vmatprep.mubr.bf16.mxu0 0
      %4167 = vmatmul.mubr.bf16.gmra.mrb[0].mxu0 %v4018
      %v4168 = vpop.f32.mrb[0].mxu0
      %v4169 = vadd.f32 0.0, %v4168
      %v4170 = vpop.f32.mrb[0].mxu0
      %v4171 = vpop.f32.mrb[0].mxu0
      %v4172 = vadd.f32 0.0, %v4171
      %v4173 = vpop.f32.mrb[0].mxu0
      %4174 = vmatprep.mubr.bf16.mxu0 0
      %4175 = vmatmul.mubr.bf16.gmra.mrb[0].mxu0 %v4019
      %v4176 = vpop.f32.mrb[0].mxu0
      %v4177 = vadd.f32 0.0, %v4176
      %v4178 = vpop.f32.mrb[0].mxu0
      %v4179 = vpop.f32.mrb[0].mxu0
      %v4180 = vadd.f32 0.0, %v4179
      %v4181 = vpop.f32.mrb[0].mxu0
      %4182 = vmatprep.mubr.bf16.mxu0 0
      %4183 = vmatmul.mubr.bf16.gmra.mrb[0].mxu0 %v4020
      %v4184 = vpop.f32.mrb[0].mxu0
      %v4185 = vadd.f32 0.0, %v4184
      %v4186 = vpop.f32.mrb[0].mxu0
      %v4187 = vpop.f32.mrb[0].mxu0
      %v4188 = vadd.f32 0.0, %v4187
      %v4189 = vpop.f32.mrb[0].mxu0
      %4190 = vmatprep.mubr.bf16.mxu0 0
      %4191 = vmatmul.mubr.bf16.gmra.mrb[0].mxu0 %v4021
      %v4192 = vpop.f32.mrb[0].mxu0
      %v4193 = vadd.f32 0.0, %v4192
      %v4194 = vpop.f32.mrb[0].mxu0
      %v4195 = vpop.f32.mrb[0].mxu0
      %v4196 = vadd.f32 0.0, %v4195
      %v4197 = vpop.f32.mrb[0].mxu0
      %4198 = vmatprep.mubr.bf16.mxu0 0
      %4199 = vmatmul.mubr.bf16.gmra.mrb[0].mxu0 %v4022
      %v4200 = vpop.f32.mrb[0].mxu0
      %v4201 = vadd.f32 0.0, %v4200
      %v4202 = vpop.f32.mrb[0].mxu0
      %v4203 = vpop.f32.mrb[0].mxu0
      %v4204 = vadd.f32 0.0, %v4203
      %v4205 = vpop.f32.mrb[0].mxu0
      %4206 = vmatprep.mubr.bf16.mxu0 0
      %4207 = vmatmul.mubr.bf16.gmra.mrb[0].mxu0 %v4023
      %v4208 = vpop.f32.mrb[0].mxu0
      %v4209 = vadd.f32 0.0, %v4208
      %v4210 = vpop.f32.mrb[0].mxu0
      %v4211 = vpop.f32.mrb[0].mxu0
      %v4212 = vadd.f32 0.0, %v4211
      %v4213 = vpop.f32.mrb[0].mxu0
      %4214 = vmatprep.mubr.bf16.mxu0 0
      %4215 = vmatmul.mubr.bf16.gmra.mrb[0].mxu0 %v4024
      %v4216 = vpop.f32.mrb[0].mxu0
      %v4217 = vadd.f32 0.0, %v4216
      %v4218 = vpop.f32.mrb[0].mxu0
      %v4219 = vpop.f32.mrb[0].mxu0
      %v4220 = vadd.f32 0.0, %v4219
      %v4221 = vpop.f32.mrb[0].mxu0
      %4222 = vmatprep.mubr.bf16.mxu0 0
      %4223 = vmatmul.mubr.bf16.gmra.mrb[0].mxu0 %v4025
      %v4224 = vpop.f32.mrb[0].mxu0
      %v4225 = vadd.f32 0.0, %v4224
      %v4226 = vpop.f32.mrb[0].mxu0
      %v4227 = vpop.f32.mrb[0].mxu0
      %v4228 = vadd.f32 0.0, %v4227
      %v4229 = vpop.f32.mrb[0].mxu0
      %4230 = vmatprep.mubr.bf16.mxu0 0
      %4231 = vmatmul.mubr.bf16.gmra.mrb[0].mxu0 %v4026
      %v4232 = vpop.f32.mrb[0].mxu0
      %v4233 = vadd.f32 0.0, %v4232
      %v4234 = vpop.f32.mrb[0].mxu0
      %v4235 = vpop.f32.mrb[0].mxu0
      %v4236 = vadd.f32 0.0, %v4235
      %v4237 = vpop.f32.mrb[0].mxu0
      %4238 = vmatprep.mubr.bf16.mxu0 0
      %4239 = vmatmul.mubr.bf16.gmra.mrb[0].mxu0 %v4027
      %v4240 = vpop.f32.mrb[0].mxu0
      %v4241 = vadd.f32 0.0, %v4240
      %v4242 = vpop.f32.mrb[0].mxu0
      %v4243 = vpop.f32.mrb[0].mxu0
      %v4244 = vadd.f32 0.0, %v4243
      %v4245 = vpop.f32.mrb[0].mxu0
      %4246 = vmatprep.mubr.bf16.mxu0 0
      %4247 = vmatmul.mubr.bf16.gmra.mrb[0].mxu0 %v4028
      %v4248 = vpop.f32.mrb[0].mxu0
      %v4249 = vadd.f32 0.0, %v4248
      %v4250 = vpop.f32.mrb[0].mxu0
      %v4251 = vpop.f32.mrb[0].mxu0
      %v4252 = vadd.f32 0.0, %v4251
      %v4253 = vpop.f32.mrb[0].mxu0
      %4254 = vdwg.mxu0
      %v4255 = vpack.c.bf16 %v4132, %v4129
      %v4256 = vpack.c.bf16 %v4140, %v4137
      %v4257 = vpack.c.bf16 %v4148, %v4145
      %v4258 = vpack.c.bf16 %v4156, %v4153
      %v4259 = vpack.c.bf16 %v4164, %v4161
      %v4260 = vpack.c.bf16 %v4172, %v4169
      %v4261 = vpack.c.bf16 %v4180, %v4177
      %v4262 = vpack.c.bf16 %v4188, %v4185
      %v4263 = vpack.c.bf16 %v4196, %v4193
      %v4264 = vpack.c.bf16 %v4204, %v4201
      %v4265 = vpack.c.bf16 %v4212, %v4209
      %v4266 = vpack.c.bf16 %v4220, %v4217
      %v4267 = vpack.c.bf16 %v4228, %v4225
      %v4268 = vpack.c.bf16 %v4236, %v4233
      %v4269 = vpack.c.bf16 %v4244, %v4241
      %v4270 = vpack.c.bf16 %v4252, %v4249
      %v4271 = vld [vmem:[%s4 + $0x2] sm:$0x1]
      %v4272 = vlaneseq
      %v4273 = vshrl.u32 %v4272, 7
      %v4274 = vsub.s32 0, %v4273
      %v4275 = vrot.slane %v4271, %v4274
      %4276 = vmatprep.subr.bf16.mxu0 0
      %4277 = vmatpush1.bf16.msra.mxu0 %v4255
      %4278 = vmatprep.subr.bf16.mxu0 0
      %4279 = vmatpush1.bf16.msra.mxu0 %v4256
      %4280 = vmatprep.subr.bf16.mxu0 0
      %4281 = vmatpush1.bf16.msra.mxu0 %v4257
      %4282 = vmatprep.subr.bf16.mxu0 0
      %4283 = vmatpush1.bf16.msra.mxu0 %v4258
      %4284 = vmatprep.subr.bf16.mxu0 0
      %4285 = vmatpush1.bf16.msra.mxu0 %v4259
      %4286 = vmatprep.subr.bf16.mxu0 0
      %4287 = vmatpush1.bf16.msra.mxu0 %v4260
      %4288 = vmatprep.subr.bf16.mxu0 0
      %4289 = vmatpush1.bf16.msra.mxu0 %v4261
      %4290 = vmatprep.subr.bf16.mxu0 0
      %4291 = vmatpush1.bf16.msra.mxu0 %v4262
      %4292 = vmatprep.subr.bf16.mxu0 0
      %4293 = vmatpush1.bf16.msra.mxu0 %v4263
      %4294 = vmatprep.subr.bf16.mxu0 0
      %4295 = vmatpush1.bf16.msra.mxu0 %v4264
      %4296 = vmatprep.subr.bf16.mxu0 0
      %4297 = vmatpush1.bf16.msra.mxu0 %v4265
      %4298 = vmatprep.subr.bf16.mxu0 0
      %4299 = vmatpush1.bf16.msra.mxu0 %v4266
      %4300 = vmatprep.subr.bf16.mxu0 0
      %4301 = vmatpush1.bf16.msra.mxu0 %v4267
      %4302 = vmatprep.subr.bf16.mxu0 0
      %4303 = vmatpush1.bf16.msra.mxu0 %v4268
      %4304 = vmatprep.subr.bf16.mxu0 0
      %4305 = vmatpush1.bf16.msra.mxu0 %v4269
      %4306 = vmatprep.subr.bf16.mxu0 0
      %4307 = vmatpush1.bf16.msra.mxu0 %v4270
      %4308 = vmatprep.mubr.bf16.mxu0 %v3453
      %4309 = vmatmul.mubr.bf16.gmra.mrb[0].mxu0 %v3452
      %v4310 = vpop.f32.mrb[0].mxu0
      %v4311 = vadd.f32 %v4275, %v4310
      %v4312 = vpop.f32.mrb[0].mxu0
      %v4313 = vpop.f32.mrb[0].mxu0
      %v4314 = vadd.f32 %v4275, %v4313
      %v4315 = vpop.f32.mrb[0].mxu0
      %4316 = vmatprep.mubr.bf16.mxu0 %v3455
      %4317 = vmatmul.mubr.bf16.gmra.mrb[0].mxu0 %v3454
      %v4318 = vpop.f32.mrb[0].mxu0
      %v4319 = vadd.f32 %v4275, %v4318
      %v4320 = vpop.f32.mrb[0].mxu0
      %v4321 = vpop.f32.mrb[0].mxu0
      %v4322 = vadd.f32 %v4275, %v4321
      %v4323 = vpop.f32.mrb[0].mxu0
      %4324 = vmatprep.mubr.bf16.mxu0 %v3457
      %4325 = vmatmul.mubr.bf16.gmra.mrb[0].mxu0 %v3456
      %v4326 = vpop.f32.mrb[0].mxu0
      %v4327 = vadd.f32 %v4275, %v4326
      %v4328 = vpop.f32.mrb[0].mxu0
      %v4329 = vpop.f32.mrb[0].mxu0
      %v4330 = vadd.f32 %v4275, %v4329
      %v4331 = vpop.f32.mrb[0].mxu0
      %4332 = vmatprep.mubr.bf16.mxu0 %v3459
      %4333 = vmatmul.mubr.bf16.gmra.mrb[0].mxu0 %v3458
      %v4334 = vpop.f32.mrb[0].mxu0
      %v4335 = vadd.f32 %v4275, %v4334
      %v4336 = vpop.f32.mrb[0].mxu0
      %v4337 = vpop.f32.mrb[0].mxu0
      %v4338 = vadd.f32 %v4275, %v4337
      %v4339 = vpop.f32.mrb[0].mxu0
      %4340 = vmatprep.mubr.bf16.mxu0 %v3461
      %4341 = vmatmul.mubr.bf16.gmra.mrb[0].mxu0 %v3460
      %v4342 = vpop.f32.mrb[0].mxu0
      %v4343 = vadd.f32 %v4275, %v4342
      %v4344 = vpop.f32.mrb[0].mxu0
      %v4345 = vpop.f32.mrb[0].mxu0
      %v4346 = vadd.f32 %v4275, %v4345
      %v4347 = vpop.f32.mrb[0].mxu0
      %4348 = vmatprep.mubr.bf16.mxu0 %v3463
      %4349 = vmatmul.mubr.bf16.gmra.mrb[0].mxu0 %v3462
      %v4350 = vpop.f32.mrb[0].mxu0
      %v4351 = vadd.f32 %v4275, %v4350
      %v4352 = vpop.f32.mrb[0].mxu0
      %v4353 = vpop.f32.mrb[0].mxu0
      %v4354 = vadd.f32 %v4275, %v4353
      %v4355 = vpop.f32.mrb[0].mxu0
      %4356 = vmatprep.mubr.bf16.mxu0 %v3465
      %4357 = vmatmul.mubr.bf16.gmra.mrb[0].mxu0 %v3464
      %v4358 = vpop.f32.mrb[0].mxu0
      %v4359 = vadd.f32 %v4275, %v4358
      %v4360 = vpop.f32.mrb[0].mxu0
      %v4361 = vpop.f32.mrb[0].mxu0
      %v4362 = vadd.f32 %v4275, %v4361
      %v4363 = vpop.f32.mrb[0].mxu0
      %4364 = vmatprep.mubr.bf16.mxu0 %v3467
      %4365 = vmatmul.mubr.bf16.gmra.mrb[0].mxu0 %v3466
      %v4366 = vpop.f32.mrb[0].mxu0
      %v4367 = vadd.f32 %v4275, %v4366
      %v4368 = vpop.f32.mrb[0].mxu0
      %v4369 = vpop.f32.mrb[0].mxu0
      %v4370 = vadd.f32 %v4275, %v4369
      %v4371 = vpop.f32.mrb[0].mxu0
      %4372 = vmatprep.mubr.bf16.mxu0 %v3469
      %4373 = vmatmul.mubr.bf16.gmra.mrb[0].mxu0 %v3468
      %v4374 = vpop.f32.mrb[0].mxu0
      %v4375 = vadd.f32 %v4275, %v4374
      %v4376 = vpop.f32.mrb[0].mxu0
      %v4377 = vpop.f32.mrb[0].mxu0
      %v4378 = vadd.f32 %v4275, %v4377
      %v4379 = vpop.f32.mrb[0].mxu0
      %4380 = vmatprep.mubr.bf16.mxu0 %v3471
      %4381 = vmatmul.mubr.bf16.gmra.mrb[0].mxu0 %v3470
      %v4382 = vpop.f32.mrb[0].mxu0
      %v4383 = vadd.f32 %v4275, %v4382
      %v4384 = vpop.f32.mrb[0].mxu0
      %v4385 = vpop.f32.mrb[0].mxu0
      %v4386 = vadd.f32 %v4275, %v4385
      %v4387 = vpop.f32.mrb[0].mxu0
      %4388 = vmatprep.mubr.bf16.mxu0 %v3473
      %4389 = vmatmul.mubr.bf16.gmra.mrb[0].mxu0 %v3472
      %v4390 = vpop.f32.mrb[0].mxu0
      %v4391 = vadd.f32 %v4275, %v4390
      %v4392 = vpop.f32.mrb[0].mxu0
      %v4393 = vpop.f32.mrb[0].mxu0
      %v4394 = vadd.f32 %v4275, %v4393
      %v4395 = vpop.f32.mrb[0].mxu0
      %4396 = vmatprep.mubr.bf16.mxu0 %v3475
      %4397 = vmatmul.mubr.bf16.gmra.mrb[0].mxu0 %v3474
      %v4398 = vpop.f32.mrb[0].mxu0
      %v4399 = vadd.f32 %v4275, %v4398
      %v4400 = vpop.f32.mrb[0].mxu0
      %v4401 = vpop.f32.mrb[0].mxu0
      %v4402 = vadd.f32 %v4275, %v4401
      %v4403 = vpop.f32.mrb[0].mxu0
      %4404 = vmatprep.mubr.bf16.mxu0 %v3477
      %4405 = vmatmul.mubr.bf16.gmra.mrb[0].mxu0 %v3476
      %v4406 = vpop.f32.mrb[0].mxu0
      %v4407 = vadd.f32 %v4275, %v4406
      %v4408 = vpop.f32.mrb[0].mxu0
      %v4409 = vpop.f32.mrb[0].mxu0
      %v4410 = vadd.f32 %v4275, %v4409
      %v4411 = vpop.f32.mrb[0].mxu0
      %4412 = vmatprep.mubr.bf16.mxu0 %v3479
      %4413 = vmatmul.mubr.bf16.gmra.mrb[0].mxu0 %v3478
      %v4414 = vpop.f32.mrb[0].mxu0
      %v4415 = vadd.f32 %v4275, %v4414
      %v4416 = vpop.f32.mrb[0].mxu0
      %v4417 = vpop.f32.mrb[0].mxu0
      %v4418 = vadd.f32 %v4275, %v4417
      %v4419 = vpop.f32.mrb[0].mxu0
      %4420 = vmatprep.mubr.bf16.mxu0 %v3481
      %4421 = vmatmul.mubr.bf16.gmra.mrb[0].mxu0 %v3480
      %v4422 = vpop.f32.mrb[0].mxu0
      %v4423 = vadd.f32 %v4275, %v4422
      %v4424 = vpop.f32.mrb[0].mxu0
      %v4425 = vpop.f32.mrb[0].mxu0
      %v4426 = vadd.f32 %v4275, %v4425
      %v4427 = vpop.f32.mrb[0].mxu0
      %4428 = vmatprep.mubr.bf16.mxu0 %v3483
      %4429 = vmatmul.mubr.bf16.gmra.mrb[0].mxu0 %v3482
      %v4430 = vpop.f32.mrb[0].mxu0
      %v4431 = vadd.f32 %v4275, %v4430
      %v4432 = vpop.f32.mrb[0].mxu0
      %v4433 = vpop.f32.mrb[0].mxu0
      %v4434 = vadd.f32 %v4275, %v4433
      %v4435 = vpop.f32.mrb[0].mxu0
      %4436 = vdwg.mxu0
      %v4437 = vmax.f32 %v4311, 0.0
      %v4438 = vmax.f32 %v4314, 0.0
      %v4439 = vmax.f32 %v4319, 0.0
      %v4440 = vmax.f32 %v4322, 0.0
      %v4441 = vmax.f32 %v4327, 0.0
      %v4442 = vmax.f32 %v4330, 0.0
      %v4443 = vmax.f32 %v4335, 0.0
      %v4444 = vmax.f32 %v4338, 0.0
      %v4445 = vmax.f32 %v4343, 0.0
      %v4446 = vmax.f32 %v4346, 0.0
      %v4447 = vmax.f32 %v4351, 0.0
      %v4448 = vmax.f32 %v4354, 0.0
      %v4449 = vmax.f32 %v4359, 0.0
      %v4450 = vmax.f32 %v4362, 0.0
      %v4451 = vmax.f32 %v4367, 0.0
      %v4452 = vmax.f32 %v4370, 0.0
      %v4453 = vmax.f32 %v4375, 0.0
      %v4454 = vmax.f32 %v4378, 0.0
      %v4455 = vmax.f32 %v4383, 0.0
      %v4456 = vmax.f32 %v4386, 0.0
      %v4457 = vmax.f32 %v4391, 0.0
      %v4458 = vmax.f32 %v4394, 0.0
      %v4459 = vmax.f32 %v4399, 0.0
      %v4460 = vmax.f32 %v4402, 0.0
      %v4461 = vmax.f32 %v4407, 0.0
      %v4462 = vmax.f32 %v4410, 0.0
      %v4463 = vmax.f32 %v4415, 0.0
      %v4464 = vmax.f32 %v4418, 0.0
      %v4465 = vmax.f32 %v4423, 0.0
      %v4466 = vmax.f32 %v4426, 0.0
      %v4467 = vmax.f32 %v4431, 0.0
      %v4468 = vmax.f32 %v4434, 0.0
      %v4469 = vld [vmem:[%s4 + $0x5] sm:$0x1]
      %v4470 = vlaneseq
      %v4471 = vshrl.u32 %v4470, 7
      %v4472 = vsub.s32 0, %v4471
      %v4473 = vrot.slane %v4469, %v4472
      %v4474 = vmul.f32 %v4437, %v4473
      %v4475 = vmul.f32 %v4438, %v4473
      %v4476 = vmul.f32 %v4439, %v4473
      %v4477 = vmul.f32 %v4440, %v4473
      %v4478 = vmul.f32 %v4441, %v4473
      %v4479 = vmul.f32 %v4442, %v4473
      %v4480 = vmul.f32 %v4443, %v4473
      %v4481 = vmul.f32 %v4444, %v4473
      %v4482 = vmul.f32 %v4445, %v4473
      %v4483 = vmul.f32 %v4446, %v4473
      %v4484 = vmul.f32 %v4447, %v4473
      %v4485 = vmul.f32 %v4448, %v4473
      %v4486 = vmul.f32 %v4449, %v4473
      %v4487 = vmul.f32 %v4450, %v4473
      %v4488 = vmul.f32 %v4451, %v4473
      %v4489 = vmul.f32 %v4452, %v4473
      %v4490 = vmul.f32 %v4453, %v4473
      %v4491 = vmul.f32 %v4454, %v4473
      %v4492 = vmul.f32 %v4455, %v4473
      %v4493 = vmul.f32 %v4456, %v4473
      %v4494 = vmul.f32 %v4457, %v4473
      %v4495 = vmul.f32 %v4458, %v4473
      %v4496 = vmul.f32 %v4459, %v4473
      %v4497 = vmul.f32 %v4460, %v4473
      %v4498 = vmul.f32 %v4461, %v4473
      %v4499 = vmul.f32 %v4462, %v4473
      %v4500 = vmul.f32 %v4463, %v4473
      %v4501 = vmul.f32 %v4464, %v4473
      %v4502 = vmul.f32 %v4465, %v4473
      %v4503 = vmul.f32 %v4466, %v4473
      %v4504 = vmul.f32 %v4467, %v4473
      %v4505 = vmul.f32 %v4468, %v4473
      %v4506 = vadd.f32 %v3981, %v4474
      %v4507 = vadd.f32 %v3982, %v4475
      %v4508 = vadd.f32 %v3983, %v4476
      %v4509 = vadd.f32 %v3984, %v4477
      %v4510 = vadd.f32 %v3985, %v4478
      %v4511 = vadd.f32 %v3986, %v4479
      %v4512 = vadd.f32 %v3987, %v4480
      %v4513 = vadd.f32 %v3988, %v4481
      %v4514 = vadd.f32 %v3989, %v4482
      %v4515 = vadd.f32 %v3990, %v4483
      %v4516 = vadd.f32 %v3991, %v4484
      %v4517 = vadd.f32 %v3992, %v4485
      %v4518 = vadd.f32 %v3993, %v4486
      %v4519 = vadd.f32 %v3994, %v4487
      %v4520 = vadd.f32 %v3995, %v4488
      %v4521 = vadd.f32 %v3996, %v4489
      %v4522 = vadd.f32 %v3997, %v4490
      %v4523 = vadd.f32 %v3998, %v4491
      %v4524 = vadd.f32 %v3999, %v4492
      %v4525 = vadd.f32 %v4000, %v4493
      %v4526 = vadd.f32 %v4001, %v4494
      %v4527 = vadd.f32 %v4002, %v4495
      %v4528 = vadd.f32 %v4003, %v4496
      %v4529 = vadd.f32 %v4004, %v4497
      %v4530 = vadd.f32 %v4005, %v4498
      %v4531 = vadd.f32 %v4006, %v4499
      %v4532 = vadd.f32 %v4007, %v4500
      %v4533 = vadd.f32 %v4008, %v4501
      %v4534 = vadd.f32 %v4009, %v4502
      %v4535 = vadd.f32 %v4010, %v4503
      %v4536 = vadd.f32 %v4011, %v4504
      %v4537 = vadd.f32 %v4012, %v4505
      %v4538 = vpack.c.bf16 %v4438, %v4437
      %v4539 = vpack.c.bf16 %v4440, %v4439
      %v4540 = vpack.c.bf16 %v4442, %v4441
      %v4541 = vpack.c.bf16 %v4444, %v4443
      %v4542 = vpack.c.bf16 %v4446, %v4445
      %v4543 = vpack.c.bf16 %v4448, %v4447
      %v4544 = vpack.c.bf16 %v4450, %v4449
      %v4545 = vpack.c.bf16 %v4452, %v4451
      %v4546 = vpack.c.bf16 %v4454, %v4453
      %v4547 = vpack.c.bf16 %v4456, %v4455
      %v4548 = vpack.c.bf16 %v4458, %v4457
      %v4549 = vpack.c.bf16 %v4460, %v4459
      %v4550 = vpack.c.bf16 %v4462, %v4461
      %v4551 = vpack.c.bf16 %v4464, %v4463
      %v4552 = vpack.c.bf16 %v4466, %v4465
      %v4553 = vpack.c.bf16 %v4468, %v4467
      %s4554 = scalar_lea.vmem %s3, 128
      %v4555 = vld [vmem:[%s4554] sm:$0xf]
      %v4556 = vld [vmem:[%s4554 + $0x4] sm:$0xf]
      %v4557 = vld [vmem:[%s4554 + $0x8] sm:$0xf]
      %v4558 = vld [vmem:[%s4554 + $0xc] sm:$0xf]
      %v4559 = vld [vmem:[%s4554 + $0x10] sm:$0xf]
      %v4560 = vld [vmem:[%s4554 + $0x14] sm:$0xf]
      %v4561 = vld [vmem:[%s4554 + $0x18] sm:$0xf]
      %v4562 = vld [vmem:[%s4554 + $0x1c] sm:$0xf]
      %v4563 = vld [vmem:[%s4554 + $0x20] sm:$0xf]
      %v4564 = vld [vmem:[%s4554 + $0x24] sm:$0xf]
      %v4565 = vld [vmem:[%s4554 + $0x28] sm:$0xf]
      %v4566 = vld [vmem:[%s4554 + $0x2c] sm:$0xf]
      %v4567 = vld [vmem:[%s4554 + $0x30] sm:$0xf]
      %v4568 = vld [vmem:[%s4554 + $0x34] sm:$0xf]
      %v4569 = vld [vmem:[%s4554 + $0x38] sm:$0xf]
      %v4570 = vld [vmem:[%s4554 + $0x3c] sm:$0xf]
      %v4587 = vunpack.c.l.b16 %v4555
      %v4588 = vunpack.c.l.b16 %v4556
      %v4589 = vunpack.c.l.b16 %v4557
      %v4590 = vunpack.c.l.b16 %v4558
      %v4591 = vunpack.c.l.b16 %v4559
      %v4592 = vunpack.c.l.b16 %v4560
      %v4593 = vunpack.c.l.b16 %v4561
      %v4594 = vunpack.c.l.b16 %v4562
      %v4595 = vunpack.c.l.b16 %v4563
      %v4596 = vunpack.c.l.b16 %v4564
      %v4597 = vunpack.c.l.b16 %v4565
      %v4598 = vunpack.c.l.b16 %v4566
      %v4599 = vunpack.c.l.b16 %v4567
      %v4600 = vunpack.c.l.b16 %v4568
      %v4601 = vunpack.c.l.b16 %v4569
      %v4602 = vunpack.c.l.b16 %v4570
      %v4603 = vpack.c.b16 %v4588, %v4587
      %v4604 = vpack.c.b16 %v4590, %v4589
      %v4605 = vpack.c.b16 %v4592, %v4591
      %v4606 = vpack.c.b16 %v4594, %v4593
      %v4607 = vpack.c.b16 %v4596, %v4595
      %v4608 = vpack.c.b16 %v4598, %v4597
      %v4609 = vpack.c.b16 %v4600, %v4599
      %v4610 = vpack.c.b16 %v4602, %v4601
      %4619 = vmatprep.subr.bf16.mxu0 0
      %4620 = vmatpush1.bf16.msra.mxu0 %v4603
      %4621 = vmatprep.subr.bf16.mxu0 0
      %4622 = vmatpush1.bf16.msra.mxu0 %v4604
      %4623 = vmatprep.subr.bf16.mxu0 0
      %4624 = vmatpush1.bf16.msra.mxu0 %v4605
      %4625 = vmatprep.subr.bf16.mxu0 0
      %4626 = vmatpush1.bf16.msra.mxu0 %v4606
      %4627 = vmatprep.subr.bf16.mxu0 0
      %4628 = vmatpush1.bf16.msra.mxu0 %v4607
      %4629 = vmatprep.subr.bf16.mxu0 0
      %4630 = vmatpush1.bf16.msra.mxu0 %v4608
      %4631 = vmatprep.subr.bf16.mxu0 0
      %4632 = vmatpush1.bf16.msra.mxu0 %v4609
      %4633 = vmatprep.subr.bf16.mxu0 0
      %4634 = vmatpush1.bf16.msra.mxu0 %v4610
      %4635 = vmatprep.subr.bf16.mxu0 0
      %4636 = vmatpush1.bf16.msra.mxu0 0
      %4637 = vmatprep.subr.bf16.mxu0 0
      %4638 = vmatpush1.bf16.msra.mxu0 0
      %4639 = vmatprep.subr.bf16.mxu0 0
      %4640 = vmatpush1.bf16.msra.mxu0 0
      %4641 = vmatprep.subr.bf16.mxu0 0
      %4642 = vmatpush1.bf16.msra.mxu0 0
      %4643 = vmatprep.subr.bf16.mxu0 0
      %4644 = vmatpush1.bf16.msra.mxu0 0
      %4645 = vmatprep.subr.bf16.mxu0 0
      %4646 = vmatpush1.bf16.msra.mxu0 0
      %4647 = vmatprep.subr.bf16.mxu0 0
      %4648 = vmatpush1.bf16.msra.mxu0 0
      %4649 = vmatprep.subr.bf16.mxu0 0
      %4650 = vmatpush1.bf16.msra.mxu0 0
      %4651 = vmatprep.mubr.bf16.mxu0 0
      %4652 = vmatmul.mubr.bf16.gmra.mrb[0].mxu0 %v4538
      %v4653 = vpop.f32.mrb[0].mxu0
      %v4654 = vadd.f32 0.0, %v4653
      %v4655 = vpop.f32.mrb[0].mxu0
      %v4656 = vpop.f32.mrb[0].mxu0
      %v4657 = vadd.f32 0.0, %v4656
      %v4658 = vpop.f32.mrb[0].mxu0
      %4659 = vmatprep.mubr.bf16.mxu0 0
      %4660 = vmatmul.mubr.bf16.gmra.mrb[0].mxu0 %v4539
      %v4661 = vpop.f32.mrb[0].mxu0
      %v4662 = vadd.f32 0.0, %v4661
      %v4663 = vpop.f32.mrb[0].mxu0
      %v4664 = vpop.f32.mrb[0].mxu0
      %v4665 = vadd.f32 0.0, %v4664
      %v4666 = vpop.f32.mrb[0].mxu0
      %4667 = vmatprep.mubr.bf16.mxu0 0
      %4668 = vmatmul.mubr.bf16.gmra.mrb[0].mxu0 %v4540
      %v4669 = vpop.f32.mrb[0].mxu0
      %v4670 = vadd.f32 0.0, %v4669
      %v4671 = vpop.f32.mrb[0].mxu0
      %v4672 = vpop.f32.mrb[0].mxu0
      %v4673 = vadd.f32 0.0, %v4672
      %v4674 = vpop.f32.mrb[0].mxu0
      %4675 = vmatprep.mubr.bf16.mxu0 0
      %4676 = vmatmul.mubr.bf16.gmra.mrb[0].mxu0 %v4541
      %v4677 = vpop.f32.mrb[0].mxu0
      %v4678 = vadd.f32 0.0, %v4677
      %v4679 = vpop.f32.mrb[0].mxu0
      %v4680 = vpop.f32.mrb[0].mxu0
      %v4681 = vadd.f32 0.0, %v4680
      %v4682 = vpop.f32.mrb[0].mxu0
      %4683 = vmatprep.mubr.bf16.mxu0 0
      %4684 = vmatmul.mubr.bf16.gmra.mrb[0].mxu0 %v4542
      %v4685 = vpop.f32.mrb[0].mxu0
      %v4686 = vadd.f32 0.0, %v4685
      %v4687 = vpop.f32.mrb[0].mxu0
      %v4688 = vpop.f32.mrb[0].mxu0
      %v4689 = vadd.f32 0.0, %v4688
      %v4690 = vpop.f32.mrb[0].mxu0
      %4691 = vmatprep.mubr.bf16.mxu0 0
      %4692 = vmatmul.mubr.bf16.gmra.mrb[0].mxu0 %v4543
      %v4693 = vpop.f32.mrb[0].mxu0
      %v4694 = vadd.f32 0.0, %v4693
      %v4695 = vpop.f32.mrb[0].mxu0
      %v4696 = vpop.f32.mrb[0].mxu0
      %v4697 = vadd.f32 0.0, %v4696
      %v4698 = vpop.f32.mrb[0].mxu0
      %4699 = vmatprep.mubr.bf16.mxu0 0
      %4700 = vmatmul.mubr.bf16.gmra.mrb[0].mxu0 %v4544
      %v4701 = vpop.f32.mrb[0].mxu0
      %v4702 = vadd.f32 0.0, %v4701
      %v4703 = vpop.f32.mrb[0].mxu0
      %v4704 = vpop.f32.mrb[0].mxu0
      %v4705 = vadd.f32 0.0, %v4704
      %v4706 = vpop.f32.mrb[0].mxu0
      %4707 = vmatprep.mubr.bf16.mxu0 0
      %4708 = vmatmul.mubr.bf16.gmra.mrb[0].mxu0 %v4545
      %v4709 = vpop.f32.mrb[0].mxu0
      %v4710 = vadd.f32 0.0, %v4709
      %v4711 = vpop.f32.mrb[0].mxu0
      %v4712 = vpop.f32.mrb[0].mxu0
      %v4713 = vadd.f32 0.0, %v4712
      %v4714 = vpop.f32.mrb[0].mxu0
      %4715 = vmatprep.mubr.bf16.mxu0 0
      %4716 = vmatmul.mubr.bf16.gmra.mrb[0].mxu0 %v4546
      %v4717 = vpop.f32.mrb[0].mxu0
      %v4718 = vadd.f32 0.0, %v4717
      %v4719 = vpop.f32.mrb[0].mxu0
      %v4720 = vpop.f32.mrb[0].mxu0
      %v4721 = vadd.f32 0.0, %v4720
      %v4722 = vpop.f32.mrb[0].mxu0
      %4723 = vmatprep.mubr.bf16.mxu0 0
      %4724 = vmatmul.mubr.bf16.gmra.mrb[0].mxu0 %v4547
      %v4725 = vpop.f32.mrb[0].mxu0
      %v4726 = vadd.f32 0.0, %v4725
      %v4727 = vpop.f32.mrb[0].mxu0
      %v4728 = vpop.f32.mrb[0].mxu0
      %v4729 = vadd.f32 0.0, %v4728
      %v4730 = vpop.f32.mrb[0].mxu0
      %4731 = vmatprep.mubr.bf16.mxu0 0
      %4732 = vmatmul.mubr.bf16.gmra.mrb[0].mxu0 %v4548
      %v4733 = vpop.f32.mrb[0].mxu0
      %v4734 = vadd.f32 0.0, %v4733
      %v4735 = vpop.f32.mrb[0].mxu0
      %v4736 = vpop.f32.mrb[0].mxu0
      %v4737 = vadd.f32 0.0, %v4736
      %v4738 = vpop.f32.mrb[0].mxu0
      %4739 = vmatprep.mubr.bf16.mxu0 0
      %4740 = vmatmul.mubr.bf16.gmra.mrb[0].mxu0 %v4549
      %v4741 = vpop.f32.mrb[0].mxu0
      %v4742 = vadd.f32 0.0, %v4741
      %v4743 = vpop.f32.mrb[0].mxu0
      %v4744 = vpop.f32.mrb[0].mxu0
      %v4745 = vadd.f32 0.0, %v4744
      %v4746 = vpop.f32.mrb[0].mxu0
      %4747 = vmatprep.mubr.bf16.mxu0 0
      %4748 = vmatmul.mubr.bf16.gmra.mrb[0].mxu0 %v4550
      %v4749 = vpop.f32.mrb[0].mxu0
      %v4750 = vadd.f32 0.0, %v4749
      %v4751 = vpop.f32.mrb[0].mxu0
      %v4752 = vpop.f32.mrb[0].mxu0
      %v4753 = vadd.f32 0.0, %v4752
      %v4754 = vpop.f32.mrb[0].mxu0
      %4755 = vmatprep.mubr.bf16.mxu0 0
      %4756 = vmatmul.mubr.bf16.gmra.mrb[0].mxu0 %v4551
      %v4757 = vpop.f32.mrb[0].mxu0
      %v4758 = vadd.f32 0.0, %v4757
      %v4759 = vpop.f32.mrb[0].mxu0
      %v4760 = vpop.f32.mrb[0].mxu0
      %v4761 = vadd.f32 0.0, %v4760
      %v4762 = vpop.f32.mrb[0].mxu0
      %4763 = vmatprep.mubr.bf16.mxu0 0
      %4764 = vmatmul.mubr.bf16.gmra.mrb[0].mxu0 %v4552
      %v4765 = vpop.f32.mrb[0].mxu0
      %v4766 = vadd.f32 0.0, %v4765
      %v4767 = vpop.f32.mrb[0].mxu0
      %v4768 = vpop.f32.mrb[0].mxu0
      %v4769 = vadd.f32 0.0, %v4768
      %v4770 = vpop.f32.mrb[0].mxu0
      %4771 = vmatprep.mubr.bf16.mxu0 0
      %4772 = vmatmul.mubr.bf16.gmra.mrb[0].mxu0 %v4553
      %v4773 = vpop.f32.mrb[0].mxu0
      %v4774 = vadd.f32 0.0, %v4773
      %v4775 = vpop.f32.mrb[0].mxu0
      %v4776 = vpop.f32.mrb[0].mxu0
      %v4777 = vadd.f32 0.0, %v4776
      %v4778 = vpop.f32.mrb[0].mxu0
      %4779 = vdwg.mxu0
      %v4780 = vpack.c.bf16 %v4657, %v4654
      %v4781 = vpack.c.bf16 %v4665, %v4662
      %v4782 = vpack.c.bf16 %v4673, %v4670
      %v4783 = vpack.c.bf16 %v4681, %v4678
      %v4784 = vpack.c.bf16 %v4689, %v4686
      %v4785 = vpack.c.bf16 %v4697, %v4694
      %v4786 = vpack.c.bf16 %v4705, %v4702
      %v4787 = vpack.c.bf16 %v4713, %v4710
      %v4788 = vpack.c.bf16 %v4721, %v4718
      %v4789 = vpack.c.bf16 %v4729, %v4726
      %v4790 = vpack.c.bf16 %v4737, %v4734
      %v4791 = vpack.c.bf16 %v4745, %v4742
      %v4792 = vpack.c.bf16 %v4753, %v4750
      %v4793 = vpack.c.bf16 %v4761, %v4758
      %v4794 = vpack.c.bf16 %v4769, %v4766
      %v4795 = vpack.c.bf16 %v4777, %v4774
      %v4796 = vld [vmem:[%s4 + $0x3] sm:$0x1]
      %v4797 = vlaneseq
      %v4798 = vshrl.u32 %v4797, 7
      %v4799 = vsub.s32 0, %v4798
      %v4800 = vrot.slane %v4796, %v4799
      %4801 = vmatprep.subr.bf16.mxu0 0
      %4802 = vmatpush1.bf16.msra.mxu0 %v4780
      %4803 = vmatprep.subr.bf16.mxu0 0
      %4804 = vmatpush1.bf16.msra.mxu0 %v4781
      %4805 = vmatprep.subr.bf16.mxu0 0
      %4806 = vmatpush1.bf16.msra.mxu0 %v4782
      %4807 = vmatprep.subr.bf16.mxu0 0
      %4808 = vmatpush1.bf16.msra.mxu0 %v4783
      %4809 = vmatprep.subr.bf16.mxu0 0
      %4810 = vmatpush1.bf16.msra.mxu0 %v4784
      %4811 = vmatprep.subr.bf16.mxu0 0
      %4812 = vmatpush1.bf16.msra.mxu0 %v4785
      %4813 = vmatprep.subr.bf16.mxu0 0
      %4814 = vmatpush1.bf16.msra.mxu0 %v4786
      %4815 = vmatprep.subr.bf16.mxu0 0
      %4816 = vmatpush1.bf16.msra.mxu0 %v4787
      %4817 = vmatprep.subr.bf16.mxu0 0
      %4818 = vmatpush1.bf16.msra.mxu0 %v4788
      %4819 = vmatprep.subr.bf16.mxu0 0
      %4820 = vmatpush1.bf16.msra.mxu0 %v4789
      %4821 = vmatprep.subr.bf16.mxu0 0
      %4822 = vmatpush1.bf16.msra.mxu0 %v4790
      %4823 = vmatprep.subr.bf16.mxu0 0
      %4824 = vmatpush1.bf16.msra.mxu0 %v4791
      %4825 = vmatprep.subr.bf16.mxu0 0
      %4826 = vmatpush1.bf16.msra.mxu0 %v4792
      %4827 = vmatprep.subr.bf16.mxu0 0
      %4828 = vmatpush1.bf16.msra.mxu0 %v4793
      %4829 = vmatprep.subr.bf16.mxu0 0
      %4830 = vmatpush1.bf16.msra.mxu0 %v4794
      %4831 = vmatprep.subr.bf16.mxu0 0
      %4832 = vmatpush1.bf16.msra.mxu0 %v4795
      %4833 = vmatprep.mubr.bf16.mxu0 %v3453
      %4834 = vmatmul.mubr.bf16.gmra.mrb[0].mxu0 %v3452
      %v4835 = vpop.f32.mrb[0].mxu0
      %v4836 = vadd.f32 %v4800, %v4835
      %v4837 = vpop.f32.mrb[0].mxu0
      %v4838 = vpop.f32.mrb[0].mxu0
      %v4839 = vadd.f32 %v4800, %v4838
      %v4840 = vpop.f32.mrb[0].mxu0
      %4841 = vmatprep.mubr.bf16.mxu0 %v3455
      %4842 = vmatmul.mubr.bf16.gmra.mrb[0].mxu0 %v3454
      %v4843 = vpop.f32.mrb[0].mxu0
      %v4844 = vadd.f32 %v4800, %v4843
      %v4845 = vpop.f32.mrb[0].mxu0
      %v4846 = vpop.f32.mrb[0].mxu0
      %v4847 = vadd.f32 %v4800, %v4846
      %v4848 = vpop.f32.mrb[0].mxu0
      %4849 = vmatprep.mubr.bf16.mxu0 %v3457
      %4850 = vmatmul.mubr.bf16.gmra.mrb[0].mxu0 %v3456
      %v4851 = vpop.f32.mrb[0].mxu0
      %v4852 = vadd.f32 %v4800, %v4851
      %v4853 = vpop.f32.mrb[0].mxu0
      %v4854 = vpop.f32.mrb[0].mxu0
      %v4855 = vadd.f32 %v4800, %v4854
      %v4856 = vpop.f32.mrb[0].mxu0
      %4857 = vmatprep.mubr.bf16.mxu0 %v3459
      %4858 = vmatmul.mubr.bf16.gmra.mrb[0].mxu0 %v3458
      %v4859 = vpop.f32.mrb[0].mxu0
      %v4860 = vadd.f32 %v4800, %v4859
      %v4861 = vpop.f32.mrb[0].mxu0
      %v4862 = vpop.f32.mrb[0].mxu0
      %v4863 = vadd.f32 %v4800, %v4862
      %v4864 = vpop.f32.mrb[0].mxu0
      %4865 = vmatprep.mubr.bf16.mxu0 %v3461
      %4866 = vmatmul.mubr.bf16.gmra.mrb[0].mxu0 %v3460
      %v4867 = vpop.f32.mrb[0].mxu0
      %v4868 = vadd.f32 %v4800, %v4867
      %v4869 = vpop.f32.mrb[0].mxu0
      %v4870 = vpop.f32.mrb[0].mxu0
      %v4871 = vadd.f32 %v4800, %v4870
      %v4872 = vpop.f32.mrb[0].mxu0
      %4873 = vmatprep.mubr.bf16.mxu0 %v3463
      %4874 = vmatmul.mubr.bf16.gmra.mrb[0].mxu0 %v3462
      %v4875 = vpop.f32.mrb[0].mxu0
      %v4876 = vadd.f32 %v4800, %v4875
      %v4877 = vpop.f32.mrb[0].mxu0
      %v4878 = vpop.f32.mrb[0].mxu0
      %v4879 = vadd.f32 %v4800, %v4878
      %v4880 = vpop.f32.mrb[0].mxu0
      %4881 = vmatprep.mubr.bf16.mxu0 %v3465
      %4882 = vmatmul.mubr.bf16.gmra.mrb[0].mxu0 %v3464
      %v4883 = vpop.f32.mrb[0].mxu0
      %v4884 = vadd.f32 %v4800, %v4883
      %v4885 = vpop.f32.mrb[0].mxu0
      %v4886 = vpop.f32.mrb[0].mxu0
      %v4887 = vadd.f32 %v4800, %v4886
      %v4888 = vpop.f32.mrb[0].mxu0
      %4889 = vmatprep.mubr.bf16.mxu0 %v3467
      %4890 = vmatmul.mubr.bf16.gmra.mrb[0].mxu0 %v3466
      %v4891 = vpop.f32.mrb[0].mxu0
      %v4892 = vadd.f32 %v4800, %v4891
      %v4893 = vpop.f32.mrb[0].mxu0
      %v4894 = vpop.f32.mrb[0].mxu0
      %v4895 = vadd.f32 %v4800, %v4894
      %v4896 = vpop.f32.mrb[0].mxu0
      %4897 = vmatprep.mubr.bf16.mxu0 %v3469
      %4898 = vmatmul.mubr.bf16.gmra.mrb[0].mxu0 %v3468
      %v4899 = vpop.f32.mrb[0].mxu0
      %v4900 = vadd.f32 %v4800, %v4899
      %v4901 = vpop.f32.mrb[0].mxu0
      %v4902 = vpop.f32.mrb[0].mxu0
      %v4903 = vadd.f32 %v4800, %v4902
      %v4904 = vpop.f32.mrb[0].mxu0
      %4905 = vmatprep.mubr.bf16.mxu0 %v3471
      %4906 = vmatmul.mubr.bf16.gmra.mrb[0].mxu0 %v3470
      %v4907 = vpop.f32.mrb[0].mxu0
      %v4908 = vadd.f32 %v4800, %v4907
      %v4909 = vpop.f32.mrb[0].mxu0
      %v4910 = vpop.f32.mrb[0].mxu0
      %v4911 = vadd.f32 %v4800, %v4910
      %v4912 = vpop.f32.mrb[0].mxu0
      %4913 = vmatprep.mubr.bf16.mxu0 %v3473
      %4914 = vmatmul.mubr.bf16.gmra.mrb[0].mxu0 %v3472
      %v4915 = vpop.f32.mrb[0].mxu0
      %v4916 = vadd.f32 %v4800, %v4915
      %v4917 = vpop.f32.mrb[0].mxu0
      %v4918 = vpop.f32.mrb[0].mxu0
      %v4919 = vadd.f32 %v4800, %v4918
      %v4920 = vpop.f32.mrb[0].mxu0
      %4921 = vmatprep.mubr.bf16.mxu0 %v3475
      %4922 = vmatmul.mubr.bf16.gmra.mrb[0].mxu0 %v3474
      %v4923 = vpop.f32.mrb[0].mxu0
      %v4924 = vadd.f32 %v4800, %v4923
      %v4925 = vpop.f32.mrb[0].mxu0
      %v4926 = vpop.f32.mrb[0].mxu0
      %v4927 = vadd.f32 %v4800, %v4926
      %v4928 = vpop.f32.mrb[0].mxu0
      %4929 = vmatprep.mubr.bf16.mxu0 %v3477
      %4930 = vmatmul.mubr.bf16.gmra.mrb[0].mxu0 %v3476
      %v4931 = vpop.f32.mrb[0].mxu0
      %v4932 = vadd.f32 %v4800, %v4931
      %v4933 = vpop.f32.mrb[0].mxu0
      %v4934 = vpop.f32.mrb[0].mxu0
      %v4935 = vadd.f32 %v4800, %v4934
      %v4936 = vpop.f32.mrb[0].mxu0
      %4937 = vmatprep.mubr.bf16.mxu0 %v3479
      %4938 = vmatmul.mubr.bf16.gmra.mrb[0].mxu0 %v3478
      %v4939 = vpop.f32.mrb[0].mxu0
      %v4940 = vadd.f32 %v4800, %v4939
      %v4941 = vpop.f32.mrb[0].mxu0
      %v4942 = vpop.f32.mrb[0].mxu0
      %v4943 = vadd.f32 %v4800, %v4942
      %v4944 = vpop.f32.mrb[0].mxu0
      %4945 = vmatprep.mubr.bf16.mxu0 %v3481
      %4946 = vmatmul.mubr.bf16.gmra.mrb[0].mxu0 %v3480
      %v4947 = vpop.f32.mrb[0].mxu0
      %v4948 = vadd.f32 %v4800, %v4947
      %v4949 = vpop.f32.mrb[0].mxu0
      %v4950 = vpop.f32.mrb[0].mxu0
      %v4951 = vadd.f32 %v4800, %v4950
      %v4952 = vpop.f32.mrb[0].mxu0
      %4953 = vmatprep.mubr.bf16.mxu0 %v3483
      %4954 = vmatmul.mubr.bf16.gmra.mrb[0].mxu0 %v3482
      %v4955 = vpop.f32.mrb[0].mxu0
      %v4956 = vadd.f32 %v4800, %v4955
      %v4957 = vpop.f32.mrb[0].mxu0
      %v4958 = vpop.f32.mrb[0].mxu0
      %v4959 = vadd.f32 %v4800, %v4958
      %v4960 = vpop.f32.mrb[0].mxu0
      %4961 = vdwg.mxu0
      %v4962 = vmax.f32 %v4836, 0.0
      %v4963 = vmax.f32 %v4839, 0.0
      %v4964 = vmax.f32 %v4844, 0.0
      %v4965 = vmax.f32 %v4847, 0.0
      %v4966 = vmax.f32 %v4852, 0.0
      %v4967 = vmax.f32 %v4855, 0.0
      %v4968 = vmax.f32 %v4860, 0.0
      %v4969 = vmax.f32 %v4863, 0.0
      %v4970 = vmax.f32 %v4868, 0.0
      %v4971 = vmax.f32 %v4871, 0.0
      %v4972 = vmax.f32 %v4876, 0.0
      %v4973 = vmax.f32 %v4879, 0.0
      %v4974 = vmax.f32 %v4884, 0.0
      %v4975 = vmax.f32 %v4887, 0.0
      %v4976 = vmax.f32 %v4892, 0.0
      %v4977 = vmax.f32 %v4895, 0.0
      %v4978 = vmax.f32 %v4900, 0.0
      %v4979 = vmax.f32 %v4903, 0.0
      %v4980 = vmax.f32 %v4908, 0.0
      %v4981 = vmax.f32 %v4911, 0.0
      %v4982 = vmax.f32 %v4916, 0.0
      %v4983 = vmax.f32 %v4919, 0.0
      %v4984 = vmax.f32 %v4924, 0.0
      %v4985 = vmax.f32 %v4927, 0.0
      %v4986 = vmax.f32 %v4932, 0.0
      %v4987 = vmax.f32 %v4935, 0.0
      %v4988 = vmax.f32 %v4940, 0.0
      %v4989 = vmax.f32 %v4943, 0.0
      %v4990 = vmax.f32 %v4948, 0.0
      %v4991 = vmax.f32 %v4951, 0.0
      %v4992 = vmax.f32 %v4956, 0.0
      %v4993 = vmax.f32 %v4959, 0.0
      %v4994 = vld [vmem:[%s4 + $0x6] sm:$0x1]
      %v4995 = vlaneseq
      %v4996 = vshrl.u32 %v4995, 7
      %v4997 = vsub.s32 0, %v4996
      %v4998 = vrot.slane %v4994, %v4997
      %v4999 = vmul.f32 %v4962, %v4998
      %v5000 = vmul.f32 %v4963, %v4998
      %v5001 = vmul.f32 %v4964, %v4998
      %v5002 = vmul.f32 %v4965, %v4998
      %v5003 = vmul.f32 %v4966, %v4998
      %v5004 = vmul.f32 %v4967, %v4998
      %v5005 = vmul.f32 %v4968, %v4998
      %v5006 = vmul.f32 %v4969, %v4998
      %v5007 = vmul.f32 %v4970, %v4998
      %v5008 = vmul.f32 %v4971, %v4998
      %v5009 = vmul.f32 %v4972, %v4998
      %v5010 = vmul.f32 %v4973, %v4998
      %v5011 = vmul.f32 %v4974, %v4998
      %v5012 = vmul.f32 %v4975, %v4998
      %v5013 = vmul.f32 %v4976, %v4998
      %v5014 = vmul.f32 %v4977, %v4998
      %v5015 = vmul.f32 %v4978, %v4998
      %v5016 = vmul.f32 %v4979, %v4998
      %v5017 = vmul.f32 %v4980, %v4998
      %v5018 = vmul.f32 %v4981, %v4998
      %v5019 = vmul.f32 %v4982, %v4998
      %v5020 = vmul.f32 %v4983, %v4998
      %v5021 = vmul.f32 %v4984, %v4998
      %v5022 = vmul.f32 %v4985, %v4998
      %v5023 = vmul.f32 %v4986, %v4998
      %v5024 = vmul.f32 %v4987, %v4998
      %v5025 = vmul.f32 %v4988, %v4998
      %v5026 = vmul.f32 %v4989, %v4998
      %v5027 = vmul.f32 %v4990, %v4998
      %v5028 = vmul.f32 %v4991, %v4998
      %v5029 = vmul.f32 %v4992, %v4998
      %v5030 = vmul.f32 %v4993, %v4998
      %v5031 = vadd.f32 %v4506, %v4999
      %v5032 = vadd.f32 %v4507, %v5000
      %v5033 = vadd.f32 %v4508, %v5001
      %v5034 = vadd.f32 %v4509, %v5002
      %v5035 = vadd.f32 %v4510, %v5003
      %v5036 = vadd.f32 %v4511, %v5004
      %v5037 = vadd.f32 %v4512, %v5005
      %v5038 = vadd.f32 %v4513, %v5006
      %v5039 = vadd.f32 %v4514, %v5007
      %v5040 = vadd.f32 %v4515, %v5008
      %v5041 = vadd.f32 %v4516, %v5009
      %v5042 = vadd.f32 %v4517, %v5010
      %v5043 = vadd.f32 %v4518, %v5011
      %v5044 = vadd.f32 %v4519, %v5012
      %v5045 = vadd.f32 %v4520, %v5013
      %v5046 = vadd.f32 %v4521, %v5014
      %v5047 = vadd.f32 %v4522, %v5015
      %v5048 = vadd.f32 %v4523, %v5016
      %v5049 = vadd.f32 %v4524, %v5017
      %v5050 = vadd.f32 %v4525, %v5018
      %v5051 = vadd.f32 %v4526, %v5019
      %v5052 = vadd.f32 %v4527, %v5020
      %v5053 = vadd.f32 %v4528, %v5021
      %v5054 = vadd.f32 %v4529, %v5022
      %v5055 = vadd.f32 %v4530, %v5023
      %v5056 = vadd.f32 %v4531, %v5024
      %v5057 = vadd.f32 %v4532, %v5025
      %v5058 = vadd.f32 %v4533, %v5026
      %v5059 = vadd.f32 %v4534, %v5027
      %v5060 = vadd.f32 %v4535, %v5028
      %v5061 = vadd.f32 %v4536, %v5029
      %v5062 = vadd.f32 %v4537, %v5030
      %5063 = vadd.xlane.f32.xlu0 %v5031
      %v5064 = vpop.xlane.xlu0 %5063
      %5065 = vadd.xlane.f32.xlu0 %v5032
      %v5066 = vpop.xlane.xlu0 %5065
      %5067 = vadd.xlane.f32.xlu0 %v5033
      %v5068 = vpop.xlane.xlu0 %5067
      %5069 = vadd.xlane.f32.xlu0 %v5034
      %v5070 = vpop.xlane.xlu0 %5069
      %5071 = vadd.xlane.f32.xlu0 %v5035
      %v5072 = vpop.xlane.xlu0 %5071
      %5073 = vadd.xlane.f32.xlu0 %v5036
      %v5074 = vpop.xlane.xlu0 %5073
      %5075 = vadd.xlane.f32.xlu0 %v5037
      %v5076 = vpop.xlane.xlu0 %5075
      %5077 = vadd.xlane.f32.xlu0 %v5038
      %v5078 = vpop.xlane.xlu0 %5077
      %5079 = vadd.xlane.f32.xlu0 %v5039
      %v5080 = vpop.xlane.xlu0 %5079
      %5081 = vadd.xlane.f32.xlu0 %v5040
      %v5082 = vpop.xlane.xlu0 %5081
      %5083 = vadd.xlane.f32.xlu0 %v5041
      %v5084 = vpop.xlane.xlu0 %5083
      %5085 = vadd.xlane.f32.xlu0 %v5042
      %v5086 = vpop.xlane.xlu0 %5085
      %5087 = vadd.xlane.f32.xlu0 %v5043
      %v5088 = vpop.xlane.xlu0 %5087
      %5089 = vadd.xlane.f32.xlu0 %v5044
      %v5090 = vpop.xlane.xlu0 %5089
      %5091 = vadd.xlane.f32.xlu0 %v5045
      %v5092 = vpop.xlane.xlu0 %5091
      %5093 = vadd.xlane.f32.xlu0 %v5046
      %v5094 = vpop.xlane.xlu0 %5093
      %5095 = vadd.xlane.f32.xlu0 %v5047
      %v5096 = vpop.xlane.xlu0 %5095
      %5097 = vadd.xlane.f32.xlu0 %v5048
      %v5098 = vpop.xlane.xlu0 %5097
      %5099 = vadd.xlane.f32.xlu0 %v5049
      %v5100 = vpop.xlane.xlu0 %5099
      %5101 = vadd.xlane.f32.xlu0 %v5050
      %v5102 = vpop.xlane.xlu0 %5101
      %5103 = vadd.xlane.f32.xlu0 %v5051
      %v5104 = vpop.xlane.xlu0 %5103
      %5105 = vadd.xlane.f32.xlu0 %v5052
      %v5106 = vpop.xlane.xlu0 %5105
      %5107 = vadd.xlane.f32.xlu0 %v5053
      %v5108 = vpop.xlane.xlu0 %5107
      %5109 = vadd.xlane.f32.xlu0 %v5054
      %v5110 = vpop.xlane.xlu0 %5109
      %5111 = vadd.xlane.f32.xlu0 %v5055
      %v5112 = vpop.xlane.xlu0 %5111
      %5113 = vadd.xlane.f32.xlu0 %v5056
      %v5114 = vpop.xlane.xlu0 %5113
      %5115 = vadd.xlane.f32.xlu0 %v5057
      %v5116 = vpop.xlane.xlu0 %5115
      %5117 = vadd.xlane.f32.xlu0 %v5058
      %v5118 = vpop.xlane.xlu0 %5117
      %5119 = vadd.xlane.f32.xlu0 %v5059
      %v5120 = vpop.xlane.xlu0 %5119
      %5121 = vadd.xlane.f32.xlu0 %v5060
      %v5122 = vpop.xlane.xlu0 %5121
      %5123 = vadd.xlane.f32.xlu0 %v5061
      %v5124 = vpop.xlane.xlu0 %5123
      %5125 = vadd.xlane.f32.xlu0 %v5062
      %v5126 = vpop.xlane.xlu0 %5125
      %vm5127 = vcmask 7168
      %5128 = vst.msk [vmem:[%s298] sm:$0xff] %vm5127, %v5064
      %5129 = vst.msk [vmem:[%s298 + $0x8] sm:$0xff] %vm5127, %v5066
      %5130 = vst.msk [vmem:[%s298 + $0x10] sm:$0xff] %vm5127, %v5068
      %5131 = vst.msk [vmem:[%s298 + $0x18] sm:$0xff] %vm5127, %v5070
      %5132 = vst.msk [vmem:[%s298 + $0x20] sm:$0xff] %vm5127, %v5072
      %5133 = vst.msk [vmem:[%s298 + $0x28] sm:$0xff] %vm5127, %v5074
      %5134 = vst.msk [vmem:[%s298 + $0x30] sm:$0xff] %vm5127, %v5076
      %5135 = vst.msk [vmem:[%s298 + $0x38] sm:$0xff] %vm5127, %v5078
      %5136 = vst.msk [vmem:[%s298 + $0x40] sm:$0xff] %vm5127, %v5080
      %5137 = vst.msk [vmem:[%s298 + $0x48] sm:$0xff] %vm5127, %v5082
      %5138 = vst.msk [vmem:[%s298 + $0x50] sm:$0xff] %vm5127, %v5084
      %5139 = vst.msk [vmem:[%s298 + $0x58] sm:$0xff] %vm5127, %v5086
      %5140 = vst.msk [vmem:[%s298 + $0x60] sm:$0xff] %vm5127, %v5088
      %5141 = vst.msk [vmem:[%s298 + $0x68] sm:$0xff] %vm5127, %v5090
      %5142 = vst.msk [vmem:[%s298 + $0x70] sm:$0xff] %vm5127, %v5092
      %5143 = vst.msk [vmem:[%s298 + $0x78] sm:$0xff] %vm5127, %v5094
      %5144 = vst.msk [vmem:[%s298 + $0x80] sm:$0xff] %vm5127, %v5096
      %5145 = vst.msk [vmem:[%s298 + $0x88] sm:$0xff] %vm5127, %v5098
      %5146 = vst.msk [vmem:[%s298 + $0x90] sm:$0xff] %vm5127, %v5100
      %5147 = vst.msk [vmem:[%s298 + $0x98] sm:$0xff] %vm5127, %v5102
      %5148 = vst.msk [vmem:[%s298 + $0xa0] sm:$0xff] %vm5127, %v5104
      %5149 = vst.msk [vmem:[%s298 + $0xa8] sm:$0xff] %vm5127, %v5106
      %5150 = vst.msk [vmem:[%s298 + $0xb0] sm:$0xff] %vm5127, %v5108
      %5151 = vst.msk [vmem:[%s298 + $0xb8] sm:$0xff] %vm5127, %v5110
      %5152 = vst.msk [vmem:[%s298 + $0xc0] sm:$0xff] %vm5127, %v5112
      %5153 = vst.msk [vmem:[%s298 + $0xc8] sm:$0xff] %vm5127, %v5114
      %5154 = vst.msk [vmem:[%s298 + $0xd0] sm:$0xff] %vm5127, %v5116
      %5155 = vst.msk [vmem:[%s298 + $0xd8] sm:$0xff] %vm5127, %v5118
      %5156 = vst.msk [vmem:[%s298 + $0xe0] sm:$0xff] %vm5127, %v5120
      %5157 = vst.msk [vmem:[%s298 + $0xe8] sm:$0xff] %vm5127, %v5122
      %5158 = vst.msk [vmem:[%s298 + $0xf0] sm:$0xff] %vm5127, %v5124
      %5159 = vst.msk [vmem:[%s298 + $0xf8] sm:$0xff] %vm5127, %v5126
      %v5160 = vxor.u32 %v5064, 2147483648
      %v5161 = vxor.u32 %v5066, 2147483648
      %v5162 = vxor.u32 %v5068, 2147483648
      %v5163 = vxor.u32 %v5070, 2147483648
      %v5164 = vxor.u32 %v5072, 2147483648
      %v5165 = vxor.u32 %v5074, 2147483648
      %v5166 = vxor.u32 %v5076, 2147483648
      %v5167 = vxor.u32 %v5078, 2147483648
      %v5168 = vxor.u32 %v5080, 2147483648
      %v5169 = vxor.u32 %v5082, 2147483648
      %v5170 = vxor.u32 %v5084, 2147483648
      %v5171 = vxor.u32 %v5086, 2147483648
      %v5172 = vxor.u32 %v5088, 2147483648
      %v5173 = vxor.u32 %v5090, 2147483648
      %v5174 = vxor.u32 %v5092, 2147483648
      %v5175 = vxor.u32 %v5094, 2147483648
      %v5176 = vxor.u32 %v5096, 2147483648
      %v5177 = vxor.u32 %v5098, 2147483648
      %v5178 = vxor.u32 %v5100, 2147483648
      %v5179 = vxor.u32 %v5102, 2147483648
      %v5180 = vxor.u32 %v5104, 2147483648
      %v5181 = vxor.u32 %v5106, 2147483648
      %v5182 = vxor.u32 %v5108, 2147483648
      %v5183 = vxor.u32 %v5110, 2147483648
      %v5184 = vxor.u32 %v5112, 2147483648
      %v5185 = vxor.u32 %v5114, 2147483648
      %v5186 = vxor.u32 %v5116, 2147483648
      %v5187 = vxor.u32 %v5118, 2147483648
      %v5188 = vxor.u32 %v5120, 2147483648
      %v5189 = vxor.u32 %v5122, 2147483648
      %v5190 = vxor.u32 %v5124, 2147483648
      %v5191 = vxor.u32 %v5126, 2147483648
      %v5192 = vmul.f32 %v5160, 1.442695
      %v5193 = vpow.pop %v5192
      %v5194 = vmul.f32 %v5161, 1.442695
      %v5195 = vpow.pop %v5194
      %v5196 = vmul.f32 %v5162, 1.442695
      %v5197 = vpow.pop %v5196
      %v5198 = vmul.f32 %v5163, 1.442695
      %v5199 = vpow.pop %v5198
      %v5200 = vmul.f32 %v5164, 1.442695
      %v5201 = vpow.pop %v5200
      %v5202 = vmul.f32 %v5165, 1.442695
      %v5203 = vpow.pop %v5202
      %v5204 = vmul.f32 %v5166, 1.442695
      %v5205 = vpow.pop %v5204
      %v5206 = vmul.f32 %v5167, 1.442695
      %v5207 = vpow.pop %v5206
      %v5208 = vmul.f32 %v5168, 1.442695
      %v5209 = vpow.pop %v5208
      %v5210 = vmul.f32 %v5169, 1.442695
      %v5211 = vpow.pop %v5210
      %v5212 = vmul.f32 %v5170, 1.442695
      %v5213 = vpow.pop %v5212
      %v5214 = vmul.f32 %v5171, 1.442695
      %v5215 = vpow.pop %v5214
      %v5216 = vmul.f32 %v5172, 1.442695
      %v5217 = vpow.pop %v5216
      %v5218 = vmul.f32 %v5173, 1.442695
      %v5219 = vpow.pop %v5218
      %v5220 = vmul.f32 %v5174, 1.442695
      %v5221 = vpow.pop %v5220
      %v5222 = vmul.f32 %v5175, 1.442695
      %v5223 = vpow.pop %v5222
      %v5224 = vmul.f32 %v5176, 1.442695
      %v5225 = vpow.pop %v5224
      %v5226 = vmul.f32 %v5177, 1.442695
      %v5227 = vpow.pop %v5226
      %v5228 = vmul.f32 %v5178, 1.442695
      %v5229 = vpow.pop %v5228
      %v5230 = vmul.f32 %v5179, 1.442695
      %v5231 = vpow.pop %v5230
      %v5232 = vmul.f32 %v5180, 1.442695
      %v5233 = vpow.pop %v5232
      %v5234 = vmul.f32 %v5181, 1.442695
      %v5235 = vpow.pop %v5234
      %v5236 = vmul.f32 %v5182, 1.442695
      %v5237 = vpow.pop %v5236
      %v5238 = vmul.f32 %v5183, 1.442695
      %v5239 = vpow.pop %v5238
      %v5240 = vmul.f32 %v5184, 1.442695
      %v5241 = vpow.pop %v5240
      %v5242 = vmul.f32 %v5185, 1.442695
      %v5243 = vpow.pop %v5242
      %v5244 = vmul.f32 %v5186, 1.442695
      %v5245 = vpow.pop %v5244
      %v5246 = vmul.f32 %v5187, 1.442695
      %v5247 = vpow.pop %v5246
      %v5248 = vmul.f32 %v5188, 1.442695
      %v5249 = vpow.pop %v5248
      %v5250 = vmul.f32 %v5189, 1.442695
      %v5251 = vpow.pop %v5250
      %v5252 = vmul.f32 %v5190, 1.442695
      %v5253 = vpow.pop %v5252
      %v5254 = vmul.f32 %v5191, 1.442695
      %v5255 = vpow.pop %v5254
      %v5256 = vadd.f32 %v5193, 1.0
      %v5257 = vadd.f32 %v5195, 1.0
      %v5258 = vadd.f32 %v5197, 1.0
      %v5259 = vadd.f32 %v5199, 1.0
      %v5260 = vadd.f32 %v5201, 1.0
      %v5261 = vadd.f32 %v5203, 1.0
      %v5262 = vadd.f32 %v5205, 1.0
      %v5263 = vadd.f32 %v5207, 1.0
      %v5264 = vadd.f32 %v5209, 1.0
      %v5265 = vadd.f32 %v5211, 1.0
      %v5266 = vadd.f32 %v5213, 1.0
      %v5267 = vadd.f32 %v5215, 1.0
      %v5268 = vadd.f32 %v5217, 1.0
      %v5269 = vadd.f32 %v5219, 1.0
      %v5270 = vadd.f32 %v5221, 1.0
      %v5271 = vadd.f32 %v5223, 1.0
      %v5272 = vadd.f32 %v5225, 1.0
      %v5273 = vadd.f32 %v5227, 1.0
      %v5274 = vadd.f32 %v5229, 1.0
      %v5275 = vadd.f32 %v5231, 1.0
      %v5276 = vadd.f32 %v5233, 1.0
      %v5277 = vadd.f32 %v5235, 1.0
      %v5278 = vadd.f32 %v5237, 1.0
      %v5279 = vadd.f32 %v5239, 1.0
      %v5280 = vadd.f32 %v5241, 1.0
      %v5281 = vadd.f32 %v5243, 1.0
      %v5282 = vadd.f32 %v5245, 1.0
      %v5283 = vadd.f32 %v5247, 1.0
      %v5284 = vadd.f32 %v5249, 1.0
      %v5285 = vadd.f32 %v5251, 1.0
      %v5286 = vadd.f32 %v5253, 1.0
      %v5287 = vadd.f32 %v5255, 1.0
      %v5288 = vrcp.pop %v5256
      %v5289 = vmul.f32 1.0, %v5288
      %v5290 = vrcp.pop %v5257
      %v5291 = vmul.f32 1.0, %v5290
      %v5292 = vrcp.pop %v5258
      %v5293 = vmul.f32 1.0, %v5292
      %v5294 = vrcp.pop %v5259
      %v5295 = vmul.f32 1.0, %v5294
      %v5296 = vrcp.pop %v5260
      %v5297 = vmul.f32 1.0, %v5296
      %v5298 = vrcp.pop %v5261
      %v5299 = vmul.f32 1.0, %v5298
      %v5300 = vrcp.pop %v5262
      %v5301 = vmul.f32 1.0, %v5300
      %v5302 = vrcp.pop %v5263
      %v5303 = vmul.f32 1.0, %v5302
      %v5304 = vrcp.pop %v5264
      %v5305 = vmul.f32 1.0, %v5304
      %v5306 = vrcp.pop %v5265
      %v5307 = vmul.f32 1.0, %v5306
      %v5308 = vrcp.pop %v5266
      %v5309 = vmul.f32 1.0, %v5308
      %v5310 = vrcp.pop %v5267
      %v5311 = vmul.f32 1.0, %v5310
      %v5312 = vrcp.pop %v5268
      %v5313 = vmul.f32 1.0, %v5312
      %v5314 = vrcp.pop %v5269
      %v5315 = vmul.f32 1.0, %v5314
      %v5316 = vrcp.pop %v5270
      %v5317 = vmul.f32 1.0, %v5316
      %v5318 = vrcp.pop %v5271
      %v5319 = vmul.f32 1.0, %v5318
      %v5320 = vrcp.pop %v5272
      %v5321 = vmul.f32 1.0, %v5320
      %v5322 = vrcp.pop %v5273
      %v5323 = vmul.f32 1.0, %v5322
      %v5324 = vrcp.pop %v5274
      %v5325 = vmul.f32 1.0, %v5324
      %v5326 = vrcp.pop %v5275
      %v5327 = vmul.f32 1.0, %v5326
      %v5328 = vrcp.pop %v5276
      %v5329 = vmul.f32 1.0, %v5328
      %v5330 = vrcp.pop %v5277
      %v5331 = vmul.f32 1.0, %v5330
      %v5332 = vrcp.pop %v5278
      %v5333 = vmul.f32 1.0, %v5332
      %v5334 = vrcp.pop %v5279
      %v5335 = vmul.f32 1.0, %v5334
      %v5336 = vrcp.pop %v5280
      %v5337 = vmul.f32 1.0, %v5336
      %v5338 = vrcp.pop %v5281
      %v5339 = vmul.f32 1.0, %v5338
      %v5340 = vrcp.pop %v5282
      %v5341 = vmul.f32 1.0, %v5340
      %v5342 = vrcp.pop %v5283
      %v5343 = vmul.f32 1.0, %v5342
      %v5344 = vrcp.pop %v5284
      %v5345 = vmul.f32 1.0, %v5344
      %v5346 = vrcp.pop %v5285
      %v5347 = vmul.f32 1.0, %v5346
      %v5348 = vrcp.pop %v5286
      %v5349 = vmul.f32 1.0, %v5348
      %v5350 = vrcp.pop %v5287
      %v5351 = vmul.f32 1.0, %v5350
      %5352 = vst.msk [vmem:[%s304] sm:$0xff] %vm5127, %v5289
      %5353 = vst.msk [vmem:[%s304 + $0x8] sm:$0xff] %vm5127, %v5291
      %5354 = vst.msk [vmem:[%s304 + $0x10] sm:$0xff] %vm5127, %v5293
      %5355 = vst.msk [vmem:[%s304 + $0x18] sm:$0xff] %vm5127, %v5295
      %5356 = vst.msk [vmem:[%s304 + $0x20] sm:$0xff] %vm5127, %v5297
      %5357 = vst.msk [vmem:[%s304 + $0x28] sm:$0xff] %vm5127, %v5299
      %5358 = vst.msk [vmem:[%s304 + $0x30] sm:$0xff] %vm5127, %v5301
      %5359 = vst.msk [vmem:[%s304 + $0x38] sm:$0xff] %vm5127, %v5303
      %5360 = vst.msk [vmem:[%s304 + $0x40] sm:$0xff] %vm5127, %v5305
      %5361 = vst.msk [vmem:[%s304 + $0x48] sm:$0xff] %vm5127, %v5307
      %5362 = vst.msk [vmem:[%s304 + $0x50] sm:$0xff] %vm5127, %v5309
      %5363 = vst.msk [vmem:[%s304 + $0x58] sm:$0xff] %vm5127, %v5311
      %5364 = vst.msk [vmem:[%s304 + $0x60] sm:$0xff] %vm5127, %v5313
      %5365 = vst.msk [vmem:[%s304 + $0x68] sm:$0xff] %vm5127, %v5315
      %5366 = vst.msk [vmem:[%s304 + $0x70] sm:$0xff] %vm5127, %v5317
      %5367 = vst.msk [vmem:[%s304 + $0x78] sm:$0xff] %vm5127, %v5319
      %5368 = vst.msk [vmem:[%s304 + $0x80] sm:$0xff] %vm5127, %v5321
      %5369 = vst.msk [vmem:[%s304 + $0x88] sm:$0xff] %vm5127, %v5323
      %5370 = vst.msk [vmem:[%s304 + $0x90] sm:$0xff] %vm5127, %v5325
      %5371 = vst.msk [vmem:[%s304 + $0x98] sm:$0xff] %vm5127, %v5327
      %5372 = vst.msk [vmem:[%s304 + $0xa0] sm:$0xff] %vm5127, %v5329
      %5373 = vst.msk [vmem:[%s304 + $0xa8] sm:$0xff] %vm5127, %v5331
      %5374 = vst.msk [vmem:[%s304 + $0xb0] sm:$0xff] %vm5127, %v5333
      %5375 = vst.msk [vmem:[%s304 + $0xb8] sm:$0xff] %vm5127, %v5335
      %5376 = vst.msk [vmem:[%s304 + $0xc0] sm:$0xff] %vm5127, %v5337
      %5377 = vst.msk [vmem:[%s304 + $0xc8] sm:$0xff] %vm5127, %v5339
      %5378 = vst.msk [vmem:[%s304 + $0xd0] sm:$0xff] %vm5127, %v5341
      %5379 = vst.msk [vmem:[%s304 + $0xd8] sm:$0xff] %vm5127, %v5343
      %5380 = vst.msk [vmem:[%s304 + $0xe0] sm:$0xff] %vm5127, %v5345
      %5381 = vst.msk [vmem:[%s304 + $0xe8] sm:$0xff] %vm5127, %v5347
      %5382 = vst.msk [vmem:[%s304 + $0xf0] sm:$0xff] %vm5127, %v5349
      %5383 = vst.msk [vmem:[%s304 + $0xf8] sm:$0xff] %vm5127, %v5351
      %s5384 = smul.u32 32, %s18
      %p5385 = scmp.lt.s32.totalorder %s5384, 63
      %s5386 = scalar_select %p5385, %s5384, 63
      %s5387 = smul.addr %s5386, 8
      %s5388 = scalar_lea.vmem %s5, %s5387
      %s5389 = smul.u32 32, %s18
      %p5390 = scmp.lt.s32.totalorder %s5389, 63
      %s5391 = scalar_select %p5390, %s5389, 63
      %s5392 = smul.addr %s5391, 8
      %s5393 = scalar_lea.vmem %s6, %s5392
      // Predicated region
      $region41: #{gcnnet2_forward.1} parent=39 // pred_check
        %p5394 = pneg %p156
      $region42: #{gcnnet2_forward.1} parent=39 // pred_check_branch
        %5396 = sbr.rel (%p5394) target = $region44
      $region43: #{gcnnet2_forward.1} parent=39 // pred_region
        %s5397 = smul.u32 32, %s18
      $region44: #{gcnnet2_forward.1} parent=39 // pred_fallthru
        _
      // Predicated region
      $region45: #{gcnnet2_forward.1} parent=39 // pred_check
        %p5398 = pneg %p182
      $region46: #{gcnnet2_forward.1} parent=39 // pred_check_branch
        %5400 = sbr.rel (%p5398) target = $region48
      $region47: #{gcnnet2_forward.1} parent=39 // pred_region
        %s5401 = smul.u32 32, %s18
      $region48: #{gcnnet2_forward.1} parent=39 // pred_fallthru
        _
    $region40: #{gcnnet2_forward.1} parent=5 // pred_fallthru
      _
    %p5402 = scmp.le.s32.totalorder 2, %s13
    // Predicated region
    $region49: #{gcnnet2_forward.1} parent=5 // pred_check
      %p5403 = pneg %p5402
    $region50: #{gcnnet2_forward.1} parent=5 // pred_check_branch
      %5405 = sbr.rel (%p5403) target = $region52
    $region51: #{gcnnet2_forward.1} parent=5 // pred_region
      %s5406 = ssub.s32 %s13, 2
      // Predicated region
      $region53: #{gcnnet2_forward.1} parent=51 // pred_check
        %p5407 = pneg %p162
      $region54: #{gcnnet2_forward.1} parent=51 // pred_check_branch
        %5409 = sbr.rel (%p5407) target = $region56
      $region55: #{gcnnet2_forward.1} parent=51 // pred_region
        %s5410 = smul.u32 32, %s19
        %p5411 = scmp.lt.s32.totalorder %s5410, 63
        %s5412 = scalar_select %p5411, %s5410, 63
        %s5413 = smul.addr %s5412, 8
        %s5414 = scalar_lea.vmem %s5, %s5413
      $region56: #{gcnnet2_forward.1} parent=51 // pred_fallthru
        _
      // Predicated region
      $region57: #{gcnnet2_forward.1} parent=51 // pred_check
        %p5415 = pneg %p188
      $region58: #{gcnnet2_forward.1} parent=51 // pred_check_branch
        %5417 = sbr.rel (%p5415) target = $region60
      $region59: #{gcnnet2_forward.1} parent=51 // pred_region
        %s5418 = smul.u32 32, %s19
        %p5419 = scmp.lt.s32.totalorder %s5418, 63
        %s5420 = scalar_select %p5419, %s5418, 63
        %s5421 = smul.addr %s5420, 8
        %s5422 = scalar_lea.vmem %s6, %s5421
      $region60: #{gcnnet2_forward.1} parent=51 // pred_fallthru
        _
    $region52: #{gcnnet2_forward.1} parent=5 // pred_fallthru
      _
  $region6: #{gcnnet2_forward.1} parent=0 // loop_footer
    %s17 = sadd.s32 1, %s13
  $region7: #{gcnnet2_forward.1} parent=0 // loop_footer_branch
    %12 = sbr.rel target = $region3
  $region8: #{gcnnet2_forward.1} parent=0 // loop_exit
    _

</llo_original>
